<compile_context>
chip_gen: v7x
topology: tpu7x:2x2x1
jax: 0.10.0
libtpu: 0.0.40
codegen_flags: <defaults>
</compile_context>

<pallas_src>
import functools

import jax
import jax.numpy as jnp
from jax import lax
from jax.experimental import pallas as pl
from jax.experimental.pallas import tpu as pltpu


# ---------------------------------------------------------------------------
# Kernel
# ---------------------------------------------------------------------------
def _long_linear_kernel(x_ref, w_ref, o_ref, *, layers_per_step):
    """One grid step applies `layers_per_step` chained layers to the resident activation.

    o_ref ([B, D] f32, constant block index across the grid) doubles as the accumulator:
    it is initialized from x on step 0, updated in place every step, and written back to
    HBM once after the last step by the pipeline.
    """
    step = pl.program_id(0)

    @pl.when(step == 0)
    def _():
        o_ref[...] = x_ref[...].astype(jnp.float32)

    # KL chained matmuls:  act <- (act.bf16) @ W_t[layer]   (bf16 MXU operands, f32 accum).
    def body(k, carry):
        a = o_ref[...].astype(jnp.bfloat16)
        o_ref[...] = jnp.dot(a, w_ref[k], preferred_element_type=jnp.float32)
        return carry

    lax.fori_loop(0, layers_per_step, body, 0, unroll=True)


# ---------------------------------------------------------------------------
# Tiling / VMEM sizing helpers
# ---------------------------------------------------------------------------
_WEIGHT_BUFFER_COUNT = 2  # default double-buffering on the weight BlockSpec


def _vmem_capacity_bytes():
    try:
        return int(pltpu.get_tpu_info().vmem_capacity_bytes)
    except Exception:
        return 64 << 20  # conservative: smallest per-TC VMEM across v5e/v6e/v7x


def _pick_layers_per_step(n_layers, batch, dim, *, weight_bytes=2,
                          buffer_count=_WEIGHT_BUFFER_COUNT, vmem_capacity=None):
    """Largest divisor of n_layers whose in-flight weight buffers fit ~70% of VMEM."""
    if vmem_capacity is None:
        vmem_capacity = _vmem_capacity_bytes()
    per_layer = dim * dim * weight_bytes
    act_bytes = 4 * batch * dim * 4  # x + out activations (f32), with pipeline buffers
    budget = int(vmem_capacity * 0.7) - act_bytes
    cap = max(1, budget // (buffer_count * per_layer))
    cap = int(min(cap, n_layers))
    for kl in range(cap, 0, -1):
        if n_layers % kl == 0:
            return kl
    return 1


def _vmem_limit_bytes(layers_per_step, batch, dim, *, weight_bytes=2,
                      buffer_count=_WEIGHT_BUFFER_COUNT, vmem_capacity=None):
    if vmem_capacity is None:
        vmem_capacity = _vmem_capacity_bytes()
    weights = buffer_count * layers_per_step * dim * dim * weight_bytes
    acts = 4 * batch * dim * 4
    limit = weights + acts + (8 << 20)      # slack for compiler-internal scratch
    limit = max(limit, 32 << 20)            # never below the common default scoped limit
    return int(min(limit, vmem_capacity))


# ---------------------------------------------------------------------------
# Forward wrapper (hot path)
# ---------------------------------------------------------------------------
def long_linear_forward(x, w_stacked_t, *, layers_per_step=None):
    """Chained y = (((x @ W_t[0]) @ W_t[1]) ... @ W_t[L-1]).

    x:           [B, D] activations (f32 in, f32 out).
    w_stacked_t: [L, D, D] pre-transposed weights, ALREADY in bf16 (prepared once at
                 model init: W_t[l] = W[l].T, cast to bf16). Streamed to the MXU as bf16
                 with f32 accumulation.
    """
    B, D = x.shape
    L = w_stacked_t.shape[0]

    if w_stacked_t.dtype != jnp.bfloat16:
        # Prefer converting once at model init; this per-call cast is the slow path.
        w_stacked_t = w_stacked_t.astype(jnp.bfloat16)

    if layers_per_step is None:
        layers_per_step = _pick_layers_per_step(L, B, D)
    assert L % layers_per_step == 0, "n_layers must be divisible by layers_per_step"
    n_steps = L // layers_per_step

    kernel = functools.partial(_long_linear_kernel, layers_per_step=layers_per_step)

    flops = 2 * L * B * D * D
    bytes_accessed = L * D * D * 2 + 2 * B * D * 4  # bf16 weights + f32 in/out activations

    return pl.pallas_call(
        kernel,
        out_shape=jax.ShapeDtypeStruct((B, D), jnp.float32),
        grid_spec=pltpu.PrefetchScalarGridSpec(
            num_scalar_prefetch=0,
            grid=(n_steps,),
            in_specs=[
                # Activation input: same (whole) block every step -> fetched once.
                pl.BlockSpec((B, D), lambda s: (0, 0)),
                # KL-layer weight slab streamed along the grid axis (default 2-deep buffering).
                pl.BlockSpec((layers_per_step, D, D), lambda s: (s, 0, 0)),
            ],
            # Output block index constant across the sequential axis -> resident accumulator.
            out_specs=pl.BlockSpec((B, D), lambda s: (0, 0)),
        ),
        compiler_params=pltpu.CompilerParams(
            dimension_semantics=("arbitrary",),  # chained dependency: not parallel
            vmem_limit_bytes=_vmem_limit_bytes(layers_per_step, B, D),
        ),
        cost_estimate=pl.CostEstimate(
            flops=flops, transcendentals=0, bytes_accessed=bytes_accessed),
    )(x, w_stacked_t)


# ---------------------------------------------------------------------------
# One-time weight preparation (model init, NOT the hot path)
# ---------------------------------------------------------------------------
def prepare_weights(w_stacked_f32):
    """[L, D, D] f32 Linear weights -> pre-transposed bf16 stack for the kernel."""
    return jnp.transpose(w_stacked_f32, (0, 2, 1)).astype(jnp.bfloat16)


# ---------------------------------------------------------------------------
# Self-test
# ---------------------------------------------------------------------------
if __name__ == "__main__":
    # Small, TPU-tile-friendly stand-in for the module's default (200 layers of 1024x1024).
    B, D, L = 8, 128, 32

    key = jax.random.PRNGKey(0)
    kx, kw = jax.random.split(key)

    x = jax.random.normal(kx, (B, D), dtype=jnp.float32)
    # Variance-preserving weights so the 32-layer chain keeps O(1) magnitudes.
    w = jax.random.normal(kw, (L, D, D), dtype=jnp.float32) / jnp.sqrt(D)

    # One-time (init-time) weight prep: transpose + bf16 cast, outside the hot path.
    w_t_bf16 = jax.block_until_ready(prepare_weights(w))

    out = jax.block_until_ready(long_linear_forward(x, w_t_bf16))

    # 1) Kernel correctness: reference with matched numerics (bf16 operands, f32 accum).
    ref = x
    for l in range(L):
        ref = jnp.dot(ref.astype(jnp.bfloat16), w_t_bf16[l],
                      preferred_element_type=jnp.float32)
    ref = jax.block_until_ready(ref)
    assert jnp.allclose(out, ref, atol=2e-3, rtol=2e-3), "mismatch vs bf16-matched reference"

    # 2) Validation against the pure-f32 PyTorch-equivalent chain (bf16 weight-stream
    #    quantization only; loose bound to catch gross semantic errors, e.g. wrong transpose).
    ref_f32 = x
    for l in range(L):
        ref_f32 = ref_f32 @ w[l].T
    ref_f32 = jax.block_until_ready(ref_f32)
    rms = jnp.sqrt(jnp.mean(ref_f32 * ref_f32))
    max_abs_err = jnp.max(jnp.abs(out - ref_f32))
    assert float(max_abs_err) < 0.3 * float(rms), "excessive divergence from f32 reference"

    print("KERNEL_OK")
</pallas_src>

<mosaic_0001>
module attributes {stable_mosaic.version = 11 : i64} {
  func.func @_long_linear_kernel(%arg0: i32, %arg1: memref<8x128xf32, #tpu.memory_space<vmem>>, %arg2: memref<32x128x128xbf16, #tpu.memory_space<vmem>>, %arg3: memref<8x128xf32, #tpu.memory_space<vmem>>) attributes {dimension_semantics = [#tpu.dimension_semantics<arbitrary>], iteration_bounds = array<i64: 1>, scalar_prefetch = 0 : i64, scratch_operands = 0 : i64, tpu.core_type = #tpu.core_type<tc>, window_params = [{pipeline_mode = #tpu.pipeline_mode<synchronous>, transform_indices = @transform_0, window_bounds = array<i64: 8, 128>}, {transform_indices = @transform_1, window_bounds = array<i64: 32, 128, 128>}, {pipeline_mode = #tpu.pipeline_mode<synchronous>, transform_indices = @transform_2, window_bounds = array<i64: 8, 128>}]} {
    %c0_i32 = arith.constant 0 : i32
    %0 = arith.cmpi eq, %arg0, %c0_i32 : i32
    %1 = arith.extui %0 : i1 to i32
    %c0_i32_0 = arith.constant 0 : i32
    %2 = arith.cmpi ne, %1, %c0_i32_0 : i32
    scf.if %2 {
      %c0_224 = arith.constant 0 : index
      %c0_225 = arith.constant 0 : index
      %227 = vector.load %arg1[%c0_224, %c0_225] : memref<8x128xf32, #tpu.memory_space<vmem>>, vector<8x128xf32>
      %c0_226 = arith.constant 0 : index
      %c0_227 = arith.constant 0 : index
      %228 = vector.load %arg3[%c0_226, %c0_227] : memref<8x128xf32, #tpu.memory_space<vmem>>, vector<8x128xf32>
      tpu.vector_store %arg3[%c0_226, %c0_227], %227 {strides = array<i32>} : memref<8x128xf32, #tpu.memory_space<vmem>>, vector<8x128xf32>,
    } else {
    }
    %c0_i32_1 = arith.constant 0 : i32
    %c0 = arith.constant 0 : index
    %c0_2 = arith.constant 0 : index
    %3 = vector.load %arg3[%c0, %c0_2] : memref<8x128xf32, #tpu.memory_space<vmem>>, vector<8x128xf32>
    %4 = arith.truncf %3 : vector<8x128xf32> to vector<8x128xbf16>
    %5 = arith.index_cast %c0_i32_1 : i32 to index
    %c0_3 = arith.constant 0 : index
    %c0_4 = arith.constant 0 : index
    %6 = vector.load %arg2[%5, %c0_3, %c0_4] : memref<32x128x128xbf16, #tpu.memory_space<vmem>>, vector<1x128x128xbf16>
    %7 = vector.shape_cast %6 : vector<1x128x128xbf16> to vector<128x128xbf16>
    %cst = arith.constant dense<0.000000e+00> : vector<8x128xf32>
    %8 = tpu.matmul %4, %7, %cst {dimension_numbers = #tpu.dot_dimension_numbers<[1], [0], [0], [1], [0, 0, 1, 1], [], []>} : vector<8x128xbf16>, vector<128x128xbf16>, vector<8x128xf32> -> vector<8x128xf32>
    %c0_5 = arith.constant 0 : index
    %c0_6 = arith.constant 0 : index
    %9 = vector.load %arg3[%c0_5, %c0_6] : memref<8x128xf32, #tpu.memory_space<vmem>>, vector<8x128xf32>
    tpu.vector_store %arg3[%c0_5, %c0_6], %8 {strides = array<i32>} : memref<8x128xf32, #tpu.memory_space<vmem>>, vector<8x128xf32>,
    %c1_i32 = arith.constant 1 : i32
    %c0_7 = arith.constant 0 : index
    %c0_8 = arith.constant 0 : index
    %10 = vector.load %arg3[%c0_7, %c0_8] : memref<8x128xf32, #tpu.memory_space<vmem>>, vector<8x128xf32>
    %11 = arith.truncf %10 : vector<8x128xf32> to vector<8x128xbf16>
    %12 = arith.index_cast %c1_i32 : i32 to index
    %c0_9 = arith.constant 0 : index
    %c0_10 = arith.constant 0 : index
    %13 = vector.load %arg2[%12, %c0_9, %c0_10] : memref<32x128x128xbf16, #tpu.memory_space<vmem>>, vector<1x128x128xbf16>
    %14 = vector.shape_cast %13 : vector<1x128x128xbf16> to vector<128x128xbf16>
    %cst_11 = arith.constant dense<0.000000e+00> : vector<8x128xf32>
    %15 = tpu.matmul %11, %14, %cst_11 {dimension_numbers = #tpu.dot_dimension_numbers<[1], [0], [0], [1], [0, 0, 1, 1], [], []>} : vector<8x128xbf16>, vector<128x128xbf16>, vector<8x128xf32> -> vector<8x128xf32>
    %c0_12 = arith.constant 0 : index
    %c0_13 = arith.constant 0 : index
    %16 = vector.load %arg3[%c0_12, %c0_13] : memref<8x128xf32, #tpu.memory_space<vmem>>, vector<8x128xf32>
    tpu.vector_store %arg3[%c0_12, %c0_13], %15 {strides = array<i32>} : memref<8x128xf32, #tpu.memory_space<vmem>>, vector<8x128xf32>,
    %c2_i32 = arith.constant 2 : i32
    %c0_14 = arith.constant 0 : index
    %c0_15 = arith.constant 0 : index
    %17 = vector.load %arg3[%c0_14, %c0_15] : memref<8x128xf32, #tpu.memory_space<vmem>>, vector<8x128xf32>
    %18 = arith.truncf %17 : vector<8x128xf32> to vector<8x128xbf16>
    %19 = arith.index_cast %c2_i32 : i32 to index
    %c0_16 = arith.constant 0 : index
    %c0_17 = arith.constant 0 : index
    %20 = vector.load %arg2[%19, %c0_16, %c0_17] : memref<32x128x128xbf16, #tpu.memory_space<vmem>>, vector<1x128x128xbf16>
    %21 = vector.shape_cast %20 : vector<1x128x128xbf16> to vector<128x128xbf16>
    %cst_18 = arith.constant dense<0.000000e+00> : vector<8x128xf32>
    %22 = tpu.matmul %18, %21, %cst_18 {dimension_numbers = #tpu.dot_dimension_numbers<[1], [0], [0], [1], [0, 0, 1, 1], [], []>} : vector<8x128xbf16>, vector<128x128xbf16>, vector<8x128xf32> -> vector<8x128xf32>
    %c0_19 = arith.constant 0 : index
    %c0_20 = arith.constant 0 : index
    %23 = vector.load %arg3[%c0_19, %c0_20] : memref<8x128xf32, #tpu.memory_space<vmem>>, vector<8x128xf32>
    tpu.vector_store %arg3[%c0_19, %c0_20], %22 {strides = array<i32>} : memref<8x128xf32, #tpu.memory_space<vmem>>, vector<8x128xf32>,
    %c3_i32 = arith.constant 3 : i32
    %c0_21 = arith.constant 0 : index
    %c0_22 = arith.constant 0 : index
    %24 = vector.load %arg3[%c0_21, %c0_22] : memref<8x128xf32, #tpu.memory_space<vmem>>, vector<8x128xf32>
    %25 = arith.truncf %24 : vector<8x128xf32> to vector<8x128xbf16>
    %26 = arith.index_cast %c3_i32 : i32 to index
    %c0_23 = arith.constant 0 : index
    %c0_24 = arith.constant 0 : index
    %27 = vector.load %arg2[%26, %c0_23, %c0_24] : memref<32x128x128xbf16, #tpu.memory_space<vmem>>, vector<1x128x128xbf16>
    %28 = vector.shape_cast %27 : vector<1x128x128xbf16> to vector<128x128xbf16>
    %cst_25 = arith.constant dense<0.000000e+00> : vector<8x128xf32>
    %29 = tpu.matmul %25, %28, %cst_25 {dimension_numbers = #tpu.dot_dimension_numbers<[1], [0], [0], [1], [0, 0, 1, 1], [], []>} : vector<8x128xbf16>, vector<128x128xbf16>, vector<8x128xf32> -> vector<8x128xf32>
    %c0_26 = arith.constant 0 : index
    %c0_27 = arith.constant 0 : index
    %30 = vector.load %arg3[%c0_26, %c0_27] : memref<8x128xf32, #tpu.memory_space<vmem>>, vector<8x128xf32>
    tpu.vector_store %arg3[%c0_26, %c0_27], %29 {strides = array<i32>} : memref<8x128xf32, #tpu.memory_space<vmem>>, vector<8x128xf32>,
    %c4_i32 = arith.constant 4 : i32
    %c0_28 = arith.constant 0 : index
    %c0_29 = arith.constant 0 : index
    %31 = vector.load %arg3[%c0_28, %c0_29] : memref<8x128xf32, #tpu.memory_space<vmem>>, vector<8x128xf32>
    %32 = arith.truncf %31 : vector<8x128xf32> to vector<8x128xbf16>
    %33 = arith.index_cast %c4_i32 : i32 to index
    %c0_30 = arith.constant 0 : index
    %c0_31 = arith.constant 0 : index
    %34 = vector.load %arg2[%33, %c0_30, %c0_31] : memref<32x128x128xbf16, #tpu.memory_space<vmem>>, vector<1x128x128xbf16>
    %35 = vector.shape_cast %34 : vector<1x128x128xbf16> to vector<128x128xbf16>
    %cst_32 = arith.constant dense<0.000000e+00> : vector<8x128xf32>
    %36 = tpu.matmul %32, %35, %cst_32 {dimension_numbers = #tpu.dot_dimension_numbers<[1], [0], [0], [1], [0, 0, 1, 1], [], []>} : vector<8x128xbf16>, vector<128x128xbf16>, vector<8x128xf32> -> vector<8x128xf32>
    %c0_33 = arith.constant 0 : index
    %c0_34 = arith.constant 0 : index
    %37 = vector.load %arg3[%c0_33, %c0_34] : memref<8x128xf32, #tpu.memory_space<vmem>>, vector<8x128xf32>
    tpu.vector_store %arg3[%c0_33, %c0_34], %36 {strides = array<i32>} : memref<8x128xf32, #tpu.memory_space<vmem>>, vector<8x128xf32>,
    %c5_i32 = arith.constant 5 : i32
    %c0_35 = arith.constant 0 : index
    %c0_36 = arith.constant 0 : index
    %38 = vector.load %arg3[%c0_35, %c0_36] : memref<8x128xf32, #tpu.memory_space<vmem>>, vector<8x128xf32>
    %39 = arith.truncf %38 : vector<8x128xf32> to vector<8x128xbf16>
    %40 = arith.index_cast %c5_i32 : i32 to index
    %c0_37 = arith.constant 0 : index
    %c0_38 = arith.constant 0 : index
    %41 = vector.load %arg2[%40, %c0_37, %c0_38] : memref<32x128x128xbf16, #tpu.memory_space<vmem>>, vector<1x128x128xbf16>
    %42 = vector.shape_cast %41 : vector<1x128x128xbf16> to vector<128x128xbf16>
    %cst_39 = arith.constant dense<0.000000e+00> : vector<8x128xf32>
    %43 = tpu.matmul %39, %42, %cst_39 {dimension_numbers = #tpu.dot_dimension_numbers<[1], [0], [0], [1], [0, 0, 1, 1], [], []>} : vector<8x128xbf16>, vector<128x128xbf16>, vector<8x128xf32> -> vector<8x128xf32>
    %c0_40 = arith.constant 0 : index
    %c0_41 = arith.constant 0 : index
    %44 = vector.load %arg3[%c0_40, %c0_41] : memref<8x128xf32, #tpu.memory_space<vmem>>, vector<8x128xf32>
    tpu.vector_store %arg3[%c0_40, %c0_41], %43 {strides = array<i32>} : memref<8x128xf32, #tpu.memory_space<vmem>>, vector<8x128xf32>,
    %c6_i32 = arith.constant 6 : i32
    %c0_42 = arith.constant 0 : index
    %c0_43 = arith.constant 0 : index
    %45 = vector.load %arg3[%c0_42, %c0_43] : memref<8x128xf32, #tpu.memory_space<vmem>>, vector<8x128xf32>
    %46 = arith.truncf %45 : vector<8x128xf32> to vector<8x128xbf16>
    %47 = arith.index_cast %c6_i32 : i32 to index
    %c0_44 = arith.constant 0 : index
    %c0_45 = arith.constant 0 : index
    %48 = vector.load %arg2[%47, %c0_44, %c0_45] : memref<32x128x128xbf16, #tpu.memory_space<vmem>>, vector<1x128x128xbf16>
    %49 = vector.shape_cast %48 : vector<1x128x128xbf16> to vector<128x128xbf16>
    %cst_46 = arith.constant dense<0.000000e+00> : vector<8x128xf32>
    %50 = tpu.matmul %46, %49, %cst_46 {dimension_numbers = #tpu.dot_dimension_numbers<[1], [0], [0], [1], [0, 0, 1, 1], [], []>} : vector<8x128xbf16>, vector<128x128xbf16>, vector<8x128xf32> -> vector<8x128xf32>
    %c0_47 = arith.constant 0 : index
    %c0_48 = arith.constant 0 : index
    %51 = vector.load %arg3[%c0_47, %c0_48] : memref<8x128xf32, #tpu.memory_space<vmem>>, vector<8x128xf32>
    tpu.vector_store %arg3[%c0_47, %c0_48], %50 {strides = array<i32>} : memref<8x128xf32, #tpu.memory_space<vmem>>, vector<8x128xf32>,
    %c7_i32 = arith.constant 7 : i32
    %c0_49 = arith.constant 0 : index
    %c0_50 = arith.constant 0 : index
    %52 = vector.load %arg3[%c0_49, %c0_50] : memref<8x128xf32, #tpu.memory_space<vmem>>, vector<8x128xf32>
    %53 = arith.truncf %52 : vector<8x128xf32> to vector<8x128xbf16>
    %54 = arith.index_cast %c7_i32 : i32 to index
    %c0_51 = arith.constant 0 : index
    %c0_52 = arith.constant 0 : index
    %55 = vector.load %arg2[%54, %c0_51, %c0_52] : memref<32x128x128xbf16, #tpu.memory_space<vmem>>, vector<1x128x128xbf16>
    %56 = vector.shape_cast %55 : vector<1x128x128xbf16> to vector<128x128xbf16>
    %cst_53 = arith.constant dense<0.000000e+00> : vector<8x128xf32>
    %57 = tpu.matmul %53, %56, %cst_53 {dimension_numbers = #tpu.dot_dimension_numbers<[1], [0], [0], [1], [0, 0, 1, 1], [], []>} : vector<8x128xbf16>, vector<128x128xbf16>, vector<8x128xf32> -> vector<8x128xf32>
    %c0_54 = arith.constant 0 : index
    %c0_55 = arith.constant 0 : index
    %58 = vector.load %arg3[%c0_54, %c0_55] : memref<8x128xf32, #tpu.memory_space<vmem>>, vector<8x128xf32>
    tpu.vector_store %arg3[%c0_54, %c0_55], %57 {strides = array<i32>} : memref<8x128xf32, #tpu.memory_space<vmem>>, vector<8x128xf32>,
    %c8_i32 = arith.constant 8 : i32
    %c0_56 = arith.constant 0 : index
    %c0_57 = arith.constant 0 : index
    %59 = vector.load %arg3[%c0_56, %c0_57] : memref<8x128xf32, #tpu.memory_space<vmem>>, vector<8x128xf32>
    %60 = arith.truncf %59 : vector<8x128xf32> to vector<8x128xbf16>
    %61 = arith.index_cast %c8_i32 : i32 to index
    %c0_58 = arith.constant 0 : index
    %c0_59 = arith.constant 0 : index
    %62 = vector.load %arg2[%61, %c0_58, %c0_59] : memref<32x128x128xbf16, #tpu.memory_space<vmem>>, vector<1x128x128xbf16>
    %63 = vector.shape_cast %62 : vector<1x128x128xbf16> to vector<128x128xbf16>
    %cst_60 = arith.constant dense<0.000000e+00> : vector<8x128xf32>
    %64 = tpu.matmul %60, %63, %cst_60 {dimension_numbers = #tpu.dot_dimension_numbers<[1], [0], [0], [1], [0, 0, 1, 1], [], []>} : vector<8x128xbf16>, vector<128x128xbf16>, vector<8x128xf32> -> vector<8x128xf32>
    %c0_61 = arith.constant 0 : index
    %c0_62 = arith.constant 0 : index
    %65 = vector.load %arg3[%c0_61, %c0_62] : memref<8x128xf32, #tpu.memory_space<vmem>>, vector<8x128xf32>
    tpu.vector_store %arg3[%c0_61, %c0_62], %64 {strides = array<i32>} : memref<8x128xf32, #tpu.memory_space<vmem>>, vector<8x128xf32>,
    %c9_i32 = arith.constant 9 : i32
    %c0_63 = arith.constant 0 : index
    %c0_64 = arith.constant 0 : index
    %66 = vector.load %arg3[%c0_63, %c0_64] : memref<8x128xf32, #tpu.memory_space<vmem>>, vector<8x128xf32>
    %67 = arith.truncf %66 : vector<8x128xf32> to vector<8x128xbf16>
    %68 = arith.index_cast %c9_i32 : i32 to index
    %c0_65 = arith.constant 0 : index
    %c0_66 = arith.constant 0 : index
    %69 = vector.load %arg2[%68, %c0_65, %c0_66] : memref<32x128x128xbf16, #tpu.memory_space<vmem>>, vector<1x128x128xbf16>
    %70 = vector.shape_cast %69 : vector<1x128x128xbf16> to vector<128x128xbf16>
    %cst_67 = arith.constant dense<0.000000e+00> : vector<8x128xf32>
    %71 = tpu.matmul %67, %70, %cst_67 {dimension_numbers = #tpu.dot_dimension_numbers<[1], [0], [0], [1], [0, 0, 1, 1], [], []>} : vector<8x128xbf16>, vector<128x128xbf16>, vector<8x128xf32> -> vector<8x128xf32>
    %c0_68 = arith.constant 0 : index
    %c0_69 = arith.constant 0 : index
    %72 = vector.load %arg3[%c0_68, %c0_69] : memref<8x128xf32, #tpu.memory_space<vmem>>, vector<8x128xf32>
    tpu.vector_store %arg3[%c0_68, %c0_69], %71 {strides = array<i32>} : memref<8x128xf32, #tpu.memory_space<vmem>>, vector<8x128xf32>,
    %c10_i32 = arith.constant 10 : i32
    %c0_70 = arith.constant 0 : index
    %c0_71 = arith.constant 0 : index
    %73 = vector.load %arg3[%c0_70, %c0_71] : memref<8x128xf32, #tpu.memory_space<vmem>>, vector<8x128xf32>
    %74 = arith.truncf %73 : vector<8x128xf32> to vector<8x128xbf16>
    %75 = arith.index_cast %c10_i32 : i32 to index
    %c0_72 = arith.constant 0 : index
    %c0_73 = arith.constant 0 : index
    %76 = vector.load %arg2[%75, %c0_72, %c0_73] : memref<32x128x128xbf16, #tpu.memory_space<vmem>>, vector<1x128x128xbf16>
    %77 = vector.shape_cast %76 : vector<1x128x128xbf16> to vector<128x128xbf16>
    %cst_74 = arith.constant dense<0.000000e+00> : vector<8x128xf32>
    %78 = tpu.matmul %74, %77, %cst_74 {dimension_numbers = #tpu.dot_dimension_numbers<[1], [0], [0], [1], [0, 0, 1, 1], [], []>} : vector<8x128xbf16>, vector<128x128xbf16>, vector<8x128xf32> -> vector<8x128xf32>
    %c0_75 = arith.constant 0 : index
    %c0_76 = arith.constant 0 : index
    %79 = vector.load %arg3[%c0_75, %c0_76] : memref<8x128xf32, #tpu.memory_space<vmem>>, vector<8x128xf32>
    tpu.vector_store %arg3[%c0_75, %c0_76], %78 {strides = array<i32>} : memref<8x128xf32, #tpu.memory_space<vmem>>, vector<8x128xf32>,
    %c11_i32 = arith.constant 11 : i32
    %c0_77 = arith.constant 0 : index
    %c0_78 = arith.constant 0 : index
    %80 = vector.load %arg3[%c0_77, %c0_78] : memref<8x128xf32, #tpu.memory_space<vmem>>, vector<8x128xf32>
    %81 = arith.truncf %80 : vector<8x128xf32> to vector<8x128xbf16>
    %82 = arith.index_cast %c11_i32 : i32 to index
    %c0_79 = arith.constant 0 : index
    %c0_80 = arith.constant 0 : index
    %83 = vector.load %arg2[%82, %c0_79, %c0_80] : memref<32x128x128xbf16, #tpu.memory_space<vmem>>, vector<1x128x128xbf16>
    %84 = vector.shape_cast %83 : vector<1x128x128xbf16> to vector<128x128xbf16>
    %cst_81 = arith.constant dense<0.000000e+00> : vector<8x128xf32>
    %85 = tpu.matmul %81, %84, %cst_81 {dimension_numbers = #tpu.dot_dimension_numbers<[1], [0], [0], [1], [0, 0, 1, 1], [], []>} : vector<8x128xbf16>, vector<128x128xbf16>, vector<8x128xf32> -> vector<8x128xf32>
    %c0_82 = arith.constant 0 : index
    %c0_83 = arith.constant 0 : index
    %86 = vector.load %arg3[%c0_82, %c0_83] : memref<8x128xf32, #tpu.memory_space<vmem>>, vector<8x128xf32>
    tpu.vector_store %arg3[%c0_82, %c0_83], %85 {strides = array<i32>} : memref<8x128xf32, #tpu.memory_space<vmem>>, vector<8x128xf32>,
    %c12_i32 = arith.constant 12 : i32
    %c0_84 = arith.constant 0 : index
    %c0_85 = arith.constant 0 : index
    %87 = vector.load %arg3[%c0_84, %c0_85] : memref<8x128xf32, #tpu.memory_space<vmem>>, vector<8x128xf32>
    %88 = arith.truncf %87 : vector<8x128xf32> to vector<8x128xbf16>
    %89 = arith.index_cast %c12_i32 : i32 to index
    %c0_86 = arith.constant 0 : index
    %c0_87 = arith.constant 0 : index
    %90 = vector.load %arg2[%89, %c0_86, %c0_87] : memref<32x128x128xbf16, #tpu.memory_space<vmem>>, vector<1x128x128xbf16>
    %91 = vector.shape_cast %90 : vector<1x128x128xbf16> to vector<128x128xbf16>
    %cst_88 = arith.constant dense<0.000000e+00> : vector<8x128xf32>
    %92 = tpu.matmul %88, %91, %cst_88 {dimension_numbers = #tpu.dot_dimension_numbers<[1], [0], [0], [1], [0, 0, 1, 1], [], []>} : vector<8x128xbf16>, vector<128x128xbf16>, vector<8x128xf32> -> vector<8x128xf32>
    %c0_89 = arith.constant 0 : index
    %c0_90 = arith.constant 0 : index
    %93 = vector.load %arg3[%c0_89, %c0_90] : memref<8x128xf32, #tpu.memory_space<vmem>>, vector<8x128xf32>
    tpu.vector_store %arg3[%c0_89, %c0_90], %92 {strides = array<i32>} : memref<8x128xf32, #tpu.memory_space<vmem>>, vector<8x128xf32>,
    %c13_i32 = arith.constant 13 : i32
    %c0_91 = arith.constant 0 : index
    %c0_92 = arith.constant 0 : index
    %94 = vector.load %arg3[%c0_91, %c0_92] : memref<8x128xf32, #tpu.memory_space<vmem>>, vector<8x128xf32>
    %95 = arith.truncf %94 : vector<8x128xf32> to vector<8x128xbf16>
    %96 = arith.index_cast %c13_i32 : i32 to index
    %c0_93 = arith.constant 0 : index
    %c0_94 = arith.constant 0 : index
    %97 = vector.load %arg2[%96, %c0_93, %c0_94] : memref<32x128x128xbf16, #tpu.memory_space<vmem>>, vector<1x128x128xbf16>
    %98 = vector.shape_cast %97 : vector<1x128x128xbf16> to vector<128x128xbf16>
    %cst_95 = arith.constant dense<0.000000e+00> : vector<8x128xf32>
    %99 = tpu.matmul %95, %98, %cst_95 {dimension_numbers = #tpu.dot_dimension_numbers<[1], [0], [0], [1], [0, 0, 1, 1], [], []>} : vector<8x128xbf16>, vector<128x128xbf16>, vector<8x128xf32> -> vector<8x128xf32>
    %c0_96 = arith.constant 0 : index
    %c0_97 = arith.constant 0 : index
    %100 = vector.load %arg3[%c0_96, %c0_97] : memref<8x128xf32, #tpu.memory_space<vmem>>, vector<8x128xf32>
    tpu.vector_store %arg3[%c0_96, %c0_97], %99 {strides = array<i32>} : memref<8x128xf32, #tpu.memory_space<vmem>>, vector<8x128xf32>,
    %c14_i32 = arith.constant 14 : i32
    %c0_98 = arith.constant 0 : index
    %c0_99 = arith.constant 0 : index
    %101 = vector.load %arg3[%c0_98, %c0_99] : memref<8x128xf32, #tpu.memory_space<vmem>>, vector<8x128xf32>
    %102 = arith.truncf %101 : vector<8x128xf32> to vector<8x128xbf16>
    %103 = arith.index_cast %c14_i32 : i32 to index
    %c0_100 = arith.constant 0 : index
    %c0_101 = arith.constant 0 : index
    %104 = vector.load %arg2[%103, %c0_100, %c0_101] : memref<32x128x128xbf16, #tpu.memory_space<vmem>>, vector<1x128x128xbf16>
    %105 = vector.shape_cast %104 : vector<1x128x128xbf16> to vector<128x128xbf16>
    %cst_102 = arith.constant dense<0.000000e+00> : vector<8x128xf32>
    %106 = tpu.matmul %102, %105, %cst_102 {dimension_numbers = #tpu.dot_dimension_numbers<[1], [0], [0], [1], [0, 0, 1, 1], [], []>} : vector<8x128xbf16>, vector<128x128xbf16>, vector<8x128xf32> -> vector<8x128xf32>
    %c0_103 = arith.constant 0 : index
    %c0_104 = arith.constant 0 : index
    %107 = vector.load %arg3[%c0_103, %c0_104] : memref<8x128xf32, #tpu.memory_space<vmem>>, vector<8x128xf32>
    tpu.vector_store %arg3[%c0_103, %c0_104], %106 {strides = array<i32>} : memref<8x128xf32, #tpu.memory_space<vmem>>, vector<8x128xf32>,
    %c15_i32 = arith.constant 15 : i32
    %c0_105 = arith.constant 0 : index
    %c0_106 = arith.constant 0 : index
    %108 = vector.load %arg3[%c0_105, %c0_106] : memref<8x128xf32, #tpu.memory_space<vmem>>, vector<8x128xf32>
    %109 = arith.truncf %108 : vector<8x128xf32> to vector<8x128xbf16>
    %110 = arith.index_cast %c15_i32 : i32 to index
    %c0_107 = arith.constant 0 : index
    %c0_108 = arith.constant 0 : index
    %111 = vector.load %arg2[%110, %c0_107, %c0_108] : memref<32x128x128xbf16, #tpu.memory_space<vmem>>, vector<1x128x128xbf16>
    %112 = vector.shape_cast %111 : vector<1x128x128xbf16> to vector<128x128xbf16>
    %cst_109 = arith.constant dense<0.000000e+00> : vector<8x128xf32>
    %113 = tpu.matmul %109, %112, %cst_109 {dimension_numbers = #tpu.dot_dimension_numbers<[1], [0], [0], [1], [0, 0, 1, 1], [], []>} : vector<8x128xbf16>, vector<128x128xbf16>, vector<8x128xf32> -> vector<8x128xf32>
    %c0_110 = arith.constant 0 : index
    %c0_111 = arith.constant 0 : index
    %114 = vector.load %arg3[%c0_110, %c0_111] : memref<8x128xf32, #tpu.memory_space<vmem>>, vector<8x128xf32>
    tpu.vector_store %arg3[%c0_110, %c0_111], %113 {strides = array<i32>} : memref<8x128xf32, #tpu.memory_space<vmem>>, vector<8x128xf32>,
    %c16_i32 = arith.constant 16 : i32
    %c0_112 = arith.constant 0 : index
    %c0_113 = arith.constant 0 : index
    %115 = vector.load %arg3[%c0_112, %c0_113] : memref<8x128xf32, #tpu.memory_space<vmem>>, vector<8x128xf32>
    %116 = arith.truncf %115 : vector<8x128xf32> to vector<8x128xbf16>
    %117 = arith.index_cast %c16_i32 : i32 to index
    %c0_114 = arith.constant 0 : index
    %c0_115 = arith.constant 0 : index
    %118 = vector.load %arg2[%117, %c0_114, %c0_115] : memref<32x128x128xbf16, #tpu.memory_space<vmem>>, vector<1x128x128xbf16>
    %119 = vector.shape_cast %118 : vector<1x128x128xbf16> to vector<128x128xbf16>
    %cst_116 = arith.constant dense<0.000000e+00> : vector<8x128xf32>
    %120 = tpu.matmul %116, %119, %cst_116 {dimension_numbers = #tpu.dot_dimension_numbers<[1], [0], [0], [1], [0, 0, 1, 1], [], []>} : vector<8x128xbf16>, vector<128x128xbf16>, vector<8x128xf32> -> vector<8x128xf32>
    %c0_117 = arith.constant 0 : index
    %c0_118 = arith.constant 0 : index
    %121 = vector.load %arg3[%c0_117, %c0_118] : memref<8x128xf32, #tpu.memory_space<vmem>>, vector<8x128xf32>
    tpu.vector_store %arg3[%c0_117, %c0_118], %120 {strides = array<i32>} : memref<8x128xf32, #tpu.memory_space<vmem>>, vector<8x128xf32>,
    %c17_i32 = arith.constant 17 : i32
    %c0_119 = arith.constant 0 : index
    %c0_120 = arith.constant 0 : index
    %122 = vector.load %arg3[%c0_119, %c0_120] : memref<8x128xf32, #tpu.memory_space<vmem>>, vector<8x128xf32>
    %123 = arith.truncf %122 : vector<8x128xf32> to vector<8x128xbf16>
    %124 = arith.index_cast %c17_i32 : i32 to index
    %c0_121 = arith.constant 0 : index
    %c0_122 = arith.constant 0 : index
    %125 = vector.load %arg2[%124, %c0_121, %c0_122] : memref<32x128x128xbf16, #tpu.memory_space<vmem>>, vector<1x128x128xbf16>
    %126 = vector.shape_cast %125 : vector<1x128x128xbf16> to vector<128x128xbf16>
    %cst_123 = arith.constant dense<0.000000e+00> : vector<8x128xf32>
    %127 = tpu.matmul %123, %126, %cst_123 {dimension_numbers = #tpu.dot_dimension_numbers<[1], [0], [0], [1], [0, 0, 1, 1], [], []>} : vector<8x128xbf16>, vector<128x128xbf16>, vector<8x128xf32> -> vector<8x128xf32>
    %c0_124 = arith.constant 0 : index
    %c0_125 = arith.constant 0 : index
    %128 = vector.load %arg3[%c0_124, %c0_125] : memref<8x128xf32, #tpu.memory_space<vmem>>, vector<8x128xf32>
    tpu.vector_store %arg3[%c0_124, %c0_125], %127 {strides = array<i32>} : memref<8x128xf32, #tpu.memory_space<vmem>>, vector<8x128xf32>,
    %c18_i32 = arith.constant 18 : i32
    %c0_126 = arith.constant 0 : index
    %c0_127 = arith.constant 0 : index
    %129 = vector.load %arg3[%c0_126, %c0_127] : memref<8x128xf32, #tpu.memory_space<vmem>>, vector<8x128xf32>
    %130 = arith.truncf %129 : vector<8x128xf32> to vector<8x128xbf16>
    %131 = arith.index_cast %c18_i32 : i32 to index
    %c0_128 = arith.constant 0 : index
    %c0_129 = arith.constant 0 : index
    %132 = vector.load %arg2[%131, %c0_128, %c0_129] : memref<32x128x128xbf16, #tpu.memory_space<vmem>>, vector<1x128x128xbf16>
    %133 = vector.shape_cast %132 : vector<1x128x128xbf16> to vector<128x128xbf16>
    %cst_130 = arith.constant dense<0.000000e+00> : vector<8x128xf32>
    %134 = tpu.matmul %130, %133, %cst_130 {dimension_numbers = #tpu.dot_dimension_numbers<[1], [0], [0], [1], [0, 0, 1, 1], [], []>} : vector<8x128xbf16>, vector<128x128xbf16>, vector<8x128xf32> -> vector<8x128xf32>
    %c0_131 = arith.constant 0 : index
    %c0_132 = arith.constant 0 : index
    %135 = vector.load %arg3[%c0_131, %c0_132] : memref<8x128xf32, #tpu.memory_space<vmem>>, vector<8x128xf32>
    tpu.vector_store %arg3[%c0_131, %c0_132], %134 {strides = array<i32>} : memref<8x128xf32, #tpu.memory_space<vmem>>, vector<8x128xf32>,
    %c19_i32 = arith.constant 19 : i32
    %c0_133 = arith.constant 0 : index
    %c0_134 = arith.constant 0 : index
    %136 = vector.load %arg3[%c0_133, %c0_134] : memref<8x128xf32, #tpu.memory_space<vmem>>, vector<8x128xf32>
    %137 = arith.truncf %136 : vector<8x128xf32> to vector<8x128xbf16>
    %138 = arith.index_cast %c19_i32 : i32 to index
    %c0_135 = arith.constant 0 : index
    %c0_136 = arith.constant 0 : index
    %139 = vector.load %arg2[%138, %c0_135, %c0_136] : memref<32x128x128xbf16, #tpu.memory_space<vmem>>, vector<1x128x128xbf16>
    %140 = vector.shape_cast %139 : vector<1x128x128xbf16> to vector<128x128xbf16>
    %cst_137 = arith.constant dense<0.000000e+00> : vector<8x128xf32>
    %141 = tpu.matmul %137, %140, %cst_137 {dimension_numbers = #tpu.dot_dimension_numbers<[1], [0], [0], [1], [0, 0, 1, 1], [], []>} : vector<8x128xbf16>, vector<128x128xbf16>, vector<8x128xf32> -> vector<8x128xf32>
    %c0_138 = arith.constant 0 : index
    %c0_139 = arith.constant 0 : index
    %142 = vector.load %arg3[%c0_138, %c0_139] : memref<8x128xf32, #tpu.memory_space<vmem>>, vector<8x128xf32>
    tpu.vector_store %arg3[%c0_138, %c0_139], %141 {strides = array<i32>} : memref<8x128xf32, #tpu.memory_space<vmem>>, vector<8x128xf32>,
    %c20_i32 = arith.constant 20 : i32
    %c0_140 = arith.constant 0 : index
    %c0_141 = arith.constant 0 : index
    %143 = vector.load %arg3[%c0_140, %c0_141] : memref<8x128xf32, #tpu.memory_space<vmem>>, vector<8x128xf32>
    %144 = arith.truncf %143 : vector<8x128xf32> to vector<8x128xbf16>
    %145 = arith.index_cast %c20_i32 : i32 to index
    %c0_142 = arith.constant 0 : index
    %c0_143 = arith.constant 0 : index
    %146 = vector.load %arg2[%145, %c0_142, %c0_143] : memref<32x128x128xbf16, #tpu.memory_space<vmem>>, vector<1x128x128xbf16>
    %147 = vector.shape_cast %146 : vector<1x128x128xbf16> to vector<128x128xbf16>
    %cst_144 = arith.constant dense<0.000000e+00> : vector<8x128xf32>
    %148 = tpu.matmul %144, %147, %cst_144 {dimension_numbers = #tpu.dot_dimension_numbers<[1], [0], [0], [1], [0, 0, 1, 1], [], []>} : vector<8x128xbf16>, vector<128x128xbf16>, vector<8x128xf32> -> vector<8x128xf32>
    %c0_145 = arith.constant 0 : index
    %c0_146 = arith.constant 0 : index
    %149 = vector.load %arg3[%c0_145, %c0_146] : memref<8x128xf32, #tpu.memory_space<vmem>>, vector<8x128xf32>
    tpu.vector_store %arg3[%c0_145, %c0_146], %148 {strides = array<i32>} : memref<8x128xf32, #tpu.memory_space<vmem>>, vector<8x128xf32>,
    %c21_i32 = arith.constant 21 : i32
    %c0_147 = arith.constant 0 : index
    %c0_148 = arith.constant 0 : index
    %150 = vector.load %arg3[%c0_147, %c0_148] : memref<8x128xf32, #tpu.memory_space<vmem>>, vector<8x128xf32>
    %151 = arith.truncf %150 : vector<8x128xf32> to vector<8x128xbf16>
    %152 = arith.index_cast %c21_i32 : i32 to index
    %c0_149 = arith.constant 0 : index
    %c0_150 = arith.constant 0 : index
    %153 = vector.load %arg2[%152, %c0_149, %c0_150] : memref<32x128x128xbf16, #tpu.memory_space<vmem>>, vector<1x128x128xbf16>
    %154 = vector.shape_cast %153 : vector<1x128x128xbf16> to vector<128x128xbf16>
    %cst_151 = arith.constant dense<0.000000e+00> : vector<8x128xf32>
    %155 = tpu.matmul %151, %154, %cst_151 {dimension_numbers = #tpu.dot_dimension_numbers<[1], [0], [0], [1], [0, 0, 1, 1], [], []>} : vector<8x128xbf16>, vector<128x128xbf16>, vector<8x128xf32> -> vector<8x128xf32>
    %c0_152 = arith.constant 0 : index
    %c0_153 = arith.constant 0 : index
    %156 = vector.load %arg3[%c0_152, %c0_153] : memref<8x128xf32, #tpu.memory_space<vmem>>, vector<8x128xf32>
    tpu.vector_store %arg3[%c0_152, %c0_153], %155 {strides = array<i32>} : memref<8x128xf32, #tpu.memory_space<vmem>>, vector<8x128xf32>,
    %c22_i32 = arith.constant 22 : i32
    %c0_154 = arith.constant 0 : index
    %c0_155 = arith.constant 0 : index
    %157 = vector.load %arg3[%c0_154, %c0_155] : memref<8x128xf32, #tpu.memory_space<vmem>>, vector<8x128xf32>
    %158 = arith.truncf %157 : vector<8x128xf32> to vector<8x128xbf16>
    %159 = arith.index_cast %c22_i32 : i32 to index
    %c0_156 = arith.constant 0 : index
    %c0_157 = arith.constant 0 : index
    %160 = vector.load %arg2[%159, %c0_156, %c0_157] : memref<32x128x128xbf16, #tpu.memory_space<vmem>>, vector<1x128x128xbf16>
    %161 = vector.shape_cast %160 : vector<1x128x128xbf16> to vector<128x128xbf16>
    %cst_158 = arith.constant dense<0.000000e+00> : vector<8x128xf32>
    %162 = tpu.matmul %158, %161, %cst_158 {dimension_numbers = #tpu.dot_dimension_numbers<[1], [0], [0], [1], [0, 0, 1, 1], [], []>} : vector<8x128xbf16>, vector<128x128xbf16>, vector<8x128xf32> -> vector<8x128xf32>
    %c0_159 = arith.constant 0 : index
    %c0_160 = arith.constant 0 : index
    %163 = vector.load %arg3[%c0_159, %c0_160] : memref<8x128xf32, #tpu.memory_space<vmem>>, vector<8x128xf32>
    tpu.vector_store %arg3[%c0_159, %c0_160], %162 {strides = array<i32>} : memref<8x128xf32, #tpu.memory_space<vmem>>, vector<8x128xf32>,
    %c23_i32 = arith.constant 23 : i32
    %c0_161 = arith.constant 0 : index
    %c0_162 = arith.constant 0 : index
    %164 = vector.load %arg3[%c0_161, %c0_162] : memref<8x128xf32, #tpu.memory_space<vmem>>, vector<8x128xf32>
    %165 = arith.truncf %164 : vector<8x128xf32> to vector<8x128xbf16>
    %166 = arith.index_cast %c23_i32 : i32 to index
    %c0_163 = arith.constant 0 : index
    %c0_164 = arith.constant 0 : index
    %167 = vector.load %arg2[%166, %c0_163, %c0_164] : memref<32x128x128xbf16, #tpu.memory_space<vmem>>, vector<1x128x128xbf16>
    %168 = vector.shape_cast %167 : vector<1x128x128xbf16> to vector<128x128xbf16>
    %cst_165 = arith.constant dense<0.000000e+00> : vector<8x128xf32>
    %169 = tpu.matmul %165, %168, %cst_165 {dimension_numbers = #tpu.dot_dimension_numbers<[1], [0], [0], [1], [0, 0, 1, 1], [], []>} : vector<8x128xbf16>, vector<128x128xbf16>, vector<8x128xf32> -> vector<8x128xf32>
    %c0_166 = arith.constant 0 : index
    %c0_167 = arith.constant 0 : index
    %170 = vector.load %arg3[%c0_166, %c0_167] : memref<8x128xf32, #tpu.memory_space<vmem>>, vector<8x128xf32>
    tpu.vector_store %arg3[%c0_166, %c0_167], %169 {strides = array<i32>} : memref<8x128xf32, #tpu.memory_space<vmem>>, vector<8x128xf32>,
    %c24_i32 = arith.constant 24 : i32
    %c0_168 = arith.constant 0 : index
    %c0_169 = arith.constant 0 : index
    %171 = vector.load %arg3[%c0_168, %c0_169] : memref<8x128xf32, #tpu.memory_space<vmem>>, vector<8x128xf32>
    %172 = arith.truncf %171 : vector<8x128xf32> to vector<8x128xbf16>
    %173 = arith.index_cast %c24_i32 : i32 to index
    %c0_170 = arith.constant 0 : index
    %c0_171 = arith.constant 0 : index
    %174 = vector.load %arg2[%173, %c0_170, %c0_171] : memref<32x128x128xbf16, #tpu.memory_space<vmem>>, vector<1x128x128xbf16>
    %175 = vector.shape_cast %174 : vector<1x128x128xbf16> to vector<128x128xbf16>
    %cst_172 = arith.constant dense<0.000000e+00> : vector<8x128xf32>
    %176 = tpu.matmul %172, %175, %cst_172 {dimension_numbers = #tpu.dot_dimension_numbers<[1], [0], [0], [1], [0, 0, 1, 1], [], []>} : vector<8x128xbf16>, vector<128x128xbf16>, vector<8x128xf32> -> vector<8x128xf32>
    %c0_173 = arith.constant 0 : index
    %c0_174 = arith.constant 0 : index
    %177 = vector.load %arg3[%c0_173, %c0_174] : memref<8x128xf32, #tpu.memory_space<vmem>>, vector<8x128xf32>
    tpu.vector_store %arg3[%c0_173, %c0_174], %176 {strides = array<i32>} : memref<8x128xf32, #tpu.memory_space<vmem>>, vector<8x128xf32>,
    %c25_i32 = arith.constant 25 : i32
    %c0_175 = arith.constant 0 : index
    %c0_176 = arith.constant 0 : index
    %178 = vector.load %arg3[%c0_175, %c0_176] : memref<8x128xf32, #tpu.memory_space<vmem>>, vector<8x128xf32>
    %179 = arith.truncf %178 : vector<8x128xf32> to vector<8x128xbf16>
    %180 = arith.index_cast %c25_i32 : i32 to index
    %c0_177 = arith.constant 0 : index
    %c0_178 = arith.constant 0 : index
    %181 = vector.load %arg2[%180, %c0_177, %c0_178] : memref<32x128x128xbf16, #tpu.memory_space<vmem>>, vector<1x128x128xbf16>
    %182 = vector.shape_cast %181 : vector<1x128x128xbf16> to vector<128x128xbf16>
    %cst_179 = arith.constant dense<0.000000e+00> : vector<8x128xf32>
    %183 = tpu.matmul %179, %182, %cst_179 {dimension_numbers = #tpu.dot_dimension_numbers<[1], [0], [0], [1], [0, 0, 1, 1], [], []>} : vector<8x128xbf16>, vector<128x128xbf16>, vector<8x128xf32> -> vector<8x128xf32>
    %c0_180 = arith.constant 0 : index
    %c0_181 = arith.constant 0 : index
    %184 = vector.load %arg3[%c0_180, %c0_181] : memref<8x128xf32, #tpu.memory_space<vmem>>, vector<8x128xf32>
    tpu.vector_store %arg3[%c0_180, %c0_181], %183 {strides = array<i32>} : memref<8x128xf32, #tpu.memory_space<vmem>>, vector<8x128xf32>,
    %c26_i32 = arith.constant 26 : i32
    %c0_182 = arith.constant 0 : index
    %c0_183 = arith.constant 0 : index
    %185 = vector.load %arg3[%c0_182, %c0_183] : memref<8x128xf32, #tpu.memory_space<vmem>>, vector<8x128xf32>
    %186 = arith.truncf %185 : vector<8x128xf32> to vector<8x128xbf16>
    %187 = arith.index_cast %c26_i32 : i32 to index
    %c0_184 = arith.constant 0 : index
    %c0_185 = arith.constant 0 : index
    %188 = vector.load %arg2[%187, %c0_184, %c0_185] : memref<32x128x128xbf16, #tpu.memory_space<vmem>>, vector<1x128x128xbf16>
    %189 = vector.shape_cast %188 : vector<1x128x128xbf16> to vector<128x128xbf16>
    %cst_186 = arith.constant dense<0.000000e+00> : vector<8x128xf32>
    %190 = tpu.matmul %186, %189, %cst_186 {dimension_numbers = #tpu.dot_dimension_numbers<[1], [0], [0], [1], [0, 0, 1, 1], [], []>} : vector<8x128xbf16>, vector<128x128xbf16>, vector<8x128xf32> -> vector<8x128xf32>
    %c0_187 = arith.constant 0 : index
    %c0_188 = arith.constant 0 : index
    %191 = vector.load %arg3[%c0_187, %c0_188] : memref<8x128xf32, #tpu.memory_space<vmem>>, vector<8x128xf32>
    tpu.vector_store %arg3[%c0_187, %c0_188], %190 {strides = array<i32>} : memref<8x128xf32, #tpu.memory_space<vmem>>, vector<8x128xf32>,
    %c27_i32 = arith.constant 27 : i32
    %c0_189 = arith.constant 0 : index
    %c0_190 = arith.constant 0 : index
    %192 = vector.load %arg3[%c0_189, %c0_190] : memref<8x128xf32, #tpu.memory_space<vmem>>, vector<8x128xf32>
    %193 = arith.truncf %192 : vector<8x128xf32> to vector<8x128xbf16>
    %194 = arith.index_cast %c27_i32 : i32 to index
    %c0_191 = arith.constant 0 : index
    %c0_192 = arith.constant 0 : index
    %195 = vector.load %arg2[%194, %c0_191, %c0_192] : memref<32x128x128xbf16, #tpu.memory_space<vmem>>, vector<1x128x128xbf16>
    %196 = vector.shape_cast %195 : vector<1x128x128xbf16> to vector<128x128xbf16>
    %cst_193 = arith.constant dense<0.000000e+00> : vector<8x128xf32>
    %197 = tpu.matmul %193, %196, %cst_193 {dimension_numbers = #tpu.dot_dimension_numbers<[1], [0], [0], [1], [0, 0, 1, 1], [], []>} : vector<8x128xbf16>, vector<128x128xbf16>, vector<8x128xf32> -> vector<8x128xf32>
    %c0_194 = arith.constant 0 : index
    %c0_195 = arith.constant 0 : index
    %198 = vector.load %arg3[%c0_194, %c0_195] : memref<8x128xf32, #tpu.memory_space<vmem>>, vector<8x128xf32>
    tpu.vector_store %arg3[%c0_194, %c0_195], %197 {strides = array<i32>} : memref<8x128xf32, #tpu.memory_space<vmem>>, vector<8x128xf32>,
    %c28_i32 = arith.constant 28 : i32
    %c0_196 = arith.constant 0 : index
    %c0_197 = arith.constant 0 : index
    %199 = vector.load %arg3[%c0_196, %c0_197] : memref<8x128xf32, #tpu.memory_space<vmem>>, vector<8x128xf32>
    %200 = arith.truncf %199 : vector<8x128xf32> to vector<8x128xbf16>
    %201 = arith.index_cast %c28_i32 : i32 to index
    %c0_198 = arith.constant 0 : index
    %c0_199 = arith.constant 0 : index
    %202 = vector.load %arg2[%201, %c0_198, %c0_199] : memref<32x128x128xbf16, #tpu.memory_space<vmem>>, vector<1x128x128xbf16>
    %203 = vector.shape_cast %202 : vector<1x128x128xbf16> to vector<128x128xbf16>
    %cst_200 = arith.constant dense<0.000000e+00> : vector<8x128xf32>
    %204 = tpu.matmul %200, %203, %cst_200 {dimension_numbers = #tpu.dot_dimension_numbers<[1], [0], [0], [1], [0, 0, 1, 1], [], []>} : vector<8x128xbf16>, vector<128x128xbf16>, vector<8x128xf32> -> vector<8x128xf32>
    %c0_201 = arith.constant 0 : index
    %c0_202 = arith.constant 0 : index
    %205 = vector.load %arg3[%c0_201, %c0_202] : memref<8x128xf32, #tpu.memory_space<vmem>>, vector<8x128xf32>
    tpu.vector_store %arg3[%c0_201, %c0_202], %204 {strides = array<i32>} : memref<8x128xf32, #tpu.memory_space<vmem>>, vector<8x128xf32>,
    %c29_i32 = arith.constant 29 : i32
    %c0_203 = arith.constant 0 : index
    %c0_204 = arith.constant 0 : index
    %206 = vector.load %arg3[%c0_203, %c0_204] : memref<8x128xf32, #tpu.memory_space<vmem>>, vector<8x128xf32>
    %207 = arith.truncf %206 : vector<8x128xf32> to vector<8x128xbf16>
    %208 = arith.index_cast %c29_i32 : i32 to index
    %c0_205 = arith.constant 0 : index
    %c0_206 = arith.constant 0 : index
    %209 = vector.load %arg2[%208, %c0_205, %c0_206] : memref<32x128x128xbf16, #tpu.memory_space<vmem>>, vector<1x128x128xbf16>
    %210 = vector.shape_cast %209 : vector<1x128x128xbf16> to vector<128x128xbf16>
    %cst_207 = arith.constant dense<0.000000e+00> : vector<8x128xf32>
    %211 = tpu.matmul %207, %210, %cst_207 {dimension_numbers = #tpu.dot_dimension_numbers<[1], [0], [0], [1], [0, 0, 1, 1], [], []>} : vector<8x128xbf16>, vector<128x128xbf16>, vector<8x128xf32> -> vector<8x128xf32>
    %c0_208 = arith.constant 0 : index
    %c0_209 = arith.constant 0 : index
    %212 = vector.load %arg3[%c0_208, %c0_209] : memref<8x128xf32, #tpu.memory_space<vmem>>, vector<8x128xf32>
    tpu.vector_store %arg3[%c0_208, %c0_209], %211 {strides = array<i32>} : memref<8x128xf32, #tpu.memory_space<vmem>>, vector<8x128xf32>,
    %c30_i32 = arith.constant 30 : i32
    %c0_210 = arith.constant 0 : index
    %c0_211 = arith.constant 0 : index
    %213 = vector.load %arg3[%c0_210, %c0_211] : memref<8x128xf32, #tpu.memory_space<vmem>>, vector<8x128xf32>
    %214 = arith.truncf %213 : vector<8x128xf32> to vector<8x128xbf16>
    %215 = arith.index_cast %c30_i32 : i32 to index
    %c0_212 = arith.constant 0 : index
    %c0_213 = arith.constant 0 : index
    %216 = vector.load %arg2[%215, %c0_212, %c0_213] : memref<32x128x128xbf16, #tpu.memory_space<vmem>>, vector<1x128x128xbf16>
    %217 = vector.shape_cast %216 : vector<1x128x128xbf16> to vector<128x128xbf16>
    %cst_214 = arith.constant dense<0.000000e+00> : vector<8x128xf32>
    %218 = tpu.matmul %214, %217, %cst_214 {dimension_numbers = #tpu.dot_dimension_numbers<[1], [0], [0], [1], [0, 0, 1, 1], [], []>} : vector<8x128xbf16>, vector<128x128xbf16>, vector<8x128xf32> -> vector<8x128xf32>
    %c0_215 = arith.constant 0 : index
    %c0_216 = arith.constant 0 : index
    %219 = vector.load %arg3[%c0_215, %c0_216] : memref<8x128xf32, #tpu.memory_space<vmem>>, vector<8x128xf32>
    tpu.vector_store %arg3[%c0_215, %c0_216], %218 {strides = array<i32>} : memref<8x128xf32, #tpu.memory_space<vmem>>, vector<8x128xf32>,
    %c31_i32 = arith.constant 31 : i32
    %c0_217 = arith.constant 0 : index
    %c0_218 = arith.constant 0 : index
    %220 = vector.load %arg3[%c0_217, %c0_218] : memref<8x128xf32, #tpu.memory_space<vmem>>, vector<8x128xf32>
    %221 = arith.truncf %220 : vector<8x128xf32> to vector<8x128xbf16>
    %222 = arith.index_cast %c31_i32 : i32 to index
    %c0_219 = arith.constant 0 : index
    %c0_220 = arith.constant 0 : index
    %223 = vector.load %arg2[%222, %c0_219, %c0_220] : memref<32x128x128xbf16, #tpu.memory_space<vmem>>, vector<1x128x128xbf16>
    %224 = vector.shape_cast %223 : vector<1x128x128xbf16> to vector<128x128xbf16>
    %cst_221 = arith.constant dense<0.000000e+00> : vector<8x128xf32>
    %225 = tpu.matmul %221, %224, %cst_221 {dimension_numbers = #tpu.dot_dimension_numbers<[1], [0], [0], [1], [0, 0, 1, 1], [], []>} : vector<8x128xbf16>, vector<128x128xbf16>, vector<8x128xf32> -> vector<8x128xf32>
    %c0_222 = arith.constant 0 : index
    %c0_223 = arith.constant 0 : index
    %226 = vector.load %arg3[%c0_222, %c0_223] : memref<8x128xf32, #tpu.memory_space<vmem>>, vector<8x128xf32>
    tpu.vector_store %arg3[%c0_222, %c0_223], %225 {strides = array<i32>} : memref<8x128xf32, #tpu.memory_space<vmem>>, vector<8x128xf32>,
    %c32_i32 = arith.constant 32 : i32
    return
  }
  func.func @transform_0(%arg0: i32) -> (i32, i32) {
    %c0_i32 = arith.constant 0 : i32
    %c0_i32_0 = arith.constant 0 : i32
    %c0_i32_1 = arith.constant 0 : i32
    return %c0_i32, %c0_i32_0 : i32, i32
  }
  func.func @transform_1(%arg0: i32) -> (i32, i32, i32) {
    %c0_i32 = arith.constant 0 : i32
    %c0_i32_0 = arith.constant 0 : i32
    %c0_i32_1 = arith.constant 0 : i32
    return %arg0, %c0_i32, %c0_i32_0 : i32, i32, i32
  }
  func.func @transform_2(%arg0: i32) -> (i32, i32) {
    %c0_i32 = arith.constant 0 : i32
    %c0_i32_0 = arith.constant 0 : i32
    %c0_i32_1 = arith.constant 0 : i32
    return %c0_i32, %c0_i32_0 : i32, i32
  }
}

</mosaic_0001>

<llo_original>
// kernel: tpu_custom_call.1
$region0: #{tpu_custom_call.1}
  #allocation0 [shape = 'u32[]', space=smem, size = 0x4, offset = 0x4, fixed_abs, tag = 'smem constant byte address 0x4 - core index']
  #allocation1 [shape = 'u32[144,128]{1,0:T(1,128)}', space=vmem, size = 0x12000, scoped, tag = 'internal scratch']
  %s0 = inlined_call_operand.hbm [shape: f32[8,128], index: 0, kind: input, shape index: {}]
  %s1 = inlined_call_operand.hbm [shape: bf16[32,128,128], index: 1, kind: input, shape index: {}]
  %s2 = inlined_call_operand.hbm [shape: f32[8,128], index: 2, kind: output, shape index: {}]
  %s3 = sld [smem:[#allocation0]]
  $region30: #{tpu_custom_call.1} parent=0
    _
  %s5 = ssub.s32 1, %s3
  %s6 = scalar_select 0, %s5, %s3
  $region1: #{tpu_custom_call.1} parent=0
    #allocation2 [shape = 'u8[4096]{0}', space=vmem, size = 0x1000, scoped, tag = 'input window, operand 0, single buffered']
    #allocation3 [shape = 's32[1]{0}', space=sflag, size = 0x4, scoped, tag = 'scoped memory for tpu_custom_call.1']
    #allocation4 [shape = 's32[1]{0}', space=sflag, size = 0x4, scoped, tag = 'scoped memory for tpu_custom_call.1']
    #allocation5 [shape = 'u8[1048576]{0}', space=vmem, size = 0x100000, scoped, tag = 'input window, operand 1, single buffered']
    #allocation6 [shape = 's32[1]{0}', space=sflag, size = 0x4, scoped, tag = 'scoped memory for tpu_custom_call.1']
    #allocation7 [shape = 'u8[4096]{0}', space=vmem, size = 0x1000, scoped, tag = 'output window, operand 0, single buffered']
    %7 = vsyncpa [#allocation3], 0
    %8 = vsyncpa [#allocation6], 0
    %9 = vsyncpa [#allocation4], 0
    // Predicated region
    $region2: #{tpu_custom_call.1} parent=1 // pred_check
      _
    $region3: #{tpu_custom_call.1} parent=1 // pred_check_branch
      %11 = sbr.rel (0) target = $region5
    $region4: #{tpu_custom_call.1} parent=1 // pred_region
      %s13 = ssub.s32 128, 128
      %14 = vsyncadd [#allocation3], %s13
      %s16 = sshll.u32 [#allocation2], 4
      %s17 = int_to_ptr.vmem [resolvable:$true] %s16
      %19 = dma.hbm_to_vmem [thread:$0]  %s0, 128, %s17, [#allocation3]
    $region5: #{tpu_custom_call.1} parent=1 // pred_fallthru
      _
    // Predicated region
    $region6: #{tpu_custom_call.1} parent=1 // pred_check
      _
    $region7: #{tpu_custom_call.1} parent=1 // pred_check_branch
      %21 = sbr.rel (0) target = $region9
    $region8: #{tpu_custom_call.1} parent=1 // pred_region
      %s23 = ssub.s32 32768, 32768
      %24 = vsyncadd [#allocation6], %s23
      %s25 = sshll.u32 [#allocation5], 4
      %s26 = int_to_ptr.vmem [resolvable:$true] %s25
      %31 = dma.hbm_to_vmem [thread:$0]  %s1, 32768, %s26, [#allocation6], 64, 64, 4
    $region9: #{tpu_custom_call.1} parent=1 // pred_fallthru
      _
    // Predicated region
    $region10: #{tpu_custom_call.1} parent=1 // pred_check
      _
    $region11: #{tpu_custom_call.1} parent=1 // pred_check_branch
      %33 = sbr.rel (0) target = $region13
    $region12: #{tpu_custom_call.1} parent=1 // pred_region
      %34 = dma.done [#allocation3], 128
    $region13: #{tpu_custom_call.1} parent=1 // pred_fallthru
      _
    // Predicated region
    $region14: #{tpu_custom_call.1} parent=1 // pred_check
      _
    $region15: #{tpu_custom_call.1} parent=1 // pred_check_branch
      %36 = sbr.rel (0) target = $region17
    $region16: #{tpu_custom_call.1} parent=1 // pred_region
      %37 = dma.done [#allocation6], 32768
    $region17: #{tpu_custom_call.1} parent=1 // pred_fallthru
      _
    %p39 = scmp.eq.s32.totalorder 0, 0
    // Predicated region
    $region18: #{tpu_custom_call.1} parent=1 // pred_check
      %p40 = pneg %p39
    $region19: #{tpu_custom_call.1} parent=1 // pred_check_branch
      %42 = sbr.rel (%p40) target = $region21
    $region20: #{tpu_custom_call.1} parent=1 // pred_region
      %v43 = vld [vmem:[#allocation2] sm:$0xff]
      %44 = vst [vmem:[#allocation7] sm:$0xff] %v43
    $region21: #{tpu_custom_call.1} parent=1 // pred_fallthru
      _
    %v45 = vld [vmem:[#allocation7] sm:$0xff]
    %v46 = vpack.c.bf16 %v45, %v45
    %v47 = vld [vmem:[#allocation5] sm:$0xf]
    %v48 = vld [vmem:[#allocation5 + $0x4] sm:$0xf]
    %v49 = vld [vmem:[#allocation5 + $0x8] sm:$0xf]
    %v50 = vld [vmem:[#allocation5 + $0xc] sm:$0xf]
    %v51 = vld [vmem:[#allocation5 + $0x10] sm:$0xf]
    %v52 = vld [vmem:[#allocation5 + $0x14] sm:$0xf]
    %v53 = vld [vmem:[#allocation5 + $0x18] sm:$0xf]
    %v54 = vld [vmem:[#allocation5 + $0x1c] sm:$0xf]
    %v55 = vld [vmem:[#allocation5 + $0x20] sm:$0xf]
    %v56 = vld [vmem:[#allocation5 + $0x24] sm:$0xf]
    %v57 = vld [vmem:[#allocation5 + $0x28] sm:$0xf]
    %v58 = vld [vmem:[#allocation5 + $0x2c] sm:$0xf]
    %v59 = vld [vmem:[#allocation5 + $0x30] sm:$0xf]
    %v60 = vld [vmem:[#allocation5 + $0x34] sm:$0xf]
    %v61 = vld [vmem:[#allocation5 + $0x38] sm:$0xf]
    %v62 = vld [vmem:[#allocation5 + $0x3c] sm:$0xf]
    %v79 = vunpack.c.l.b16 %v47
    %v80 = vunpack.c.l.b16 %v48
    %v81 = vunpack.c.l.b16 %v49
    %v82 = vunpack.c.l.b16 %v50
    %v83 = vunpack.c.l.b16 %v51
    %v84 = vunpack.c.l.b16 %v52
    %v85 = vunpack.c.l.b16 %v53
    %v86 = vunpack.c.l.b16 %v54
    %v87 = vunpack.c.l.b16 %v55
    %v88 = vunpack.c.l.b16 %v56
    %v89 = vunpack.c.l.b16 %v57
    %v90 = vunpack.c.l.b16 %v58
    %v91 = vunpack.c.l.b16 %v59
    %v92 = vunpack.c.l.b16 %v60
    %v93 = vunpack.c.l.b16 %v61
    %v94 = vunpack.c.l.b16 %v62
    %v95 = vpack.c.b16 %v80, %v79
    %v96 = vpack.c.b16 %v82, %v81
    %v97 = vpack.c.b16 %v84, %v83
    %v98 = vpack.c.b16 %v86, %v85
    %v99 = vpack.c.b16 %v88, %v87
    %v100 = vpack.c.b16 %v90, %v89
    %v101 = vpack.c.b16 %v92, %v91
    %v102 = vpack.c.b16 %v94, %v93
    %111 = vmatprep.subr.bf16.mxu0 0
    %112 = vmatpush1.bf16.msra.mxu0 %v95
    %113 = vmatprep.subr.bf16.mxu0 0
    %114 = vmatpush1.bf16.msra.mxu0 %v96
    %115 = vmatprep.subr.bf16.mxu0 0
    %116 = vmatpush1.bf16.msra.mxu0 %v97
    %117 = vmatprep.subr.bf16.mxu0 0
    %118 = vmatpush1.bf16.msra.mxu0 %v98
    %119 = vmatprep.subr.bf16.mxu0 0
    %120 = vmatpush1.bf16.msra.mxu0 %v99
    %121 = vmatprep.subr.bf16.mxu0 0
    %122 = vmatpush1.bf16.msra.mxu0 %v100
    %123 = vmatprep.subr.bf16.mxu0 0
    %124 = vmatpush1.bf16.msra.mxu0 %v101
    %125 = vmatprep.subr.bf16.mxu0 0
    %126 = vmatpush1.bf16.msra.mxu0 %v102
    %127 = vmatprep.subr.bf16.mxu0 0
    %128 = vmatpush1.bf16.msra.mxu0 0
    %129 = vmatprep.subr.bf16.mxu0 0
    %130 = vmatpush1.bf16.msra.mxu0 0
    %131 = vmatprep.subr.bf16.mxu0 0
    %132 = vmatpush1.bf16.msra.mxu0 0
    %133 = vmatprep.subr.bf16.mxu0 0
    %134 = vmatpush1.bf16.msra.mxu0 0
    %135 = vmatprep.subr.bf16.mxu0 0
    %136 = vmatpush1.bf16.msra.mxu0 0
    %137 = vmatprep.subr.bf16.mxu0 0
    %138 = vmatpush1.bf16.msra.mxu0 0
    %139 = vmatprep.subr.bf16.mxu0 0
    %140 = vmatpush1.bf16.msra.mxu0 0
    %141 = vmatprep.subr.bf16.mxu0 0
    %142 = vmatpush1.bf16.msra.mxu0 0
    %143 = vmatprep.mubr.bf16.mxu0 0
    %144 = vmatmul.mubr.bf16.gmra.mrb[0].mxu0 %v46
    %v145 = vpop.f32.mrb[0].mxu0
    %v146 = vadd.f32 0.0, %v145
    %v147 = vpop.f32.mrb[0].mxu0
    %v148 = vpop.f32.mrb[0].mxu0
    %v149 = vpop.f32.mrb[0].mxu0
    %150 = vdwg.mxu0
    %151 = vst [vmem:[#allocation7] sm:$0xff] %v146
    %v152 = vld [vmem:[#allocation7] sm:$0xff]
    %v153 = vpack.c.bf16 %v152, %v152
    %s154 = scalar_lea.vmem [#allocation5], 64
    %v155 = vld [vmem:[%s154] sm:$0xf]
    %v156 = vld [vmem:[%s154 + $0x4] sm:$0xf]
    %v157 = vld [vmem:[%s154 + $0x8] sm:$0xf]
    %v158 = vld [vmem:[%s154 + $0xc] sm:$0xf]
    %v159 = vld [vmem:[%s154 + $0x10] sm:$0xf]
    %v160 = vld [vmem:[%s154 + $0x14] sm:$0xf]
    %v161 = vld [vmem:[%s154 + $0x18] sm:$0xf]
    %v162 = vld [vmem:[%s154 + $0x1c] sm:$0xf]
    %v163 = vld [vmem:[%s154 + $0x20] sm:$0xf]
    %v164 = vld [vmem:[%s154 + $0x24] sm:$0xf]
    %v165 = vld [vmem:[%s154 + $0x28] sm:$0xf]
    %v166 = vld [vmem:[%s154 + $0x2c] sm:$0xf]
    %v167 = vld [vmem:[%s154 + $0x30] sm:$0xf]
    %v168 = vld [vmem:[%s154 + $0x34] sm:$0xf]
    %v169 = vld [vmem:[%s154 + $0x38] sm:$0xf]
    %v170 = vld [vmem:[%s154 + $0x3c] sm:$0xf]
    %v187 = vunpack.c.l.b16 %v155
    %v188 = vunpack.c.l.b16 %v156
    %v189 = vunpack.c.l.b16 %v157
    %v190 = vunpack.c.l.b16 %v158
    %v191 = vunpack.c.l.b16 %v159
    %v192 = vunpack.c.l.b16 %v160
    %v193 = vunpack.c.l.b16 %v161
    %v194 = vunpack.c.l.b16 %v162
    %v195 = vunpack.c.l.b16 %v163
    %v196 = vunpack.c.l.b16 %v164
    %v197 = vunpack.c.l.b16 %v165
    %v198 = vunpack.c.l.b16 %v166
    %v199 = vunpack.c.l.b16 %v167
    %v200 = vunpack.c.l.b16 %v168
    %v201 = vunpack.c.l.b16 %v169
    %v202 = vunpack.c.l.b16 %v170
    %v203 = vpack.c.b16 %v188, %v187
    %v204 = vpack.c.b16 %v190, %v189
    %v205 = vpack.c.b16 %v192, %v191
    %v206 = vpack.c.b16 %v194, %v193
    %v207 = vpack.c.b16 %v196, %v195
    %v208 = vpack.c.b16 %v198, %v197
    %v209 = vpack.c.b16 %v200, %v199
    %v210 = vpack.c.b16 %v202, %v201
    %219 = vmatprep.subr.bf16.mxu0 0
    %220 = vmatpush1.bf16.msra.mxu0 %v203
    %221 = vmatprep.subr.bf16.mxu0 0
    %222 = vmatpush1.bf16.msra.mxu0 %v204
    %223 = vmatprep.subr.bf16.mxu0 0
    %224 = vmatpush1.bf16.msra.mxu0 %v205
    %225 = vmatprep.subr.bf16.mxu0 0
    %226 = vmatpush1.bf16.msra.mxu0 %v206
    %227 = vmatprep.subr.bf16.mxu0 0
    %228 = vmatpush1.bf16.msra.mxu0 %v207
    %229 = vmatprep.subr.bf16.mxu0 0
    %230 = vmatpush1.bf16.msra.mxu0 %v208
    %231 = vmatprep.subr.bf16.mxu0 0
    %232 = vmatpush1.bf16.msra.mxu0 %v209
    %233 = vmatprep.subr.bf16.mxu0 0
    %234 = vmatpush1.bf16.msra.mxu0 %v210
    %235 = vmatprep.subr.bf16.mxu0 0
    %236 = vmatpush1.bf16.msra.mxu0 0
    %237 = vmatprep.subr.bf16.mxu0 0
    %238 = vmatpush1.bf16.msra.mxu0 0
    %239 = vmatprep.subr.bf16.mxu0 0
    %240 = vmatpush1.bf16.msra.mxu0 0
    %241 = vmatprep.subr.bf16.mxu0 0
    %242 = vmatpush1.bf16.msra.mxu0 0
    %243 = vmatprep.subr.bf16.mxu0 0
    %244 = vmatpush1.bf16.msra.mxu0 0
    %245 = vmatprep.subr.bf16.mxu0 0
    %246 = vmatpush1.bf16.msra.mxu0 0
    %247 = vmatprep.subr.bf16.mxu0 0
    %248 = vmatpush1.bf16.msra.mxu0 0
    %249 = vmatprep.subr.bf16.mxu0 0
    %250 = vmatpush1.bf16.msra.mxu0 0
    %251 = vmatprep.mubr.bf16.mxu0 0
    %252 = vmatmul.mubr.bf16.gmra.mrb[0].mxu0 %v153
    %v253 = vpop.f32.mrb[0].mxu0
    %v254 = vadd.f32 0.0, %v253
    %v255 = vpop.f32.mrb[0].mxu0
    %v256 = vpop.f32.mrb[0].mxu0
    %v257 = vpop.f32.mrb[0].mxu0
    %258 = vdwg.mxu0
    %259 = vst [vmem:[#allocation7] sm:$0xff] %v254
    %v260 = vld [vmem:[#allocation7] sm:$0xff]
    %v261 = vpack.c.bf16 %v260, %v260
    %s262 = scalar_lea.vmem [#allocation5], 128
    %v263 = vld [vmem:[%s262] sm:$0xf]
    %v264 = vld [vmem:[%s262 + $0x4] sm:$0xf]
    %v265 = vld [vmem:[%s262 + $0x8] sm:$0xf]
    %v266 = vld [vmem:[%s262 + $0xc] sm:$0xf]
    %v267 = vld [vmem:[%s262 + $0x10] sm:$0xf]
    %v268 = vld [vmem:[%s262 + $0x14] sm:$0xf]
    %v269 = vld [vmem:[%s262 + $0x18] sm:$0xf]
    %v270 = vld [vmem:[%s262 + $0x1c] sm:$0xf]
    %v271 = vld [vmem:[%s262 + $0x20] sm:$0xf]
    %v272 = vld [vmem:[%s262 + $0x24] sm:$0xf]
    %v273 = vld [vmem:[%s262 + $0x28] sm:$0xf]
    %v274 = vld [vmem:[%s262 + $0x2c] sm:$0xf]
    %v275 = vld [vmem:[%s262 + $0x30] sm:$0xf]
    %v276 = vld [vmem:[%s262 + $0x34] sm:$0xf]
    %v277 = vld [vmem:[%s262 + $0x38] sm:$0xf]
    %v278 = vld [vmem:[%s262 + $0x3c] sm:$0xf]
    %v295 = vunpack.c.l.b16 %v263
    %v296 = vunpack.c.l.b16 %v264
    %v297 = vunpack.c.l.b16 %v265
    %v298 = vunpack.c.l.b16 %v266
    %v299 = vunpack.c.l.b16 %v267
    %v300 = vunpack.c.l.b16 %v268
    %v301 = vunpack.c.l.b16 %v269
    %v302 = vunpack.c.l.b16 %v270
    %v303 = vunpack.c.l.b16 %v271
    %v304 = vunpack.c.l.b16 %v272
    %v305 = vunpack.c.l.b16 %v273
    %v306 = vunpack.c.l.b16 %v274
    %v307 = vunpack.c.l.b16 %v275
    %v308 = vunpack.c.l.b16 %v276
    %v309 = vunpack.c.l.b16 %v277
    %v310 = vunpack.c.l.b16 %v278
    %v311 = vpack.c.b16 %v296, %v295
    %v312 = vpack.c.b16 %v298, %v297
    %v313 = vpack.c.b16 %v300, %v299
    %v314 = vpack.c.b16 %v302, %v301
    %v315 = vpack.c.b16 %v304, %v303
    %v316 = vpack.c.b16 %v306, %v305
    %v317 = vpack.c.b16 %v308, %v307
    %v318 = vpack.c.b16 %v310, %v309
    %327 = vmatprep.subr.bf16.mxu0 0
    %328 = vmatpush1.bf16.msra.mxu0 %v311
    %329 = vmatprep.subr.bf16.mxu0 0
    %330 = vmatpush1.bf16.msra.mxu0 %v312
    %331 = vmatprep.subr.bf16.mxu0 0
    %332 = vmatpush1.bf16.msra.mxu0 %v313
    %333 = vmatprep.subr.bf16.mxu0 0
    %334 = vmatpush1.bf16.msra.mxu0 %v314
    %335 = vmatprep.subr.bf16.mxu0 0
    %336 = vmatpush1.bf16.msra.mxu0 %v315
    %337 = vmatprep.subr.bf16.mxu0 0
    %338 = vmatpush1.bf16.msra.mxu0 %v316
    %339 = vmatprep.subr.bf16.mxu0 0
    %340 = vmatpush1.bf16.msra.mxu0 %v317
    %341 = vmatprep.subr.bf16.mxu0 0
    %342 = vmatpush1.bf16.msra.mxu0 %v318
    %343 = vmatprep.subr.bf16.mxu0 0
    %344 = vmatpush1.bf16.msra.mxu0 0
    %345 = vmatprep.subr.bf16.mxu0 0
    %346 = vmatpush1.bf16.msra.mxu0 0
    %347 = vmatprep.subr.bf16.mxu0 0
    %348 = vmatpush1.bf16.msra.mxu0 0
    %349 = vmatprep.subr.bf16.mxu0 0
    %350 = vmatpush1.bf16.msra.mxu0 0
    %351 = vmatprep.subr.bf16.mxu0 0
    %352 = vmatpush1.bf16.msra.mxu0 0
    %353 = vmatprep.subr.bf16.mxu0 0
    %354 = vmatpush1.bf16.msra.mxu0 0
    %355 = vmatprep.subr.bf16.mxu0 0
    %356 = vmatpush1.bf16.msra.mxu0 0
    %357 = vmatprep.subr.bf16.mxu0 0
    %358 = vmatpush1.bf16.msra.mxu0 0
    %359 = vmatprep.mubr.bf16.mxu0 0
    %360 = vmatmul.mubr.bf16.gmra.mrb[0].mxu0 %v261
    %v361 = vpop.f32.mrb[0].mxu0
    %v362 = vadd.f32 0.0, %v361
    %v363 = vpop.f32.mrb[0].mxu0
    %v364 = vpop.f32.mrb[0].mxu0
    %v365 = vpop.f32.mrb[0].mxu0
    %366 = vdwg.mxu0
    %367 = vst [vmem:[#allocation7] sm:$0xff] %v362
    %v368 = vld [vmem:[#allocation7] sm:$0xff]
    %v369 = vpack.c.bf16 %v368, %v368
    %s370 = scalar_lea.vmem [#allocation5], 192
    %v371 = vld [vmem:[%s370] sm:$0xf]
    %v372 = vld [vmem:[%s370 + $0x4] sm:$0xf]
    %v373 = vld [vmem:[%s370 + $0x8] sm:$0xf]
    %v374 = vld [vmem:[%s370 + $0xc] sm:$0xf]
    %v375 = vld [vmem:[%s370 + $0x10] sm:$0xf]
    %v376 = vld [vmem:[%s370 + $0x14] sm:$0xf]
    %v377 = vld [vmem:[%s370 + $0x18] sm:$0xf]
    %v378 = vld [vmem:[%s370 + $0x1c] sm:$0xf]
    %v379 = vld [vmem:[%s370 + $0x20] sm:$0xf]
    %v380 = vld [vmem:[%s370 + $0x24] sm:$0xf]
    %v381 = vld [vmem:[%s370 + $0x28] sm:$0xf]
    %v382 = vld [vmem:[%s370 + $0x2c] sm:$0xf]
    %v383 = vld [vmem:[%s370 + $0x30] sm:$0xf]
    %v384 = vld [vmem:[%s370 + $0x34] sm:$0xf]
    %v385 = vld [vmem:[%s370 + $0x38] sm:$0xf]
    %v386 = vld [vmem:[%s370 + $0x3c] sm:$0xf]
    %v403 = vunpack.c.l.b16 %v371
    %v404 = vunpack.c.l.b16 %v372
    %v405 = vunpack.c.l.b16 %v373
    %v406 = vunpack.c.l.b16 %v374
    %v407 = vunpack.c.l.b16 %v375
    %v408 = vunpack.c.l.b16 %v376
    %v409 = vunpack.c.l.b16 %v377
    %v410 = vunpack.c.l.b16 %v378
    %v411 = vunpack.c.l.b16 %v379
    %v412 = vunpack.c.l.b16 %v380
    %v413 = vunpack.c.l.b16 %v381
    %v414 = vunpack.c.l.b16 %v382
    %v415 = vunpack.c.l.b16 %v383
    %v416 = vunpack.c.l.b16 %v384
    %v417 = vunpack.c.l.b16 %v385
    %v418 = vunpack.c.l.b16 %v386
    %v419 = vpack.c.b16 %v404, %v403
    %v420 = vpack.c.b16 %v406, %v405
    %v421 = vpack.c.b16 %v408, %v407
    %v422 = vpack.c.b16 %v410, %v409
    %v423 = vpack.c.b16 %v412, %v411
    %v424 = vpack.c.b16 %v414, %v413
    %v425 = vpack.c.b16 %v416, %v415
    %v426 = vpack.c.b16 %v418, %v417
    %435 = vmatprep.subr.bf16.mxu0 0
    %436 = vmatpush1.bf16.msra.mxu0 %v419
    %437 = vmatprep.subr.bf16.mxu0 0
    %438 = vmatpush1.bf16.msra.mxu0 %v420
    %439 = vmatprep.subr.bf16.mxu0 0
    %440 = vmatpush1.bf16.msra.mxu0 %v421
    %441 = vmatprep.subr.bf16.mxu0 0
    %442 = vmatpush1.bf16.msra.mxu0 %v422
    %443 = vmatprep.subr.bf16.mxu0 0
    %444 = vmatpush1.bf16.msra.mxu0 %v423
    %445 = vmatprep.subr.bf16.mxu0 0
    %446 = vmatpush1.bf16.msra.mxu0 %v424
    %447 = vmatprep.subr.bf16.mxu0 0
    %448 = vmatpush1.bf16.msra.mxu0 %v425
    %449 = vmatprep.subr.bf16.mxu0 0
    %450 = vmatpush1.bf16.msra.mxu0 %v426
    %451 = vmatprep.subr.bf16.mxu0 0
    %452 = vmatpush1.bf16.msra.mxu0 0
    %453 = vmatprep.subr.bf16.mxu0 0
    %454 = vmatpush1.bf16.msra.mxu0 0
    %455 = vmatprep.subr.bf16.mxu0 0
    %456 = vmatpush1.bf16.msra.mxu0 0
    %457 = vmatprep.subr.bf16.mxu0 0
    %458 = vmatpush1.bf16.msra.mxu0 0
    %459 = vmatprep.subr.bf16.mxu0 0
    %460 = vmatpush1.bf16.msra.mxu0 0
    %461 = vmatprep.subr.bf16.mxu0 0
    %462 = vmatpush1.bf16.msra.mxu0 0
    %463 = vmatprep.subr.bf16.mxu0 0
    %464 = vmatpush1.bf16.msra.mxu0 0
    %465 = vmatprep.subr.bf16.mxu0 0
    %466 = vmatpush1.bf16.msra.mxu0 0
    %467 = vmatprep.mubr.bf16.mxu0 0
    %468 = vmatmul.mubr.bf16.gmra.mrb[0].mxu0 %v369
    %v469 = vpop.f32.mrb[0].mxu0
    %v470 = vadd.f32 0.0, %v469
    %v471 = vpop.f32.mrb[0].mxu0
    %v472 = vpop.f32.mrb[0].mxu0
    %v473 = vpop.f32.mrb[0].mxu0
    %474 = vdwg.mxu0
    %475 = vst [vmem:[#allocation7] sm:$0xff] %v470
    %v476 = vld [vmem:[#allocation7] sm:$0xff]
    %v477 = vpack.c.bf16 %v476, %v476
    %s478 = scalar_lea.vmem [#allocation5], 256
    %v479 = vld [vmem:[%s478] sm:$0xf]
    %v480 = vld [vmem:[%s478 + $0x4] sm:$0xf]
    %v481 = vld [vmem:[%s478 + $0x8] sm:$0xf]
    %v482 = vld [vmem:[%s478 + $0xc] sm:$0xf]
    %v483 = vld [vmem:[%s478 + $0x10] sm:$0xf]
    %v484 = vld [vmem:[%s478 + $0x14] sm:$0xf]
    %v485 = vld [vmem:[%s478 + $0x18] sm:$0xf]
    %v486 = vld [vmem:[%s478 + $0x1c] sm:$0xf]
    %v487 = vld [vmem:[%s478 + $0x20] sm:$0xf]
    %v488 = vld [vmem:[%s478 + $0x24] sm:$0xf]
    %v489 = vld [vmem:[%s478 + $0x28] sm:$0xf]
    %v490 = vld [vmem:[%s478 + $0x2c] sm:$0xf]
    %v491 = vld [vmem:[%s478 + $0x30] sm:$0xf]
    %v492 = vld [vmem:[%s478 + $0x34] sm:$0xf]
    %v493 = vld [vmem:[%s478 + $0x38] sm:$0xf]
    %v494 = vld [vmem:[%s478 + $0x3c] sm:$0xf]
    %v511 = vunpack.c.l.b16 %v479
    %v512 = vunpack.c.l.b16 %v480
    %v513 = vunpack.c.l.b16 %v481
    %v514 = vunpack.c.l.b16 %v482
    %v515 = vunpack.c.l.b16 %v483
    %v516 = vunpack.c.l.b16 %v484
    %v517 = vunpack.c.l.b16 %v485
    %v518 = vunpack.c.l.b16 %v486
    %v519 = vunpack.c.l.b16 %v487
    %v520 = vunpack.c.l.b16 %v488
    %v521 = vunpack.c.l.b16 %v489
    %v522 = vunpack.c.l.b16 %v490
    %v523 = vunpack.c.l.b16 %v491
    %v524 = vunpack.c.l.b16 %v492
    %v525 = vunpack.c.l.b16 %v493
    %v526 = vunpack.c.l.b16 %v494
    %v527 = vpack.c.b16 %v512, %v511
    %v528 = vpack.c.b16 %v514, %v513
    %v529 = vpack.c.b16 %v516, %v515
    %v530 = vpack.c.b16 %v518, %v517
    %v531 = vpack.c.b16 %v520, %v519
    %v532 = vpack.c.b16 %v522, %v521
    %v533 = vpack.c.b16 %v524, %v523
    %v534 = vpack.c.b16 %v526, %v525
    %543 = vmatprep.subr.bf16.mxu0 0
    %544 = vmatpush1.bf16.msra.mxu0 %v527
    %545 = vmatprep.subr.bf16.mxu0 0
    %546 = vmatpush1.bf16.msra.mxu0 %v528
    %547 = vmatprep.subr.bf16.mxu0 0
    %548 = vmatpush1.bf16.msra.mxu0 %v529
    %549 = vmatprep.subr.bf16.mxu0 0
    %550 = vmatpush1.bf16.msra.mxu0 %v530
    %551 = vmatprep.subr.bf16.mxu0 0
    %552 = vmatpush1.bf16.msra.mxu0 %v531
    %553 = vmatprep.subr.bf16.mxu0 0
    %554 = vmatpush1.bf16.msra.mxu0 %v532
    %555 = vmatprep.subr.bf16.mxu0 0
    %556 = vmatpush1.bf16.msra.mxu0 %v533
    %557 = vmatprep.subr.bf16.mxu0 0
    %558 = vmatpush1.bf16.msra.mxu0 %v534
    %559 = vmatprep.subr.bf16.mxu0 0
    %560 = vmatpush1.bf16.msra.mxu0 0
    %561 = vmatprep.subr.bf16.mxu0 0
    %562 = vmatpush1.bf16.msra.mxu0 0
    %563 = vmatprep.subr.bf16.mxu0 0
    %564 = vmatpush1.bf16.msra.mxu0 0
    %565 = vmatprep.subr.bf16.mxu0 0
    %566 = vmatpush1.bf16.msra.mxu0 0
    %567 = vmatprep.subr.bf16.mxu0 0
    %568 = vmatpush1.bf16.msra.mxu0 0
    %569 = vmatprep.subr.bf16.mxu0 0
    %570 = vmatpush1.bf16.msra.mxu0 0
    %571 = vmatprep.subr.bf16.mxu0 0
    %572 = vmatpush1.bf16.msra.mxu0 0
    %573 = vmatprep.subr.bf16.mxu0 0
    %574 = vmatpush1.bf16.msra.mxu0 0
    %575 = vmatprep.mubr.bf16.mxu0 0
    %576 = vmatmul.mubr.bf16.gmra.mrb[0].mxu0 %v477
    %v577 = vpop.f32.mrb[0].mxu0
    %v578 = vadd.f32 0.0, %v577
    %v579 = vpop.f32.mrb[0].mxu0
    %v580 = vpop.f32.mrb[0].mxu0
    %v581 = vpop.f32.mrb[0].mxu0
    %582 = vdwg.mxu0
    %583 = vst [vmem:[#allocation7] sm:$0xff] %v578
    %v584 = vld [vmem:[#allocation7] sm:$0xff]
    %v585 = vpack.c.bf16 %v584, %v584
    %s586 = scalar_lea.vmem [#allocation5], 320
    %v587 = vld [vmem:[%s586] sm:$0xf]
    %v588 = vld [vmem:[%s586 + $0x4] sm:$0xf]
    %v589 = vld [vmem:[%s586 + $0x8] sm:$0xf]
    %v590 = vld [vmem:[%s586 + $0xc] sm:$0xf]
    %v591 = vld [vmem:[%s586 + $0x10] sm:$0xf]
    %v592 = vld [vmem:[%s586 + $0x14] sm:$0xf]
    %v593 = vld [vmem:[%s586 + $0x18] sm:$0xf]
    %v594 = vld [vmem:[%s586 + $0x1c] sm:$0xf]
    %v595 = vld [vmem:[%s586 + $0x20] sm:$0xf]
    %v596 = vld [vmem:[%s586 + $0x24] sm:$0xf]
    %v597 = vld [vmem:[%s586 + $0x28] sm:$0xf]
    %v598 = vld [vmem:[%s586 + $0x2c] sm:$0xf]
    %v599 = vld [vmem:[%s586 + $0x30] sm:$0xf]
    %v600 = vld [vmem:[%s586 + $0x34] sm:$0xf]
    %v601 = vld [vmem:[%s586 + $0x38] sm:$0xf]
    %v602 = vld [vmem:[%s586 + $0x3c] sm:$0xf]
    %v619 = vunpack.c.l.b16 %v587
    %v620 = vunpack.c.l.b16 %v588
    %v621 = vunpack.c.l.b16 %v589
    %v622 = vunpack.c.l.b16 %v590
    %v623 = vunpack.c.l.b16 %v591
    %v624 = vunpack.c.l.b16 %v592
    %v625 = vunpack.c.l.b16 %v593
    %v626 = vunpack.c.l.b16 %v594
    %v627 = vunpack.c.l.b16 %v595
    %v628 = vunpack.c.l.b16 %v596
    %v629 = vunpack.c.l.b16 %v597
    %v630 = vunpack.c.l.b16 %v598
    %v631 = vunpack.c.l.b16 %v599
    %v632 = vunpack.c.l.b16 %v600
    %v633 = vunpack.c.l.b16 %v601
    %v634 = vunpack.c.l.b16 %v602
    %v635 = vpack.c.b16 %v620, %v619
    %v636 = vpack.c.b16 %v622, %v621
    %v637 = vpack.c.b16 %v624, %v623
    %v638 = vpack.c.b16 %v626, %v625
    %v639 = vpack.c.b16 %v628, %v627
    %v640 = vpack.c.b16 %v630, %v629
    %v641 = vpack.c.b16 %v632, %v631
    %v642 = vpack.c.b16 %v634, %v633
    %651 = vmatprep.subr.bf16.mxu0 0
    %652 = vmatpush1.bf16.msra.mxu0 %v635
    %653 = vmatprep.subr.bf16.mxu0 0
    %654 = vmatpush1.bf16.msra.mxu0 %v636
    %655 = vmatprep.subr.bf16.mxu0 0
    %656 = vmatpush1.bf16.msra.mxu0 %v637
    %657 = vmatprep.subr.bf16.mxu0 0
    %658 = vmatpush1.bf16.msra.mxu0 %v638
    %659 = vmatprep.subr.bf16.mxu0 0
    %660 = vmatpush1.bf16.msra.mxu0 %v639
    %661 = vmatprep.subr.bf16.mxu0 0
    %662 = vmatpush1.bf16.msra.mxu0 %v640
    %663 = vmatprep.subr.bf16.mxu0 0
    %664 = vmatpush1.bf16.msra.mxu0 %v641
    %665 = vmatprep.subr.bf16.mxu0 0
    %666 = vmatpush1.bf16.msra.mxu0 %v642
    %667 = vmatprep.subr.bf16.mxu0 0
    %668 = vmatpush1.bf16.msra.mxu0 0
    %669 = vmatprep.subr.bf16.mxu0 0
    %670 = vmatpush1.bf16.msra.mxu0 0
    %671 = vmatprep.subr.bf16.mxu0 0
    %672 = vmatpush1.bf16.msra.mxu0 0
    %673 = vmatprep.subr.bf16.mxu0 0
    %674 = vmatpush1.bf16.msra.mxu0 0
    %675 = vmatprep.subr.bf16.mxu0 0
    %676 = vmatpush1.bf16.msra.mxu0 0
    %677 = vmatprep.subr.bf16.mxu0 0
    %678 = vmatpush1.bf16.msra.mxu0 0
    %679 = vmatprep.subr.bf16.mxu0 0
    %680 = vmatpush1.bf16.msra.mxu0 0
    %681 = vmatprep.subr.bf16.mxu0 0
    %682 = vmatpush1.bf16.msra.mxu0 0
    %683 = vmatprep.mubr.bf16.mxu0 0
    %684 = vmatmul.mubr.bf16.gmra.mrb[0].mxu0 %v585
    %v685 = vpop.f32.mrb[0].mxu0
    %v686 = vadd.f32 0.0, %v685
    %v687 = vpop.f32.mrb[0].mxu0
    %v688 = vpop.f32.mrb[0].mxu0
    %v689 = vpop.f32.mrb[0].mxu0
    %690 = vdwg.mxu0
    %691 = vst [vmem:[#allocation7] sm:$0xff] %v686
    %v692 = vld [vmem:[#allocation7] sm:$0xff]
    %v693 = vpack.c.bf16 %v692, %v692
    %s694 = scalar_lea.vmem [#allocation5], 384
    %v695 = vld [vmem:[%s694] sm:$0xf]
    %v696 = vld [vmem:[%s694 + $0x4] sm:$0xf]
    %v697 = vld [vmem:[%s694 + $0x8] sm:$0xf]
    %v698 = vld [vmem:[%s694 + $0xc] sm:$0xf]
    %v699 = vld [vmem:[%s694 + $0x10] sm:$0xf]
    %v700 = vld [vmem:[%s694 + $0x14] sm:$0xf]
    %v701 = vld [vmem:[%s694 + $0x18] sm:$0xf]
    %v702 = vld [vmem:[%s694 + $0x1c] sm:$0xf]
    %v703 = vld [vmem:[%s694 + $0x20] sm:$0xf]
    %v704 = vld [vmem:[%s694 + $0x24] sm:$0xf]
    %v705 = vld [vmem:[%s694 + $0x28] sm:$0xf]
    %v706 = vld [vmem:[%s694 + $0x2c] sm:$0xf]
    %v707 = vld [vmem:[%s694 + $0x30] sm:$0xf]
    %v708 = vld [vmem:[%s694 + $0x34] sm:$0xf]
    %v709 = vld [vmem:[%s694 + $0x38] sm:$0xf]
    %v710 = vld [vmem:[%s694 + $0x3c] sm:$0xf]
    %v727 = vunpack.c.l.b16 %v695
    %v728 = vunpack.c.l.b16 %v696
    %v729 = vunpack.c.l.b16 %v697
    %v730 = vunpack.c.l.b16 %v698
    %v731 = vunpack.c.l.b16 %v699
    %v732 = vunpack.c.l.b16 %v700
    %v733 = vunpack.c.l.b16 %v701
    %v734 = vunpack.c.l.b16 %v702
    %v735 = vunpack.c.l.b16 %v703
    %v736 = vunpack.c.l.b16 %v704
    %v737 = vunpack.c.l.b16 %v705
    %v738 = vunpack.c.l.b16 %v706
    %v739 = vunpack.c.l.b16 %v707
    %v740 = vunpack.c.l.b16 %v708
    %v741 = vunpack.c.l.b16 %v709
    %v742 = vunpack.c.l.b16 %v710
    %v743 = vpack.c.b16 %v728, %v727
    %v744 = vpack.c.b16 %v730, %v729
    %v745 = vpack.c.b16 %v732, %v731
    %v746 = vpack.c.b16 %v734, %v733
    %v747 = vpack.c.b16 %v736, %v735
    %v748 = vpack.c.b16 %v738, %v737
    %v749 = vpack.c.b16 %v740, %v739
    %v750 = vpack.c.b16 %v742, %v741
    %759 = vmatprep.subr.bf16.mxu0 0
    %760 = vmatpush1.bf16.msra.mxu0 %v743
    %761 = vmatprep.subr.bf16.mxu0 0
    %762 = vmatpush1.bf16.msra.mxu0 %v744
    %763 = vmatprep.subr.bf16.mxu0 0
    %764 = vmatpush1.bf16.msra.mxu0 %v745
    %765 = vmatprep.subr.bf16.mxu0 0
    %766 = vmatpush1.bf16.msra.mxu0 %v746
    %767 = vmatprep.subr.bf16.mxu0 0
    %768 = vmatpush1.bf16.msra.mxu0 %v747
    %769 = vmatprep.subr.bf16.mxu0 0
    %770 = vmatpush1.bf16.msra.mxu0 %v748
    %771 = vmatprep.subr.bf16.mxu0 0
    %772 = vmatpush1.bf16.msra.mxu0 %v749
    %773 = vmatprep.subr.bf16.mxu0 0
    %774 = vmatpush1.bf16.msra.mxu0 %v750
    %775 = vmatprep.subr.bf16.mxu0 0
    %776 = vmatpush1.bf16.msra.mxu0 0
    %777 = vmatprep.subr.bf16.mxu0 0
    %778 = vmatpush1.bf16.msra.mxu0 0
    %779 = vmatprep.subr.bf16.mxu0 0
    %780 = vmatpush1.bf16.msra.mxu0 0
    %781 = vmatprep.subr.bf16.mxu0 0
    %782 = vmatpush1.bf16.msra.mxu0 0
    %783 = vmatprep.subr.bf16.mxu0 0
    %784 = vmatpush1.bf16.msra.mxu0 0
    %785 = vmatprep.subr.bf16.mxu0 0
    %786 = vmatpush1.bf16.msra.mxu0 0
    %787 = vmatprep.subr.bf16.mxu0 0
    %788 = vmatpush1.bf16.msra.mxu0 0
    %789 = vmatprep.subr.bf16.mxu0 0
    %790 = vmatpush1.bf16.msra.mxu0 0
    %791 = vmatprep.mubr.bf16.mxu0 0
    %792 = vmatmul.mubr.bf16.gmra.mrb[0].mxu0 %v693
    %v793 = vpop.f32.mrb[0].mxu0
    %v794 = vadd.f32 0.0, %v793
    %v795 = vpop.f32.mrb[0].mxu0
    %v796 = vpop.f32.mrb[0].mxu0
    %v797 = vpop.f32.mrb[0].mxu0
    %798 = vdwg.mxu0
    %799 = vst [vmem:[#allocation7] sm:$0xff] %v794
    %v800 = vld [vmem:[#allocation7] sm:$0xff]
    %v801 = vpack.c.bf16 %v800, %v800
    %s802 = scalar_lea.vmem [#allocation5], 448
    %v803 = vld [vmem:[%s802] sm:$0xf]
    %v804 = vld [vmem:[%s802 + $0x4] sm:$0xf]
    %v805 = vld [vmem:[%s802 + $0x8] sm:$0xf]
    %v806 = vld [vmem:[%s802 + $0xc] sm:$0xf]
    %v807 = vld [vmem:[%s802 + $0x10] sm:$0xf]
    %v808 = vld [vmem:[%s802 + $0x14] sm:$0xf]
    %v809 = vld [vmem:[%s802 + $0x18] sm:$0xf]
    %v810 = vld [vmem:[%s802 + $0x1c] sm:$0xf]
    %v811 = vld [vmem:[%s802 + $0x20] sm:$0xf]
    %v812 = vld [vmem:[%s802 + $0x24] sm:$0xf]
    %v813 = vld [vmem:[%s802 + $0x28] sm:$0xf]
    %v814 = vld [vmem:[%s802 + $0x2c] sm:$0xf]
    %v815 = vld [vmem:[%s802 + $0x30] sm:$0xf]
    %v816 = vld [vmem:[%s802 + $0x34] sm:$0xf]
    %v817 = vld [vmem:[%s802 + $0x38] sm:$0xf]
    %v818 = vld [vmem:[%s802 + $0x3c] sm:$0xf]
    %v835 = vunpack.c.l.b16 %v803
    %v836 = vunpack.c.l.b16 %v804
    %v837 = vunpack.c.l.b16 %v805
    %v838 = vunpack.c.l.b16 %v806
    %v839 = vunpack.c.l.b16 %v807
    %v840 = vunpack.c.l.b16 %v808
    %v841 = vunpack.c.l.b16 %v809
    %v842 = vunpack.c.l.b16 %v810
    %v843 = vunpack.c.l.b16 %v811
    %v844 = vunpack.c.l.b16 %v812
    %v845 = vunpack.c.l.b16 %v813
    %v846 = vunpack.c.l.b16 %v814
    %v847 = vunpack.c.l.b16 %v815
    %v848 = vunpack.c.l.b16 %v816
    %v849 = vunpack.c.l.b16 %v817
    %v850 = vunpack.c.l.b16 %v818
    %v851 = vpack.c.b16 %v836, %v835
    %v852 = vpack.c.b16 %v838, %v837
    %v853 = vpack.c.b16 %v840, %v839
    %v854 = vpack.c.b16 %v842, %v841
    %v855 = vpack.c.b16 %v844, %v843
    %v856 = vpack.c.b16 %v846, %v845
    %v857 = vpack.c.b16 %v848, %v847
    %v858 = vpack.c.b16 %v850, %v849
    %867 = vmatprep.subr.bf16.mxu0 0
    %868 = vmatpush1.bf16.msra.mxu0 %v851
    %869 = vmatprep.subr.bf16.mxu0 0
    %870 = vmatpush1.bf16.msra.mxu0 %v852
    %871 = vmatprep.subr.bf16.mxu0 0
    %872 = vmatpush1.bf16.msra.mxu0 %v853
    %873 = vmatprep.subr.bf16.mxu0 0
    %874 = vmatpush1.bf16.msra.mxu0 %v854
    %875 = vmatprep.subr.bf16.mxu0 0
    %876 = vmatpush1.bf16.msra.mxu0 %v855
    %877 = vmatprep.subr.bf16.mxu0 0
    %878 = vmatpush1.bf16.msra.mxu0 %v856
    %879 = vmatprep.subr.bf16.mxu0 0
    %880 = vmatpush1.bf16.msra.mxu0 %v857
    %881 = vmatprep.subr.bf16.mxu0 0
    %882 = vmatpush1.bf16.msra.mxu0 %v858
    %883 = vmatprep.subr.bf16.mxu0 0
    %884 = vmatpush1.bf16.msra.mxu0 0
    %885 = vmatprep.subr.bf16.mxu0 0
    %886 = vmatpush1.bf16.msra.mxu0 0
    %887 = vmatprep.subr.bf16.mxu0 0
    %888 = vmatpush1.bf16.msra.mxu0 0
    %889 = vmatprep.subr.bf16.mxu0 0
    %890 = vmatpush1.bf16.msra.mxu0 0
    %891 = vmatprep.subr.bf16.mxu0 0
    %892 = vmatpush1.bf16.msra.mxu0 0
    %893 = vmatprep.subr.bf16.mxu0 0
    %894 = vmatpush1.bf16.msra.mxu0 0
    %895 = vmatprep.subr.bf16.mxu0 0
    %896 = vmatpush1.bf16.msra.mxu0 0
    %897 = vmatprep.subr.bf16.mxu0 0
    %898 = vmatpush1.bf16.msra.mxu0 0
    %899 = vmatprep.mubr.bf16.mxu0 0
    %900 = vmatmul.mubr.bf16.gmra.mrb[0].mxu0 %v801
    %v901 = vpop.f32.mrb[0].mxu0
    %v902 = vadd.f32 0.0, %v901
    %v903 = vpop.f32.mrb[0].mxu0
    %v904 = vpop.f32.mrb[0].mxu0
    %v905 = vpop.f32.mrb[0].mxu0
    %906 = vdwg.mxu0
    %907 = vst [vmem:[#allocation7] sm:$0xff] %v902
    %v908 = vld [vmem:[#allocation7] sm:$0xff]
    %v909 = vpack.c.bf16 %v908, %v908
    %s910 = scalar_lea.vmem [#allocation5], 512
    %v911 = vld [vmem:[%s910] sm:$0xf]
    %v912 = vld [vmem:[%s910 + $0x4] sm:$0xf]
    %v913 = vld [vmem:[%s910 + $0x8] sm:$0xf]
    %v914 = vld [vmem:[%s910 + $0xc] sm:$0xf]
    %v915 = vld [vmem:[%s910 + $0x10] sm:$0xf]
    %v916 = vld [vmem:[%s910 + $0x14] sm:$0xf]
    %v917 = vld [vmem:[%s910 + $0x18] sm:$0xf]
    %v918 = vld [vmem:[%s910 + $0x1c] sm:$0xf]
    %v919 = vld [vmem:[%s910 + $0x20] sm:$0xf]
    %v920 = vld [vmem:[%s910 + $0x24] sm:$0xf]
    %v921 = vld [vmem:[%s910 + $0x28] sm:$0xf]
    %v922 = vld [vmem:[%s910 + $0x2c] sm:$0xf]
    %v923 = vld [vmem:[%s910 + $0x30] sm:$0xf]
    %v924 = vld [vmem:[%s910 + $0x34] sm:$0xf]
    %v925 = vld [vmem:[%s910 + $0x38] sm:$0xf]
    %v926 = vld [vmem:[%s910 + $0x3c] sm:$0xf]
    %v943 = vunpack.c.l.b16 %v911
    %v944 = vunpack.c.l.b16 %v912
    %v945 = vunpack.c.l.b16 %v913
    %v946 = vunpack.c.l.b16 %v914
    %v947 = vunpack.c.l.b16 %v915
    %v948 = vunpack.c.l.b16 %v916
    %v949 = vunpack.c.l.b16 %v917
    %v950 = vunpack.c.l.b16 %v918
    %v951 = vunpack.c.l.b16 %v919
    %v952 = vunpack.c.l.b16 %v920
    %v953 = vunpack.c.l.b16 %v921
    %v954 = vunpack.c.l.b16 %v922
    %v955 = vunpack.c.l.b16 %v923
    %v956 = vunpack.c.l.b16 %v924
    %v957 = vunpack.c.l.b16 %v925
    %v958 = vunpack.c.l.b16 %v926
    %v959 = vpack.c.b16 %v944, %v943
    %v960 = vpack.c.b16 %v946, %v945
    %v961 = vpack.c.b16 %v948, %v947
    %v962 = vpack.c.b16 %v950, %v949
    %v963 = vpack.c.b16 %v952, %v951
    %v964 = vpack.c.b16 %v954, %v953
    %v965 = vpack.c.b16 %v956, %v955
    %v966 = vpack.c.b16 %v958, %v957
    %975 = vmatprep.subr.bf16.mxu0 0
    %976 = vmatpush1.bf16.msra.mxu0 %v959
    %977 = vmatprep.subr.bf16.mxu0 0
    %978 = vmatpush1.bf16.msra.mxu0 %v960
    %979 = vmatprep.subr.bf16.mxu0 0
    %980 = vmatpush1.bf16.msra.mxu0 %v961
    %981 = vmatprep.subr.bf16.mxu0 0
    %982 = vmatpush1.bf16.msra.mxu0 %v962
    %983 = vmatprep.subr.bf16.mxu0 0
    %984 = vmatpush1.bf16.msra.mxu0 %v963
    %985 = vmatprep.subr.bf16.mxu0 0
    %986 = vmatpush1.bf16.msra.mxu0 %v964
    %987 = vmatprep.subr.bf16.mxu0 0
    %988 = vmatpush1.bf16.msra.mxu0 %v965
    %989 = vmatprep.subr.bf16.mxu0 0
    %990 = vmatpush1.bf16.msra.mxu0 %v966
    %991 = vmatprep.subr.bf16.mxu0 0
    %992 = vmatpush1.bf16.msra.mxu0 0
    %993 = vmatprep.subr.bf16.mxu0 0
    %994 = vmatpush1.bf16.msra.mxu0 0
    %995 = vmatprep.subr.bf16.mxu0 0
    %996 = vmatpush1.bf16.msra.mxu0 0
    %997 = vmatprep.subr.bf16.mxu0 0
    %998 = vmatpush1.bf16.msra.mxu0 0
    %999 = vmatprep.subr.bf16.mxu0 0
    %1000 = vmatpush1.bf16.msra.mxu0 0
    %1001 = vmatprep.subr.bf16.mxu0 0
    %1002 = vmatpush1.bf16.msra.mxu0 0
    %1003 = vmatprep.subr.bf16.mxu0 0
    %1004 = vmatpush1.bf16.msra.mxu0 0
    %1005 = vmatprep.subr.bf16.mxu0 0
    %1006 = vmatpush1.bf16.msra.mxu0 0
    %1007 = vmatprep.mubr.bf16.mxu0 0
    %1008 = vmatmul.mubr.bf16.gmra.mrb[0].mxu0 %v909
    %v1009 = vpop.f32.mrb[0].mxu0
    %v1010 = vadd.f32 0.0, %v1009
    %v1011 = vpop.f32.mrb[0].mxu0
    %v1012 = vpop.f32.mrb[0].mxu0
    %v1013 = vpop.f32.mrb[0].mxu0
    %1014 = vdwg.mxu0
    %1015 = vst [vmem:[#allocation7] sm:$0xff] %v1010
    %v1016 = vld [vmem:[#allocation7] sm:$0xff]
    %v1017 = vpack.c.bf16 %v1016, %v1016
    %s1018 = scalar_lea.vmem [#allocation5], 576
    %v1019 = vld [vmem:[%s1018] sm:$0xf]
    %v1020 = vld [vmem:[%s1018 + $0x4] sm:$0xf]
    %v1021 = vld [vmem:[%s1018 + $0x8] sm:$0xf]
    %v1022 = vld [vmem:[%s1018 + $0xc] sm:$0xf]
    %v1023 = vld [vmem:[%s1018 + $0x10] sm:$0xf]
    %v1024 = vld [vmem:[%s1018 + $0x14] sm:$0xf]
    %v1025 = vld [vmem:[%s1018 + $0x18] sm:$0xf]
    %v1026 = vld [vmem:[%s1018 + $0x1c] sm:$0xf]
    %v1027 = vld [vmem:[%s1018 + $0x20] sm:$0xf]
    %v1028 = vld [vmem:[%s1018 + $0x24] sm:$0xf]
    %v1029 = vld [vmem:[%s1018 + $0x28] sm:$0xf]
    %v1030 = vld [vmem:[%s1018 + $0x2c] sm:$0xf]
    %v1031 = vld [vmem:[%s1018 + $0x30] sm:$0xf]
    %v1032 = vld [vmem:[%s1018 + $0x34] sm:$0xf]
    %v1033 = vld [vmem:[%s1018 + $0x38] sm:$0xf]
    %v1034 = vld [vmem:[%s1018 + $0x3c] sm:$0xf]
    %v1051 = vunpack.c.l.b16 %v1019
    %v1052 = vunpack.c.l.b16 %v1020
    %v1053 = vunpack.c.l.b16 %v1021
    %v1054 = vunpack.c.l.b16 %v1022
    %v1055 = vunpack.c.l.b16 %v1023
    %v1056 = vunpack.c.l.b16 %v1024
    %v1057 = vunpack.c.l.b16 %v1025
    %v1058 = vunpack.c.l.b16 %v1026
    %v1059 = vunpack.c.l.b16 %v1027
    %v1060 = vunpack.c.l.b16 %v1028
    %v1061 = vunpack.c.l.b16 %v1029
    %v1062 = vunpack.c.l.b16 %v1030
    %v1063 = vunpack.c.l.b16 %v1031
    %v1064 = vunpack.c.l.b16 %v1032
    %v1065 = vunpack.c.l.b16 %v1033
    %v1066 = vunpack.c.l.b16 %v1034
    %v1067 = vpack.c.b16 %v1052, %v1051
    %v1068 = vpack.c.b16 %v1054, %v1053
    %v1069 = vpack.c.b16 %v1056, %v1055
    %v1070 = vpack.c.b16 %v1058, %v1057
    %v1071 = vpack.c.b16 %v1060, %v1059
    %v1072 = vpack.c.b16 %v1062, %v1061
    %v1073 = vpack.c.b16 %v1064, %v1063
    %v1074 = vpack.c.b16 %v1066, %v1065
    %1083 = vmatprep.subr.bf16.mxu0 0
    %1084 = vmatpush1.bf16.msra.mxu0 %v1067
    %1085 = vmatprep.subr.bf16.mxu0 0
    %1086 = vmatpush1.bf16.msra.mxu0 %v1068
    %1087 = vmatprep.subr.bf16.mxu0 0
    %1088 = vmatpush1.bf16.msra.mxu0 %v1069
    %1089 = vmatprep.subr.bf16.mxu0 0
    %1090 = vmatpush1.bf16.msra.mxu0 %v1070
    %1091 = vmatprep.subr.bf16.mxu0 0
    %1092 = vmatpush1.bf16.msra.mxu0 %v1071
    %1093 = vmatprep.subr.bf16.mxu0 0
    %1094 = vmatpush1.bf16.msra.mxu0 %v1072
    %1095 = vmatprep.subr.bf16.mxu0 0
    %1096 = vmatpush1.bf16.msra.mxu0 %v1073
    %1097 = vmatprep.subr.bf16.mxu0 0
    %1098 = vmatpush1.bf16.msra.mxu0 %v1074
    %1099 = vmatprep.subr.bf16.mxu0 0
    %1100 = vmatpush1.bf16.msra.mxu0 0
    %1101 = vmatprep.subr.bf16.mxu0 0
    %1102 = vmatpush1.bf16.msra.mxu0 0
    %1103 = vmatprep.subr.bf16.mxu0 0
    %1104 = vmatpush1.bf16.msra.mxu0 0
    %1105 = vmatprep.subr.bf16.mxu0 0
    %1106 = vmatpush1.bf16.msra.mxu0 0
    %1107 = vmatprep.subr.bf16.mxu0 0
    %1108 = vmatpush1.bf16.msra.mxu0 0
    %1109 = vmatprep.subr.bf16.mxu0 0
    %1110 = vmatpush1.bf16.msra.mxu0 0
    %1111 = vmatprep.subr.bf16.mxu0 0
    %1112 = vmatpush1.bf16.msra.mxu0 0
    %1113 = vmatprep.subr.bf16.mxu0 0
    %1114 = vmatpush1.bf16.msra.mxu0 0
    %1115 = vmatprep.mubr.bf16.mxu0 0
    %1116 = vmatmul.mubr.bf16.gmra.mrb[0].mxu0 %v1017
    %v1117 = vpop.f32.mrb[0].mxu0
    %v1118 = vadd.f32 0.0, %v1117
    %v1119 = vpop.f32.mrb[0].mxu0
    %v1120 = vpop.f32.mrb[0].mxu0
    %v1121 = vpop.f32.mrb[0].mxu0
    %1122 = vdwg.mxu0
    %1123 = vst [vmem:[#allocation7] sm:$0xff] %v1118
    %v1124 = vld [vmem:[#allocation7] sm:$0xff]
    %v1125 = vpack.c.bf16 %v1124, %v1124
    %s1126 = scalar_lea.vmem [#allocation5], 640
    %v1127 = vld [vmem:[%s1126] sm:$0xf]
    %v1128 = vld [vmem:[%s1126 + $0x4] sm:$0xf]
    %v1129 = vld [vmem:[%s1126 + $0x8] sm:$0xf]
    %v1130 = vld [vmem:[%s1126 + $0xc] sm:$0xf]
    %v1131 = vld [vmem:[%s1126 + $0x10] sm:$0xf]
    %v1132 = vld [vmem:[%s1126 + $0x14] sm:$0xf]
    %v1133 = vld [vmem:[%s1126 + $0x18] sm:$0xf]
    %v1134 = vld [vmem:[%s1126 + $0x1c] sm:$0xf]
    %v1135 = vld [vmem:[%s1126 + $0x20] sm:$0xf]
    %v1136 = vld [vmem:[%s1126 + $0x24] sm:$0xf]
    %v1137 = vld [vmem:[%s1126 + $0x28] sm:$0xf]
    %v1138 = vld [vmem:[%s1126 + $0x2c] sm:$0xf]
    %v1139 = vld [vmem:[%s1126 + $0x30] sm:$0xf]
    %v1140 = vld [vmem:[%s1126 + $0x34] sm:$0xf]
    %v1141 = vld [vmem:[%s1126 + $0x38] sm:$0xf]
    %v1142 = vld [vmem:[%s1126 + $0x3c] sm:$0xf]
    %v1159 = vunpack.c.l.b16 %v1127
    %v1160 = vunpack.c.l.b16 %v1128
    %v1161 = vunpack.c.l.b16 %v1129
    %v1162 = vunpack.c.l.b16 %v1130
    %v1163 = vunpack.c.l.b16 %v1131
    %v1164 = vunpack.c.l.b16 %v1132
    %v1165 = vunpack.c.l.b16 %v1133
    %v1166 = vunpack.c.l.b16 %v1134
    %v1167 = vunpack.c.l.b16 %v1135
    %v1168 = vunpack.c.l.b16 %v1136
    %v1169 = vunpack.c.l.b16 %v1137
    %v1170 = vunpack.c.l.b16 %v1138
    %v1171 = vunpack.c.l.b16 %v1139
    %v1172 = vunpack.c.l.b16 %v1140
    %v1173 = vunpack.c.l.b16 %v1141
    %v1174 = vunpack.c.l.b16 %v1142
    %v1175 = vpack.c.b16 %v1160, %v1159
    %v1176 = vpack.c.b16 %v1162, %v1161
    %v1177 = vpack.c.b16 %v1164, %v1163
    %v1178 = vpack.c.b16 %v1166, %v1165
    %v1179 = vpack.c.b16 %v1168, %v1167
    %v1180 = vpack.c.b16 %v1170, %v1169
    %v1181 = vpack.c.b16 %v1172, %v1171
    %v1182 = vpack.c.b16 %v1174, %v1173
    %1191 = vmatprep.subr.bf16.mxu0 0
    %1192 = vmatpush1.bf16.msra.mxu0 %v1175
    %1193 = vmatprep.subr.bf16.mxu0 0
    %1194 = vmatpush1.bf16.msra.mxu0 %v1176
    %1195 = vmatprep.subr.bf16.mxu0 0
    %1196 = vmatpush1.bf16.msra.mxu0 %v1177
    %1197 = vmatprep.subr.bf16.mxu0 0
    %1198 = vmatpush1.bf16.msra.mxu0 %v1178
    %1199 = vmatprep.subr.bf16.mxu0 0
    %1200 = vmatpush1.bf16.msra.mxu0 %v1179
    %1201 = vmatprep.subr.bf16.mxu0 0
    %1202 = vmatpush1.bf16.msra.mxu0 %v1180
    %1203 = vmatprep.subr.bf16.mxu0 0
    %1204 = vmatpush1.bf16.msra.mxu0 %v1181
    %1205 = vmatprep.subr.bf16.mxu0 0
    %1206 = vmatpush1.bf16.msra.mxu0 %v1182
    %1207 = vmatprep.subr.bf16.mxu0 0
    %1208 = vmatpush1.bf16.msra.mxu0 0
    %1209 = vmatprep.subr.bf16.mxu0 0
    %1210 = vmatpush1.bf16.msra.mxu0 0
    %1211 = vmatprep.subr.bf16.mxu0 0
    %1212 = vmatpush1.bf16.msra.mxu0 0
    %1213 = vmatprep.subr.bf16.mxu0 0
    %1214 = vmatpush1.bf16.msra.mxu0 0
    %1215 = vmatprep.subr.bf16.mxu0 0
    %1216 = vmatpush1.bf16.msra.mxu0 0
    %1217 = vmatprep.subr.bf16.mxu0 0
    %1218 = vmatpush1.bf16.msra.mxu0 0
    %1219 = vmatprep.subr.bf16.mxu0 0
    %1220 = vmatpush1.bf16.msra.mxu0 0
    %1221 = vmatprep.subr.bf16.mxu0 0
    %1222 = vmatpush1.bf16.msra.mxu0 0
    %1223 = vmatprep.mubr.bf16.mxu0 0
    %1224 = vmatmul.mubr.bf16.gmra.mrb[0].mxu0 %v1125
    %v1225 = vpop.f32.mrb[0].mxu0
    %v1226 = vadd.f32 0.0, %v1225
    %v1227 = vpop.f32.mrb[0].mxu0
    %v1228 = vpop.f32.mrb[0].mxu0
    %v1229 = vpop.f32.mrb[0].mxu0
    %1230 = vdwg.mxu0
    %1231 = vst [vmem:[#allocation7] sm:$0xff] %v1226
    %v1232 = vld [vmem:[#allocation7] sm:$0xff]
    %v1233 = vpack.c.bf16 %v1232, %v1232
    %s1234 = scalar_lea.vmem [#allocation5], 704
    %v1235 = vld [vmem:[%s1234] sm:$0xf]
    %v1236 = vld [vmem:[%s1234 + $0x4] sm:$0xf]
    %v1237 = vld [vmem:[%s1234 + $0x8] sm:$0xf]
    %v1238 = vld [vmem:[%s1234 + $0xc] sm:$0xf]
    %v1239 = vld [vmem:[%s1234 + $0x10] sm:$0xf]
    %v1240 = vld [vmem:[%s1234 + $0x14] sm:$0xf]
    %v1241 = vld [vmem:[%s1234 + $0x18] sm:$0xf]
    %v1242 = vld [vmem:[%s1234 + $0x1c] sm:$0xf]
    %v1243 = vld [vmem:[%s1234 + $0x20] sm:$0xf]
    %v1244 = vld [vmem:[%s1234 + $0x24] sm:$0xf]
    %v1245 = vld [vmem:[%s1234 + $0x28] sm:$0xf]
    %v1246 = vld [vmem:[%s1234 + $0x2c] sm:$0xf]
    %v1247 = vld [vmem:[%s1234 + $0x30] sm:$0xf]
    %v1248 = vld [vmem:[%s1234 + $0x34] sm:$0xf]
    %v1249 = vld [vmem:[%s1234 + $0x38] sm:$0xf]
    %v1250 = vld [vmem:[%s1234 + $0x3c] sm:$0xf]
    %v1267 = vunpack.c.l.b16 %v1235
    %v1268 = vunpack.c.l.b16 %v1236
    %v1269 = vunpack.c.l.b16 %v1237
    %v1270 = vunpack.c.l.b16 %v1238
    %v1271 = vunpack.c.l.b16 %v1239
    %v1272 = vunpack.c.l.b16 %v1240
    %v1273 = vunpack.c.l.b16 %v1241
    %v1274 = vunpack.c.l.b16 %v1242
    %v1275 = vunpack.c.l.b16 %v1243
    %v1276 = vunpack.c.l.b16 %v1244
    %v1277 = vunpack.c.l.b16 %v1245
    %v1278 = vunpack.c.l.b16 %v1246
    %v1279 = vunpack.c.l.b16 %v1247
    %v1280 = vunpack.c.l.b16 %v1248
    %v1281 = vunpack.c.l.b16 %v1249
    %v1282 = vunpack.c.l.b16 %v1250
    %v1283 = vpack.c.b16 %v1268, %v1267
    %v1284 = vpack.c.b16 %v1270, %v1269
    %v1285 = vpack.c.b16 %v1272, %v1271
    %v1286 = vpack.c.b16 %v1274, %v1273
    %v1287 = vpack.c.b16 %v1276, %v1275
    %v1288 = vpack.c.b16 %v1278, %v1277
    %v1289 = vpack.c.b16 %v1280, %v1279
    %v1290 = vpack.c.b16 %v1282, %v1281
    %1299 = vmatprep.subr.bf16.mxu0 0
    %1300 = vmatpush1.bf16.msra.mxu0 %v1283
    %1301 = vmatprep.subr.bf16.mxu0 0
    %1302 = vmatpush1.bf16.msra.mxu0 %v1284
    %1303 = vmatprep.subr.bf16.mxu0 0
    %1304 = vmatpush1.bf16.msra.mxu0 %v1285
    %1305 = vmatprep.subr.bf16.mxu0 0
    %1306 = vmatpush1.bf16.msra.mxu0 %v1286
    %1307 = vmatprep.subr.bf16.mxu0 0
    %1308 = vmatpush1.bf16.msra.mxu0 %v1287
    %1309 = vmatprep.subr.bf16.mxu0 0
    %1310 = vmatpush1.bf16.msra.mxu0 %v1288
    %1311 = vmatprep.subr.bf16.mxu0 0
    %1312 = vmatpush1.bf16.msra.mxu0 %v1289
    %1313 = vmatprep.subr.bf16.mxu0 0
    %1314 = vmatpush1.bf16.msra.mxu0 %v1290
    %1315 = vmatprep.subr.bf16.mxu0 0
    %1316 = vmatpush1.bf16.msra.mxu0 0
    %1317 = vmatprep.subr.bf16.mxu0 0
    %1318 = vmatpush1.bf16.msra.mxu0 0
    %1319 = vmatprep.subr.bf16.mxu0 0
    %1320 = vmatpush1.bf16.msra.mxu0 0
    %1321 = vmatprep.subr.bf16.mxu0 0
    %1322 = vmatpush1.bf16.msra.mxu0 0
    %1323 = vmatprep.subr.bf16.mxu0 0
    %1324 = vmatpush1.bf16.msra.mxu0 0
    %1325 = vmatprep.subr.bf16.mxu0 0
    %1326 = vmatpush1.bf16.msra.mxu0 0
    %1327 = vmatprep.subr.bf16.mxu0 0
    %1328 = vmatpush1.bf16.msra.mxu0 0
    %1329 = vmatprep.subr.bf16.mxu0 0
    %1330 = vmatpush1.bf16.msra.mxu0 0
    %1331 = vmatprep.mubr.bf16.mxu0 0
    %1332 = vmatmul.mubr.bf16.gmra.mrb[0].mxu0 %v1233
    %v1333 = vpop.f32.mrb[0].mxu0
    %v1334 = vadd.f32 0.0, %v1333
    %v1335 = vpop.f32.mrb[0].mxu0
    %v1336 = vpop.f32.mrb[0].mxu0
    %v1337 = vpop.f32.mrb[0].mxu0
    %1338 = vdwg.mxu0
    %1339 = vst [vmem:[#allocation7] sm:$0xff] %v1334
    %v1340 = vld [vmem:[#allocation7] sm:$0xff]
    %v1341 = vpack.c.bf16 %v1340, %v1340
    %s1342 = scalar_lea.vmem [#allocation5], 768
    %v1343 = vld [vmem:[%s1342] sm:$0xf]
    %v1344 = vld [vmem:[%s1342 + $0x4] sm:$0xf]
    %v1345 = vld [vmem:[%s1342 + $0x8] sm:$0xf]
    %v1346 = vld [vmem:[%s1342 + $0xc] sm:$0xf]
    %v1347 = vld [vmem:[%s1342 + $0x10] sm:$0xf]
    %v1348 = vld [vmem:[%s1342 + $0x14] sm:$0xf]
    %v1349 = vld [vmem:[%s1342 + $0x18] sm:$0xf]
    %v1350 = vld [vmem:[%s1342 + $0x1c] sm:$0xf]
    %v1351 = vld [vmem:[%s1342 + $0x20] sm:$0xf]
    %v1352 = vld [vmem:[%s1342 + $0x24] sm:$0xf]
    %v1353 = vld [vmem:[%s1342 + $0x28] sm:$0xf]
    %v1354 = vld [vmem:[%s1342 + $0x2c] sm:$0xf]
    %v1355 = vld [vmem:[%s1342 + $0x30] sm:$0xf]
    %v1356 = vld [vmem:[%s1342 + $0x34] sm:$0xf]
    %v1357 = vld [vmem:[%s1342 + $0x38] sm:$0xf]
    %v1358 = vld [vmem:[%s1342 + $0x3c] sm:$0xf]
    %v1375 = vunpack.c.l.b16 %v1343
    %v1376 = vunpack.c.l.b16 %v1344
    %v1377 = vunpack.c.l.b16 %v1345
    %v1378 = vunpack.c.l.b16 %v1346
    %v1379 = vunpack.c.l.b16 %v1347
    %v1380 = vunpack.c.l.b16 %v1348
    %v1381 = vunpack.c.l.b16 %v1349
    %v1382 = vunpack.c.l.b16 %v1350
    %v1383 = vunpack.c.l.b16 %v1351
    %v1384 = vunpack.c.l.b16 %v1352
    %v1385 = vunpack.c.l.b16 %v1353
    %v1386 = vunpack.c.l.b16 %v1354
    %v1387 = vunpack.c.l.b16 %v1355
    %v1388 = vunpack.c.l.b16 %v1356
    %v1389 = vunpack.c.l.b16 %v1357
    %v1390 = vunpack.c.l.b16 %v1358
    %v1391 = vpack.c.b16 %v1376, %v1375
    %v1392 = vpack.c.b16 %v1378, %v1377
    %v1393 = vpack.c.b16 %v1380, %v1379
    %v1394 = vpack.c.b16 %v1382, %v1381
    %v1395 = vpack.c.b16 %v1384, %v1383
    %v1396 = vpack.c.b16 %v1386, %v1385
    %v1397 = vpack.c.b16 %v1388, %v1387
    %v1398 = vpack.c.b16 %v1390, %v1389
    %1407 = vmatprep.subr.bf16.mxu0 0
    %1408 = vmatpush1.bf16.msra.mxu0 %v1391
    %1409 = vmatprep.subr.bf16.mxu0 0
    %1410 = vmatpush1.bf16.msra.mxu0 %v1392
    %1411 = vmatprep.subr.bf16.mxu0 0
    %1412 = vmatpush1.bf16.msra.mxu0 %v1393
    %1413 = vmatprep.subr.bf16.mxu0 0
    %1414 = vmatpush1.bf16.msra.mxu0 %v1394
    %1415 = vmatprep.subr.bf16.mxu0 0
    %1416 = vmatpush1.bf16.msra.mxu0 %v1395
    %1417 = vmatprep.subr.bf16.mxu0 0
    %1418 = vmatpush1.bf16.msra.mxu0 %v1396
    %1419 = vmatprep.subr.bf16.mxu0 0
    %1420 = vmatpush1.bf16.msra.mxu0 %v1397
    %1421 = vmatprep.subr.bf16.mxu0 0
    %1422 = vmatpush1.bf16.msra.mxu0 %v1398
    %1423 = vmatprep.subr.bf16.mxu0 0
    %1424 = vmatpush1.bf16.msra.mxu0 0
    %1425 = vmatprep.subr.bf16.mxu0 0
    %1426 = vmatpush1.bf16.msra.mxu0 0
    %1427 = vmatprep.subr.bf16.mxu0 0
    %1428 = vmatpush1.bf16.msra.mxu0 0
    %1429 = vmatprep.subr.bf16.mxu0 0
    %1430 = vmatpush1.bf16.msra.mxu0 0
    %1431 = vmatprep.subr.bf16.mxu0 0
    %1432 = vmatpush1.bf16.msra.mxu0 0
    %1433 = vmatprep.subr.bf16.mxu0 0
    %1434 = vmatpush1.bf16.msra.mxu0 0
    %1435 = vmatprep.subr.bf16.mxu0 0
    %1436 = vmatpush1.bf16.msra.mxu0 0
    %1437 = vmatprep.subr.bf16.mxu0 0
    %1438 = vmatpush1.bf16.msra.mxu0 0
    %1439 = vmatprep.mubr.bf16.mxu0 0
    %1440 = vmatmul.mubr.bf16.gmra.mrb[0].mxu0 %v1341
    %v1441 = vpop.f32.mrb[0].mxu0
    %v1442 = vadd.f32 0.0, %v1441
    %v1443 = vpop.f32.mrb[0].mxu0
    %v1444 = vpop.f32.mrb[0].mxu0
    %v1445 = vpop.f32.mrb[0].mxu0
    %1446 = vdwg.mxu0
    %1447 = vst [vmem:[#allocation7] sm:$0xff] %v1442
    %v1448 = vld [vmem:[#allocation7] sm:$0xff]
    %v1449 = vpack.c.bf16 %v1448, %v1448
    %s1450 = scalar_lea.vmem [#allocation5], 832
    %v1451 = vld [vmem:[%s1450] sm:$0xf]
    %v1452 = vld [vmem:[%s1450 + $0x4] sm:$0xf]
    %v1453 = vld [vmem:[%s1450 + $0x8] sm:$0xf]
    %v1454 = vld [vmem:[%s1450 + $0xc] sm:$0xf]
    %v1455 = vld [vmem:[%s1450 + $0x10] sm:$0xf]
    %v1456 = vld [vmem:[%s1450 + $0x14] sm:$0xf]
    %v1457 = vld [vmem:[%s1450 + $0x18] sm:$0xf]
    %v1458 = vld [vmem:[%s1450 + $0x1c] sm:$0xf]
    %v1459 = vld [vmem:[%s1450 + $0x20] sm:$0xf]
    %v1460 = vld [vmem:[%s1450 + $0x24] sm:$0xf]
    %v1461 = vld [vmem:[%s1450 + $0x28] sm:$0xf]
    %v1462 = vld [vmem:[%s1450 + $0x2c] sm:$0xf]
    %v1463 = vld [vmem:[%s1450 + $0x30] sm:$0xf]
    %v1464 = vld [vmem:[%s1450 + $0x34] sm:$0xf]
    %v1465 = vld [vmem:[%s1450 + $0x38] sm:$0xf]
    %v1466 = vld [vmem:[%s1450 + $0x3c] sm:$0xf]
    %v1483 = vunpack.c.l.b16 %v1451
    %v1484 = vunpack.c.l.b16 %v1452
    %v1485 = vunpack.c.l.b16 %v1453
    %v1486 = vunpack.c.l.b16 %v1454
    %v1487 = vunpack.c.l.b16 %v1455
    %v1488 = vunpack.c.l.b16 %v1456
    %v1489 = vunpack.c.l.b16 %v1457
    %v1490 = vunpack.c.l.b16 %v1458
    %v1491 = vunpack.c.l.b16 %v1459
    %v1492 = vunpack.c.l.b16 %v1460
    %v1493 = vunpack.c.l.b16 %v1461
    %v1494 = vunpack.c.l.b16 %v1462
    %v1495 = vunpack.c.l.b16 %v1463
    %v1496 = vunpack.c.l.b16 %v1464
    %v1497 = vunpack.c.l.b16 %v1465
    %v1498 = vunpack.c.l.b16 %v1466
    %v1499 = vpack.c.b16 %v1484, %v1483
    %v1500 = vpack.c.b16 %v1486, %v1485
    %v1501 = vpack.c.b16 %v1488, %v1487
    %v1502 = vpack.c.b16 %v1490, %v1489
    %v1503 = vpack.c.b16 %v1492, %v1491
    %v1504 = vpack.c.b16 %v1494, %v1493
    %v1505 = vpack.c.b16 %v1496, %v1495
    %v1506 = vpack.c.b16 %v1498, %v1497
    %1515 = vmatprep.subr.bf16.mxu0 0
    %1516 = vmatpush1.bf16.msra.mxu0 %v1499
    %1517 = vmatprep.subr.bf16.mxu0 0
    %1518 = vmatpush1.bf16.msra.mxu0 %v1500
    %1519 = vmatprep.subr.bf16.mxu0 0
    %1520 = vmatpush1.bf16.msra.mxu0 %v1501
    %1521 = vmatprep.subr.bf16.mxu0 0
    %1522 = vmatpush1.bf16.msra.mxu0 %v1502
    %1523 = vmatprep.subr.bf16.mxu0 0
    %1524 = vmatpush1.bf16.msra.mxu0 %v1503
    %1525 = vmatprep.subr.bf16.mxu0 0
    %1526 = vmatpush1.bf16.msra.mxu0 %v1504
    %1527 = vmatprep.subr.bf16.mxu0 0
    %1528 = vmatpush1.bf16.msra.mxu0 %v1505
    %1529 = vmatprep.subr.bf16.mxu0 0
    %1530 = vmatpush1.bf16.msra.mxu0 %v1506
    %1531 = vmatprep.subr.bf16.mxu0 0
    %1532 = vmatpush1.bf16.msra.mxu0 0
    %1533 = vmatprep.subr.bf16.mxu0 0
    %1534 = vmatpush1.bf16.msra.mxu0 0
    %1535 = vmatprep.subr.bf16.mxu0 0
    %1536 = vmatpush1.bf16.msra.mxu0 0
    %1537 = vmatprep.subr.bf16.mxu0 0
    %1538 = vmatpush1.bf16.msra.mxu0 0
    %1539 = vmatprep.subr.bf16.mxu0 0
    %1540 = vmatpush1.bf16.msra.mxu0 0
    %1541 = vmatprep.subr.bf16.mxu0 0
    %1542 = vmatpush1.bf16.msra.mxu0 0
    %1543 = vmatprep.subr.bf16.mxu0 0
    %1544 = vmatpush1.bf16.msra.mxu0 0
    %1545 = vmatprep.subr.bf16.mxu0 0
    %1546 = vmatpush1.bf16.msra.mxu0 0
    %1547 = vmatprep.mubr.bf16.mxu0 0
    %1548 = vmatmul.mubr.bf16.gmra.mrb[0].mxu0 %v1449
    %v1549 = vpop.f32.mrb[0].mxu0
    %v1550 = vadd.f32 0.0, %v1549
    %v1551 = vpop.f32.mrb[0].mxu0
    %v1552 = vpop.f32.mrb[0].mxu0
    %v1553 = vpop.f32.mrb[0].mxu0
    %1554 = vdwg.mxu0
    %1555 = vst [vmem:[#allocation7] sm:$0xff] %v1550
    %v1556 = vld [vmem:[#allocation7] sm:$0xff]
    %v1557 = vpack.c.bf16 %v1556, %v1556
    %s1558 = scalar_lea.vmem [#allocation5], 896
    %v1559 = vld [vmem:[%s1558] sm:$0xf]
    %v1560 = vld [vmem:[%s1558 + $0x4] sm:$0xf]
    %v1561 = vld [vmem:[%s1558 + $0x8] sm:$0xf]
    %v1562 = vld [vmem:[%s1558 + $0xc] sm:$0xf]
    %v1563 = vld [vmem:[%s1558 + $0x10] sm:$0xf]
    %v1564 = vld [vmem:[%s1558 + $0x14] sm:$0xf]
    %v1565 = vld [vmem:[%s1558 + $0x18] sm:$0xf]
    %v1566 = vld [vmem:[%s1558 + $0x1c] sm:$0xf]
    %v1567 = vld [vmem:[%s1558 + $0x20] sm:$0xf]
    %v1568 = vld [vmem:[%s1558 + $0x24] sm:$0xf]
    %v1569 = vld [vmem:[%s1558 + $0x28] sm:$0xf]
    %v1570 = vld [vmem:[%s1558 + $0x2c] sm:$0xf]
    %v1571 = vld [vmem:[%s1558 + $0x30] sm:$0xf]
    %v1572 = vld [vmem:[%s1558 + $0x34] sm:$0xf]
    %v1573 = vld [vmem:[%s1558 + $0x38] sm:$0xf]
    %v1574 = vld [vmem:[%s1558 + $0x3c] sm:$0xf]
    %v1591 = vunpack.c.l.b16 %v1559
    %v1592 = vunpack.c.l.b16 %v1560
    %v1593 = vunpack.c.l.b16 %v1561
    %v1594 = vunpack.c.l.b16 %v1562
    %v1595 = vunpack.c.l.b16 %v1563
    %v1596 = vunpack.c.l.b16 %v1564
    %v1597 = vunpack.c.l.b16 %v1565
    %v1598 = vunpack.c.l.b16 %v1566
    %v1599 = vunpack.c.l.b16 %v1567
    %v1600 = vunpack.c.l.b16 %v1568
    %v1601 = vunpack.c.l.b16 %v1569
    %v1602 = vunpack.c.l.b16 %v1570
    %v1603 = vunpack.c.l.b16 %v1571
    %v1604 = vunpack.c.l.b16 %v1572
    %v1605 = vunpack.c.l.b16 %v1573
    %v1606 = vunpack.c.l.b16 %v1574
    %v1607 = vpack.c.b16 %v1592, %v1591
    %v1608 = vpack.c.b16 %v1594, %v1593
    %v1609 = vpack.c.b16 %v1596, %v1595
    %v1610 = vpack.c.b16 %v1598, %v1597
    %v1611 = vpack.c.b16 %v1600, %v1599
    %v1612 = vpack.c.b16 %v1602, %v1601
    %v1613 = vpack.c.b16 %v1604, %v1603
    %v1614 = vpack.c.b16 %v1606, %v1605
    %1623 = vmatprep.subr.bf16.mxu0 0
    %1624 = vmatpush1.bf16.msra.mxu0 %v1607
    %1625 = vmatprep.subr.bf16.mxu0 0
    %1626 = vmatpush1.bf16.msra.mxu0 %v1608
    %1627 = vmatprep.subr.bf16.mxu0 0
    %1628 = vmatpush1.bf16.msra.mxu0 %v1609
    %1629 = vmatprep.subr.bf16.mxu0 0
    %1630 = vmatpush1.bf16.msra.mxu0 %v1610
    %1631 = vmatprep.subr.bf16.mxu0 0
    %1632 = vmatpush1.bf16.msra.mxu0 %v1611
    %1633 = vmatprep.subr.bf16.mxu0 0
    %1634 = vmatpush1.bf16.msra.mxu0 %v1612
    %1635 = vmatprep.subr.bf16.mxu0 0
    %1636 = vmatpush1.bf16.msra.mxu0 %v1613
    %1637 = vmatprep.subr.bf16.mxu0 0
    %1638 = vmatpush1.bf16.msra.mxu0 %v1614
    %1639 = vmatprep.subr.bf16.mxu0 0
    %1640 = vmatpush1.bf16.msra.mxu0 0
    %1641 = vmatprep.subr.bf16.mxu0 0
    %1642 = vmatpush1.bf16.msra.mxu0 0
    %1643 = vmatprep.subr.bf16.mxu0 0
    %1644 = vmatpush1.bf16.msra.mxu0 0
    %1645 = vmatprep.subr.bf16.mxu0 0
    %1646 = vmatpush1.bf16.msra.mxu0 0
    %1647 = vmatprep.subr.bf16.mxu0 0
    %1648 = vmatpush1.bf16.msra.mxu0 0
    %1649 = vmatprep.subr.bf16.mxu0 0
    %1650 = vmatpush1.bf16.msra.mxu0 0
    %1651 = vmatprep.subr.bf16.mxu0 0
    %1652 = vmatpush1.bf16.msra.mxu0 0
    %1653 = vmatprep.subr.bf16.mxu0 0
    %1654 = vmatpush1.bf16.msra.mxu0 0
    %1655 = vmatprep.mubr.bf16.mxu0 0
    %1656 = vmatmul.mubr.bf16.gmra.mrb[0].mxu0 %v1557
    %v1657 = vpop.f32.mrb[0].mxu0
    %v1658 = vadd.f32 0.0, %v1657
    %v1659 = vpop.f32.mrb[0].mxu0
    %v1660 = vpop.f32.mrb[0].mxu0
    %v1661 = vpop.f32.mrb[0].mxu0
    %1662 = vdwg.mxu0
    %1663 = vst [vmem:[#allocation7] sm:$0xff] %v1658
    %v1664 = vld [vmem:[#allocation7] sm:$0xff]
    %v1665 = vpack.c.bf16 %v1664, %v1664
    %s1666 = scalar_lea.vmem [#allocation5], 960
    %v1667 = vld [vmem:[%s1666] sm:$0xf]
    %v1668 = vld [vmem:[%s1666 + $0x4] sm:$0xf]
    %v1669 = vld [vmem:[%s1666 + $0x8] sm:$0xf]
    %v1670 = vld [vmem:[%s1666 + $0xc] sm:$0xf]
    %v1671 = vld [vmem:[%s1666 + $0x10] sm:$0xf]
    %v1672 = vld [vmem:[%s1666 + $0x14] sm:$0xf]
    %v1673 = vld [vmem:[%s1666 + $0x18] sm:$0xf]
    %v1674 = vld [vmem:[%s1666 + $0x1c] sm:$0xf]
    %v1675 = vld [vmem:[%s1666 + $0x20] sm:$0xf]
    %v1676 = vld [vmem:[%s1666 + $0x24] sm:$0xf]
    %v1677 = vld [vmem:[%s1666 + $0x28] sm:$0xf]
    %v1678 = vld [vmem:[%s1666 + $0x2c] sm:$0xf]
    %v1679 = vld [vmem:[%s1666 + $0x30] sm:$0xf]
    %v1680 = vld [vmem:[%s1666 + $0x34] sm:$0xf]
    %v1681 = vld [vmem:[%s1666 + $0x38] sm:$0xf]
    %v1682 = vld [vmem:[%s1666 + $0x3c] sm:$0xf]
    %v1699 = vunpack.c.l.b16 %v1667
    %v1700 = vunpack.c.l.b16 %v1668
    %v1701 = vunpack.c.l.b16 %v1669
    %v1702 = vunpack.c.l.b16 %v1670
    %v1703 = vunpack.c.l.b16 %v1671
    %v1704 = vunpack.c.l.b16 %v1672
    %v1705 = vunpack.c.l.b16 %v1673
    %v1706 = vunpack.c.l.b16 %v1674
    %v1707 = vunpack.c.l.b16 %v1675
    %v1708 = vunpack.c.l.b16 %v1676
    %v1709 = vunpack.c.l.b16 %v1677
    %v1710 = vunpack.c.l.b16 %v1678
    %v1711 = vunpack.c.l.b16 %v1679
    %v1712 = vunpack.c.l.b16 %v1680
    %v1713 = vunpack.c.l.b16 %v1681
    %v1714 = vunpack.c.l.b16 %v1682
    %v1715 = vpack.c.b16 %v1700, %v1699
    %v1716 = vpack.c.b16 %v1702, %v1701
    %v1717 = vpack.c.b16 %v1704, %v1703
    %v1718 = vpack.c.b16 %v1706, %v1705
    %v1719 = vpack.c.b16 %v1708, %v1707
    %v1720 = vpack.c.b16 %v1710, %v1709
    %v1721 = vpack.c.b16 %v1712, %v1711
    %v1722 = vpack.c.b16 %v1714, %v1713
    %1731 = vmatprep.subr.bf16.mxu0 0
    %1732 = vmatpush1.bf16.msra.mxu0 %v1715
    %1733 = vmatprep.subr.bf16.mxu0 0
    %1734 = vmatpush1.bf16.msra.mxu0 %v1716
    %1735 = vmatprep.subr.bf16.mxu0 0
    %1736 = vmatpush1.bf16.msra.mxu0 %v1717
    %1737 = vmatprep.subr.bf16.mxu0 0
    %1738 = vmatpush1.bf16.msra.mxu0 %v1718
    %1739 = vmatprep.subr.bf16.mxu0 0
    %1740 = vmatpush1.bf16.msra.mxu0 %v1719
    %1741 = vmatprep.subr.bf16.mxu0 0
    %1742 = vmatpush1.bf16.msra.mxu0 %v1720
    %1743 = vmatprep.subr.bf16.mxu0 0
    %1744 = vmatpush1.bf16.msra.mxu0 %v1721
    %1745 = vmatprep.subr.bf16.mxu0 0
    %1746 = vmatpush1.bf16.msra.mxu0 %v1722
    %1747 = vmatprep.subr.bf16.mxu0 0
    %1748 = vmatpush1.bf16.msra.mxu0 0
    %1749 = vmatprep.subr.bf16.mxu0 0
    %1750 = vmatpush1.bf16.msra.mxu0 0
    %1751 = vmatprep.subr.bf16.mxu0 0
    %1752 = vmatpush1.bf16.msra.mxu0 0
    %1753 = vmatprep.subr.bf16.mxu0 0
    %1754 = vmatpush1.bf16.msra.mxu0 0
    %1755 = vmatprep.subr.bf16.mxu0 0
    %1756 = vmatpush1.bf16.msra.mxu0 0
    %1757 = vmatprep.subr.bf16.mxu0 0
    %1758 = vmatpush1.bf16.msra.mxu0 0
    %1759 = vmatprep.subr.bf16.mxu0 0
    %1760 = vmatpush1.bf16.msra.mxu0 0
    %1761 = vmatprep.subr.bf16.mxu0 0
    %1762 = vmatpush1.bf16.msra.mxu0 0
    %1763 = vmatprep.mubr.bf16.mxu0 0
    %1764 = vmatmul.mubr.bf16.gmra.mrb[0].mxu0 %v1665
    %v1765 = vpop.f32.mrb[0].mxu0
    %v1766 = vadd.f32 0.0, %v1765
    %v1767 = vpop.f32.mrb[0].mxu0
    %v1768 = vpop.f32.mrb[0].mxu0
    %v1769 = vpop.f32.mrb[0].mxu0
    %1770 = vdwg.mxu0
    %1771 = vst [vmem:[#allocation7] sm:$0xff] %v1766
    %v1772 = vld [vmem:[#allocation7] sm:$0xff]
    %v1773 = vpack.c.bf16 %v1772, %v1772
    %s1774 = scalar_lea.vmem [#allocation5], 1024
    %v1775 = vld [vmem:[%s1774] sm:$0xf]
    %v1776 = vld [vmem:[%s1774 + $0x4] sm:$0xf]
    %v1777 = vld [vmem:[%s1774 + $0x8] sm:$0xf]
    %v1778 = vld [vmem:[%s1774 + $0xc] sm:$0xf]
    %v1779 = vld [vmem:[%s1774 + $0x10] sm:$0xf]
    %v1780 = vld [vmem:[%s1774 + $0x14] sm:$0xf]
    %v1781 = vld [vmem:[%s1774 + $0x18] sm:$0xf]
    %v1782 = vld [vmem:[%s1774 + $0x1c] sm:$0xf]
    %v1783 = vld [vmem:[%s1774 + $0x20] sm:$0xf]
    %v1784 = vld [vmem:[%s1774 + $0x24] sm:$0xf]
    %v1785 = vld [vmem:[%s1774 + $0x28] sm:$0xf]
    %v1786 = vld [vmem:[%s1774 + $0x2c] sm:$0xf]
    %v1787 = vld [vmem:[%s1774 + $0x30] sm:$0xf]
    %v1788 = vld [vmem:[%s1774 + $0x34] sm:$0xf]
    %v1789 = vld [vmem:[%s1774 + $0x38] sm:$0xf]
    %v1790 = vld [vmem:[%s1774 + $0x3c] sm:$0xf]
    %v1807 = vunpack.c.l.b16 %v1775
    %v1808 = vunpack.c.l.b16 %v1776
    %v1809 = vunpack.c.l.b16 %v1777
    %v1810 = vunpack.c.l.b16 %v1778
    %v1811 = vunpack.c.l.b16 %v1779
    %v1812 = vunpack.c.l.b16 %v1780
    %v1813 = vunpack.c.l.b16 %v1781
    %v1814 = vunpack.c.l.b16 %v1782
    %v1815 = vunpack.c.l.b16 %v1783
    %v1816 = vunpack.c.l.b16 %v1784
    %v1817 = vunpack.c.l.b16 %v1785
    %v1818 = vunpack.c.l.b16 %v1786
    %v1819 = vunpack.c.l.b16 %v1787
    %v1820 = vunpack.c.l.b16 %v1788
    %v1821 = vunpack.c.l.b16 %v1789
    %v1822 = vunpack.c.l.b16 %v1790
    %v1823 = vpack.c.b16 %v1808, %v1807
    %v1824 = vpack.c.b16 %v1810, %v1809
    %v1825 = vpack.c.b16 %v1812, %v1811
    %v1826 = vpack.c.b16 %v1814, %v1813
    %v1827 = vpack.c.b16 %v1816, %v1815
    %v1828 = vpack.c.b16 %v1818, %v1817
    %v1829 = vpack.c.b16 %v1820, %v1819
    %v1830 = vpack.c.b16 %v1822, %v1821
    %1839 = vmatprep.subr.bf16.mxu0 0
    %1840 = vmatpush1.bf16.msra.mxu0 %v1823
    %1841 = vmatprep.subr.bf16.mxu0 0
    %1842 = vmatpush1.bf16.msra.mxu0 %v1824
    %1843 = vmatprep.subr.bf16.mxu0 0
    %1844 = vmatpush1.bf16.msra.mxu0 %v1825
    %1845 = vmatprep.subr.bf16.mxu0 0
    %1846 = vmatpush1.bf16.msra.mxu0 %v1826
    %1847 = vmatprep.subr.bf16.mxu0 0
    %1848 = vmatpush1.bf16.msra.mxu0 %v1827
    %1849 = vmatprep.subr.bf16.mxu0 0
    %1850 = vmatpush1.bf16.msra.mxu0 %v1828
    %1851 = vmatprep.subr.bf16.mxu0 0
    %1852 = vmatpush1.bf16.msra.mxu0 %v1829
    %1853 = vmatprep.subr.bf16.mxu0 0
    %1854 = vmatpush1.bf16.msra.mxu0 %v1830
    %1855 = vmatprep.subr.bf16.mxu0 0
    %1856 = vmatpush1.bf16.msra.mxu0 0
    %1857 = vmatprep.subr.bf16.mxu0 0
    %1858 = vmatpush1.bf16.msra.mxu0 0
    %1859 = vmatprep.subr.bf16.mxu0 0
    %1860 = vmatpush1.bf16.msra.mxu0 0
    %1861 = vmatprep.subr.bf16.mxu0 0
    %1862 = vmatpush1.bf16.msra.mxu0 0
    %1863 = vmatprep.subr.bf16.mxu0 0
    %1864 = vmatpush1.bf16.msra.mxu0 0
    %1865 = vmatprep.subr.bf16.mxu0 0
    %1866 = vmatpush1.bf16.msra.mxu0 0
    %1867 = vmatprep.subr.bf16.mxu0 0
    %1868 = vmatpush1.bf16.msra.mxu0 0
    %1869 = vmatprep.subr.bf16.mxu0 0
    %1870 = vmatpush1.bf16.msra.mxu0 0
    %1871 = vmatprep.mubr.bf16.mxu0 0
    %1872 = vmatmul.mubr.bf16.gmra.mrb[0].mxu0 %v1773
    %v1873 = vpop.f32.mrb[0].mxu0
    %v1874 = vadd.f32 0.0, %v1873
    %v1875 = vpop.f32.mrb[0].mxu0
    %v1876 = vpop.f32.mrb[0].mxu0
    %v1877 = vpop.f32.mrb[0].mxu0
    %1878 = vdwg.mxu0
    %1879 = vst [vmem:[#allocation7] sm:$0xff] %v1874
    %v1880 = vld [vmem:[#allocation7] sm:$0xff]
    %v1881 = vpack.c.bf16 %v1880, %v1880
    %s1882 = scalar_lea.vmem [#allocation5], 1088
    %v1883 = vld [vmem:[%s1882] sm:$0xf]
    %v1884 = vld [vmem:[%s1882 + $0x4] sm:$0xf]
    %v1885 = vld [vmem:[%s1882 + $0x8] sm:$0xf]
    %v1886 = vld [vmem:[%s1882 + $0xc] sm:$0xf]
    %v1887 = vld [vmem:[%s1882 + $0x10] sm:$0xf]
    %v1888 = vld [vmem:[%s1882 + $0x14] sm:$0xf]
    %v1889 = vld [vmem:[%s1882 + $0x18] sm:$0xf]
    %v1890 = vld [vmem:[%s1882 + $0x1c] sm:$0xf]
    %v1891 = vld [vmem:[%s1882 + $0x20] sm:$0xf]
    %v1892 = vld [vmem:[%s1882 + $0x24] sm:$0xf]
    %v1893 = vld [vmem:[%s1882 + $0x28] sm:$0xf]
    %v1894 = vld [vmem:[%s1882 + $0x2c] sm:$0xf]
    %v1895 = vld [vmem:[%s1882 + $0x30] sm:$0xf]
    %v1896 = vld [vmem:[%s1882 + $0x34] sm:$0xf]
    %v1897 = vld [vmem:[%s1882 + $0x38] sm:$0xf]
    %v1898 = vld [vmem:[%s1882 + $0x3c] sm:$0xf]
    %v1915 = vunpack.c.l.b16 %v1883
    %v1916 = vunpack.c.l.b16 %v1884
    %v1917 = vunpack.c.l.b16 %v1885
    %v1918 = vunpack.c.l.b16 %v1886
    %v1919 = vunpack.c.l.b16 %v1887
    %v1920 = vunpack.c.l.b16 %v1888
    %v1921 = vunpack.c.l.b16 %v1889
    %v1922 = vunpack.c.l.b16 %v1890
    %v1923 = vunpack.c.l.b16 %v1891
    %v1924 = vunpack.c.l.b16 %v1892
    %v1925 = vunpack.c.l.b16 %v1893
    %v1926 = vunpack.c.l.b16 %v1894
    %v1927 = vunpack.c.l.b16 %v1895
    %v1928 = vunpack.c.l.b16 %v1896
    %v1929 = vunpack.c.l.b16 %v1897
    %v1930 = vunpack.c.l.b16 %v1898
    %v1931 = vpack.c.b16 %v1916, %v1915
    %v1932 = vpack.c.b16 %v1918, %v1917
    %v1933 = vpack.c.b16 %v1920, %v1919
    %v1934 = vpack.c.b16 %v1922, %v1921
    %v1935 = vpack.c.b16 %v1924, %v1923
    %v1936 = vpack.c.b16 %v1926, %v1925
    %v1937 = vpack.c.b16 %v1928, %v1927
    %v1938 = vpack.c.b16 %v1930, %v1929
    %1947 = vmatprep.subr.bf16.mxu0 0
    %1948 = vmatpush1.bf16.msra.mxu0 %v1931
    %1949 = vmatprep.subr.bf16.mxu0 0
    %1950 = vmatpush1.bf16.msra.mxu0 %v1932
    %1951 = vmatprep.subr.bf16.mxu0 0
    %1952 = vmatpush1.bf16.msra.mxu0 %v1933
    %1953 = vmatprep.subr.bf16.mxu0 0
    %1954 = vmatpush1.bf16.msra.mxu0 %v1934
    %1955 = vmatprep.subr.bf16.mxu0 0
    %1956 = vmatpush1.bf16.msra.mxu0 %v1935
    %1957 = vmatprep.subr.bf16.mxu0 0
    %1958 = vmatpush1.bf16.msra.mxu0 %v1936
    %1959 = vmatprep.subr.bf16.mxu0 0
    %1960 = vmatpush1.bf16.msra.mxu0 %v1937
    %1961 = vmatprep.subr.bf16.mxu0 0
    %1962 = vmatpush1.bf16.msra.mxu0 %v1938
    %1963 = vmatprep.subr.bf16.mxu0 0
    %1964 = vmatpush1.bf16.msra.mxu0 0
    %1965 = vmatprep.subr.bf16.mxu0 0
    %1966 = vmatpush1.bf16.msra.mxu0 0
    %1967 = vmatprep.subr.bf16.mxu0 0
    %1968 = vmatpush1.bf16.msra.mxu0 0
    %1969 = vmatprep.subr.bf16.mxu0 0
    %1970 = vmatpush1.bf16.msra.mxu0 0
    %1971 = vmatprep.subr.bf16.mxu0 0
    %1972 = vmatpush1.bf16.msra.mxu0 0
    %1973 = vmatprep.subr.bf16.mxu0 0
    %1974 = vmatpush1.bf16.msra.mxu0 0
    %1975 = vmatprep.subr.bf16.mxu0 0
    %1976 = vmatpush1.bf16.msra.mxu0 0
    %1977 = vmatprep.subr.bf16.mxu0 0
    %1978 = vmatpush1.bf16.msra.mxu0 0
    %1979 = vmatprep.mubr.bf16.mxu0 0
    %1980 = vmatmul.mubr.bf16.gmra.mrb[0].mxu0 %v1881
    %v1981 = vpop.f32.mrb[0].mxu0
    %v1982 = vadd.f32 0.0, %v1981
    %v1983 = vpop.f32.mrb[0].mxu0
    %v1984 = vpop.f32.mrb[0].mxu0
    %v1985 = vpop.f32.mrb[0].mxu0
    %1986 = vdwg.mxu0
    %1987 = vst [vmem:[#allocation7] sm:$0xff] %v1982
    %v1988 = vld [vmem:[#allocation7] sm:$0xff]
    %v1989 = vpack.c.bf16 %v1988, %v1988
    %s1990 = scalar_lea.vmem [#allocation5], 1152
    %v1991 = vld [vmem:[%s1990] sm:$0xf]
    %v1992 = vld [vmem:[%s1990 + $0x4] sm:$0xf]
    %v1993 = vld [vmem:[%s1990 + $0x8] sm:$0xf]
    %v1994 = vld [vmem:[%s1990 + $0xc] sm:$0xf]
    %v1995 = vld [vmem:[%s1990 + $0x10] sm:$0xf]
    %v1996 = vld [vmem:[%s1990 + $0x14] sm:$0xf]
    %v1997 = vld [vmem:[%s1990 + $0x18] sm:$0xf]
    %v1998 = vld [vmem:[%s1990 + $0x1c] sm:$0xf]
    %v1999 = vld [vmem:[%s1990 + $0x20] sm:$0xf]
    %v2000 = vld [vmem:[%s1990 + $0x24] sm:$0xf]
    %v2001 = vld [vmem:[%s1990 + $0x28] sm:$0xf]
    %v2002 = vld [vmem:[%s1990 + $0x2c] sm:$0xf]
    %v2003 = vld [vmem:[%s1990 + $0x30] sm:$0xf]
    %v2004 = vld [vmem:[%s1990 + $0x34] sm:$0xf]
    %v2005 = vld [vmem:[%s1990 + $0x38] sm:$0xf]
    %v2006 = vld [vmem:[%s1990 + $0x3c] sm:$0xf]
    %v2023 = vunpack.c.l.b16 %v1991
    %v2024 = vunpack.c.l.b16 %v1992
    %v2025 = vunpack.c.l.b16 %v1993
    %v2026 = vunpack.c.l.b16 %v1994
    %v2027 = vunpack.c.l.b16 %v1995
    %v2028 = vunpack.c.l.b16 %v1996
    %v2029 = vunpack.c.l.b16 %v1997
    %v2030 = vunpack.c.l.b16 %v1998
    %v2031 = vunpack.c.l.b16 %v1999
    %v2032 = vunpack.c.l.b16 %v2000
    %v2033 = vunpack.c.l.b16 %v2001
    %v2034 = vunpack.c.l.b16 %v2002
    %v2035 = vunpack.c.l.b16 %v2003
    %v2036 = vunpack.c.l.b16 %v2004
    %v2037 = vunpack.c.l.b16 %v2005
    %v2038 = vunpack.c.l.b16 %v2006
    %v2039 = vpack.c.b16 %v2024, %v2023
    %v2040 = vpack.c.b16 %v2026, %v2025
    %v2041 = vpack.c.b16 %v2028, %v2027
    %v2042 = vpack.c.b16 %v2030, %v2029
    %v2043 = vpack.c.b16 %v2032, %v2031
    %v2044 = vpack.c.b16 %v2034, %v2033
    %v2045 = vpack.c.b16 %v2036, %v2035
    %v2046 = vpack.c.b16 %v2038, %v2037
    %2055 = vmatprep.subr.bf16.mxu0 0
    %2056 = vmatpush1.bf16.msra.mxu0 %v2039
    %2057 = vmatprep.subr.bf16.mxu0 0
    %2058 = vmatpush1.bf16.msra.mxu0 %v2040
    %2059 = vmatprep.subr.bf16.mxu0 0
    %2060 = vmatpush1.bf16.msra.mxu0 %v2041
    %2061 = vmatprep.subr.bf16.mxu0 0
    %2062 = vmatpush1.bf16.msra.mxu0 %v2042
    %2063 = vmatprep.subr.bf16.mxu0 0
    %2064 = vmatpush1.bf16.msra.mxu0 %v2043
    %2065 = vmatprep.subr.bf16.mxu0 0
    %2066 = vmatpush1.bf16.msra.mxu0 %v2044
    %2067 = vmatprep.subr.bf16.mxu0 0
    %2068 = vmatpush1.bf16.msra.mxu0 %v2045
    %2069 = vmatprep.subr.bf16.mxu0 0
    %2070 = vmatpush1.bf16.msra.mxu0 %v2046
    %2071 = vmatprep.subr.bf16.mxu0 0
    %2072 = vmatpush1.bf16.msra.mxu0 0
    %2073 = vmatprep.subr.bf16.mxu0 0
    %2074 = vmatpush1.bf16.msra.mxu0 0
    %2075 = vmatprep.subr.bf16.mxu0 0
    %2076 = vmatpush1.bf16.msra.mxu0 0
    %2077 = vmatprep.subr.bf16.mxu0 0
    %2078 = vmatpush1.bf16.msra.mxu0 0
    %2079 = vmatprep.subr.bf16.mxu0 0
    %2080 = vmatpush1.bf16.msra.mxu0 0
    %2081 = vmatprep.subr.bf16.mxu0 0
    %2082 = vmatpush1.bf16.msra.mxu0 0
    %2083 = vmatprep.subr.bf16.mxu0 0
    %2084 = vmatpush1.bf16.msra.mxu0 0
    %2085 = vmatprep.subr.bf16.mxu0 0
    %2086 = vmatpush1.bf16.msra.mxu0 0
    %2087 = vmatprep.mubr.bf16.mxu0 0
    %2088 = vmatmul.mubr.bf16.gmra.mrb[0].mxu0 %v1989
    %v2089 = vpop.f32.mrb[0].mxu0
    %v2090 = vadd.f32 0.0, %v2089
    %v2091 = vpop.f32.mrb[0].mxu0
    %v2092 = vpop.f32.mrb[0].mxu0
    %v2093 = vpop.f32.mrb[0].mxu0
    %2094 = vdwg.mxu0
    %2095 = vst [vmem:[#allocation7] sm:$0xff] %v2090
    %v2096 = vld [vmem:[#allocation7] sm:$0xff]
    %v2097 = vpack.c.bf16 %v2096, %v2096
    %s2098 = scalar_lea.vmem [#allocation5], 1216
    %v2099 = vld [vmem:[%s2098] sm:$0xf]
    %v2100 = vld [vmem:[%s2098 + $0x4] sm:$0xf]
    %v2101 = vld [vmem:[%s2098 + $0x8] sm:$0xf]
    %v2102 = vld [vmem:[%s2098 + $0xc] sm:$0xf]
    %v2103 = vld [vmem:[%s2098 + $0x10] sm:$0xf]
    %v2104 = vld [vmem:[%s2098 + $0x14] sm:$0xf]
    %v2105 = vld [vmem:[%s2098 + $0x18] sm:$0xf]
    %v2106 = vld [vmem:[%s2098 + $0x1c] sm:$0xf]
    %v2107 = vld [vmem:[%s2098 + $0x20] sm:$0xf]
    %v2108 = vld [vmem:[%s2098 + $0x24] sm:$0xf]
    %v2109 = vld [vmem:[%s2098 + $0x28] sm:$0xf]
    %v2110 = vld [vmem:[%s2098 + $0x2c] sm:$0xf]
    %v2111 = vld [vmem:[%s2098 + $0x30] sm:$0xf]
    %v2112 = vld [vmem:[%s2098 + $0x34] sm:$0xf]
    %v2113 = vld [vmem:[%s2098 + $0x38] sm:$0xf]
    %v2114 = vld [vmem:[%s2098 + $0x3c] sm:$0xf]
    %v2131 = vunpack.c.l.b16 %v2099
    %v2132 = vunpack.c.l.b16 %v2100
    %v2133 = vunpack.c.l.b16 %v2101
    %v2134 = vunpack.c.l.b16 %v2102
    %v2135 = vunpack.c.l.b16 %v2103
    %v2136 = vunpack.c.l.b16 %v2104
    %v2137 = vunpack.c.l.b16 %v2105
    %v2138 = vunpack.c.l.b16 %v2106
    %v2139 = vunpack.c.l.b16 %v2107
    %v2140 = vunpack.c.l.b16 %v2108
    %v2141 = vunpack.c.l.b16 %v2109
    %v2142 = vunpack.c.l.b16 %v2110
    %v2143 = vunpack.c.l.b16 %v2111
    %v2144 = vunpack.c.l.b16 %v2112
    %v2145 = vunpack.c.l.b16 %v2113
    %v2146 = vunpack.c.l.b16 %v2114
    %v2147 = vpack.c.b16 %v2132, %v2131
    %v2148 = vpack.c.b16 %v2134, %v2133
    %v2149 = vpack.c.b16 %v2136, %v2135
    %v2150 = vpack.c.b16 %v2138, %v2137
    %v2151 = vpack.c.b16 %v2140, %v2139
    %v2152 = vpack.c.b16 %v2142, %v2141
    %v2153 = vpack.c.b16 %v2144, %v2143
    %v2154 = vpack.c.b16 %v2146, %v2145
    %2163 = vmatprep.subr.bf16.mxu0 0
    %2164 = vmatpush1.bf16.msra.mxu0 %v2147
    %2165 = vmatprep.subr.bf16.mxu0 0
    %2166 = vmatpush1.bf16.msra.mxu0 %v2148
    %2167 = vmatprep.subr.bf16.mxu0 0
    %2168 = vmatpush1.bf16.msra.mxu0 %v2149
    %2169 = vmatprep.subr.bf16.mxu0 0
    %2170 = vmatpush1.bf16.msra.mxu0 %v2150
    %2171 = vmatprep.subr.bf16.mxu0 0
    %2172 = vmatpush1.bf16.msra.mxu0 %v2151
    %2173 = vmatprep.subr.bf16.mxu0 0
    %2174 = vmatpush1.bf16.msra.mxu0 %v2152
    %2175 = vmatprep.subr.bf16.mxu0 0
    %2176 = vmatpush1.bf16.msra.mxu0 %v2153
    %2177 = vmatprep.subr.bf16.mxu0 0
    %2178 = vmatpush1.bf16.msra.mxu0 %v2154
    %2179 = vmatprep.subr.bf16.mxu0 0
    %2180 = vmatpush1.bf16.msra.mxu0 0
    %2181 = vmatprep.subr.bf16.mxu0 0
    %2182 = vmatpush1.bf16.msra.mxu0 0
    %2183 = vmatprep.subr.bf16.mxu0 0
    %2184 = vmatpush1.bf16.msra.mxu0 0
    %2185 = vmatprep.subr.bf16.mxu0 0
    %2186 = vmatpush1.bf16.msra.mxu0 0
    %2187 = vmatprep.subr.bf16.mxu0 0
    %2188 = vmatpush1.bf16.msra.mxu0 0
    %2189 = vmatprep.subr.bf16.mxu0 0
    %2190 = vmatpush1.bf16.msra.mxu0 0
    %2191 = vmatprep.subr.bf16.mxu0 0
    %2192 = vmatpush1.bf16.msra.mxu0 0
    %2193 = vmatprep.subr.bf16.mxu0 0
    %2194 = vmatpush1.bf16.msra.mxu0 0
    %2195 = vmatprep.mubr.bf16.mxu0 0
    %2196 = vmatmul.mubr.bf16.gmra.mrb[0].mxu0 %v2097
    %v2197 = vpop.f32.mrb[0].mxu0
    %v2198 = vadd.f32 0.0, %v2197
    %v2199 = vpop.f32.mrb[0].mxu0
    %v2200 = vpop.f32.mrb[0].mxu0
    %v2201 = vpop.f32.mrb[0].mxu0
    %2202 = vdwg.mxu0
    %2203 = vst [vmem:[#allocation7] sm:$0xff] %v2198
    %v2204 = vld [vmem:[#allocation7] sm:$0xff]
    %v2205 = vpack.c.bf16 %v2204, %v2204
    %s2206 = scalar_lea.vmem [#allocation5], 1280
    %v2207 = vld [vmem:[%s2206] sm:$0xf]
    %v2208 = vld [vmem:[%s2206 + $0x4] sm:$0xf]
    %v2209 = vld [vmem:[%s2206 + $0x8] sm:$0xf]
    %v2210 = vld [vmem:[%s2206 + $0xc] sm:$0xf]
    %v2211 = vld [vmem:[%s2206 + $0x10] sm:$0xf]
    %v2212 = vld [vmem:[%s2206 + $0x14] sm:$0xf]
    %v2213 = vld [vmem:[%s2206 + $0x18] sm:$0xf]
    %v2214 = vld [vmem:[%s2206 + $0x1c] sm:$0xf]
    %v2215 = vld [vmem:[%s2206 + $0x20] sm:$0xf]
    %v2216 = vld [vmem:[%s2206 + $0x24] sm:$0xf]
    %v2217 = vld [vmem:[%s2206 + $0x28] sm:$0xf]
    %v2218 = vld [vmem:[%s2206 + $0x2c] sm:$0xf]
    %v2219 = vld [vmem:[%s2206 + $0x30] sm:$0xf]
    %v2220 = vld [vmem:[%s2206 + $0x34] sm:$0xf]
    %v2221 = vld [vmem:[%s2206 + $0x38] sm:$0xf]
    %v2222 = vld [vmem:[%s2206 + $0x3c] sm:$0xf]
    %v2239 = vunpack.c.l.b16 %v2207
    %v2240 = vunpack.c.l.b16 %v2208
    %v2241 = vunpack.c.l.b16 %v2209
    %v2242 = vunpack.c.l.b16 %v2210
    %v2243 = vunpack.c.l.b16 %v2211
    %v2244 = vunpack.c.l.b16 %v2212
    %v2245 = vunpack.c.l.b16 %v2213
    %v2246 = vunpack.c.l.b16 %v2214
    %v2247 = vunpack.c.l.b16 %v2215
    %v2248 = vunpack.c.l.b16 %v2216
    %v2249 = vunpack.c.l.b16 %v2217
    %v2250 = vunpack.c.l.b16 %v2218
    %v2251 = vunpack.c.l.b16 %v2219
    %v2252 = vunpack.c.l.b16 %v2220
    %v2253 = vunpack.c.l.b16 %v2221
    %v2254 = vunpack.c.l.b16 %v2222
    %v2255 = vpack.c.b16 %v2240, %v2239
    %v2256 = vpack.c.b16 %v2242, %v2241
    %v2257 = vpack.c.b16 %v2244, %v2243
    %v2258 = vpack.c.b16 %v2246, %v2245
    %v2259 = vpack.c.b16 %v2248, %v2247
    %v2260 = vpack.c.b16 %v2250, %v2249
    %v2261 = vpack.c.b16 %v2252, %v2251
    %v2262 = vpack.c.b16 %v2254, %v2253
    %2271 = vmatprep.subr.bf16.mxu0 0
    %2272 = vmatpush1.bf16.msra.mxu0 %v2255
    %2273 = vmatprep.subr.bf16.mxu0 0
    %2274 = vmatpush1.bf16.msra.mxu0 %v2256
    %2275 = vmatprep.subr.bf16.mxu0 0
    %2276 = vmatpush1.bf16.msra.mxu0 %v2257
    %2277 = vmatprep.subr.bf16.mxu0 0
    %2278 = vmatpush1.bf16.msra.mxu0 %v2258
    %2279 = vmatprep.subr.bf16.mxu0 0
    %2280 = vmatpush1.bf16.msra.mxu0 %v2259
    %2281 = vmatprep.subr.bf16.mxu0 0
    %2282 = vmatpush1.bf16.msra.mxu0 %v2260
    %2283 = vmatprep.subr.bf16.mxu0 0
    %2284 = vmatpush1.bf16.msra.mxu0 %v2261
    %2285 = vmatprep.subr.bf16.mxu0 0
    %2286 = vmatpush1.bf16.msra.mxu0 %v2262
    %2287 = vmatprep.subr.bf16.mxu0 0
    %2288 = vmatpush1.bf16.msra.mxu0 0
    %2289 = vmatprep.subr.bf16.mxu0 0
    %2290 = vmatpush1.bf16.msra.mxu0 0
    %2291 = vmatprep.subr.bf16.mxu0 0
    %2292 = vmatpush1.bf16.msra.mxu0 0
    %2293 = vmatprep.subr.bf16.mxu0 0
    %2294 = vmatpush1.bf16.msra.mxu0 0
    %2295 = vmatprep.subr.bf16.mxu0 0
    %2296 = vmatpush1.bf16.msra.mxu0 0
    %2297 = vmatprep.subr.bf16.mxu0 0
    %2298 = vmatpush1.bf16.msra.mxu0 0
    %2299 = vmatprep.subr.bf16.mxu0 0
    %2300 = vmatpush1.bf16.msra.mxu0 0
    %2301 = vmatprep.subr.bf16.mxu0 0
    %2302 = vmatpush1.bf16.msra.mxu0 0
    %2303 = vmatprep.mubr.bf16.mxu0 0
    %2304 = vmatmul.mubr.bf16.gmra.mrb[0].mxu0 %v2205
    %v2305 = vpop.f32.mrb[0].mxu0
    %v2306 = vadd.f32 0.0, %v2305
    %v2307 = vpop.f32.mrb[0].mxu0
    %v2308 = vpop.f32.mrb[0].mxu0
    %v2309 = vpop.f32.mrb[0].mxu0
    %2310 = vdwg.mxu0
    %2311 = vst [vmem:[#allocation7] sm:$0xff] %v2306
    %v2312 = vld [vmem:[#allocation7] sm:$0xff]
    %v2313 = vpack.c.bf16 %v2312, %v2312
    %s2314 = scalar_lea.vmem [#allocation5], 1344
    %v2315 = vld [vmem:[%s2314] sm:$0xf]
    %v2316 = vld [vmem:[%s2314 + $0x4] sm:$0xf]
    %v2317 = vld [vmem:[%s2314 + $0x8] sm:$0xf]
    %v2318 = vld [vmem:[%s2314 + $0xc] sm:$0xf]
    %v2319 = vld [vmem:[%s2314 + $0x10] sm:$0xf]
    %v2320 = vld [vmem:[%s2314 + $0x14] sm:$0xf]
    %v2321 = vld [vmem:[%s2314 + $0x18] sm:$0xf]
    %v2322 = vld [vmem:[%s2314 + $0x1c] sm:$0xf]
    %v2323 = vld [vmem:[%s2314 + $0x20] sm:$0xf]
    %v2324 = vld [vmem:[%s2314 + $0x24] sm:$0xf]
    %v2325 = vld [vmem:[%s2314 + $0x28] sm:$0xf]
    %v2326 = vld [vmem:[%s2314 + $0x2c] sm:$0xf]
    %v2327 = vld [vmem:[%s2314 + $0x30] sm:$0xf]
    %v2328 = vld [vmem:[%s2314 + $0x34] sm:$0xf]
    %v2329 = vld [vmem:[%s2314 + $0x38] sm:$0xf]
    %v2330 = vld [vmem:[%s2314 + $0x3c] sm:$0xf]
    %v2347 = vunpack.c.l.b16 %v2315
    %v2348 = vunpack.c.l.b16 %v2316
    %v2349 = vunpack.c.l.b16 %v2317
    %v2350 = vunpack.c.l.b16 %v2318
    %v2351 = vunpack.c.l.b16 %v2319
    %v2352 = vunpack.c.l.b16 %v2320
    %v2353 = vunpack.c.l.b16 %v2321
    %v2354 = vunpack.c.l.b16 %v2322
    %v2355 = vunpack.c.l.b16 %v2323
    %v2356 = vunpack.c.l.b16 %v2324
    %v2357 = vunpack.c.l.b16 %v2325
    %v2358 = vunpack.c.l.b16 %v2326
    %v2359 = vunpack.c.l.b16 %v2327
    %v2360 = vunpack.c.l.b16 %v2328
    %v2361 = vunpack.c.l.b16 %v2329
    %v2362 = vunpack.c.l.b16 %v2330
    %v2363 = vpack.c.b16 %v2348, %v2347
    %v2364 = vpack.c.b16 %v2350, %v2349
    %v2365 = vpack.c.b16 %v2352, %v2351
    %v2366 = vpack.c.b16 %v2354, %v2353
    %v2367 = vpack.c.b16 %v2356, %v2355
    %v2368 = vpack.c.b16 %v2358, %v2357
    %v2369 = vpack.c.b16 %v2360, %v2359
    %v2370 = vpack.c.b16 %v2362, %v2361
    %2379 = vmatprep.subr.bf16.mxu0 0
    %2380 = vmatpush1.bf16.msra.mxu0 %v2363
    %2381 = vmatprep.subr.bf16.mxu0 0
    %2382 = vmatpush1.bf16.msra.mxu0 %v2364
    %2383 = vmatprep.subr.bf16.mxu0 0
    %2384 = vmatpush1.bf16.msra.mxu0 %v2365
    %2385 = vmatprep.subr.bf16.mxu0 0
    %2386 = vmatpush1.bf16.msra.mxu0 %v2366
    %2387 = vmatprep.subr.bf16.mxu0 0
    %2388 = vmatpush1.bf16.msra.mxu0 %v2367
    %2389 = vmatprep.subr.bf16.mxu0 0
    %2390 = vmatpush1.bf16.msra.mxu0 %v2368
    %2391 = vmatprep.subr.bf16.mxu0 0
    %2392 = vmatpush1.bf16.msra.mxu0 %v2369
    %2393 = vmatprep.subr.bf16.mxu0 0
    %2394 = vmatpush1.bf16.msra.mxu0 %v2370
    %2395 = vmatprep.subr.bf16.mxu0 0
    %2396 = vmatpush1.bf16.msra.mxu0 0
    %2397 = vmatprep.subr.bf16.mxu0 0
    %2398 = vmatpush1.bf16.msra.mxu0 0
    %2399 = vmatprep.subr.bf16.mxu0 0
    %2400 = vmatpush1.bf16.msra.mxu0 0
    %2401 = vmatprep.subr.bf16.mxu0 0
    %2402 = vmatpush1.bf16.msra.mxu0 0
    %2403 = vmatprep.subr.bf16.mxu0 0
    %2404 = vmatpush1.bf16.msra.mxu0 0
    %2405 = vmatprep.subr.bf16.mxu0 0
    %2406 = vmatpush1.bf16.msra.mxu0 0
    %2407 = vmatprep.subr.bf16.mxu0 0
    %2408 = vmatpush1.bf16.msra.mxu0 0
    %2409 = vmatprep.subr.bf16.mxu0 0
    %2410 = vmatpush1.bf16.msra.mxu0 0
    %2411 = vmatprep.mubr.bf16.mxu0 0
    %2412 = vmatmul.mubr.bf16.gmra.mrb[0].mxu0 %v2313
    %v2413 = vpop.f32.mrb[0].mxu0
    %v2414 = vadd.f32 0.0, %v2413
    %v2415 = vpop.f32.mrb[0].mxu0
    %v2416 = vpop.f32.mrb[0].mxu0
    %v2417 = vpop.f32.mrb[0].mxu0
    %2418 = vdwg.mxu0
    %2419 = vst [vmem:[#allocation7] sm:$0xff] %v2414
    %v2420 = vld [vmem:[#allocation7] sm:$0xff]
    %v2421 = vpack.c.bf16 %v2420, %v2420
    %s2422 = scalar_lea.vmem [#allocation5], 1408
    %v2423 = vld [vmem:[%s2422] sm:$0xf]
    %v2424 = vld [vmem:[%s2422 + $0x4] sm:$0xf]
    %v2425 = vld [vmem:[%s2422 + $0x8] sm:$0xf]
    %v2426 = vld [vmem:[%s2422 + $0xc] sm:$0xf]
    %v2427 = vld [vmem:[%s2422 + $0x10] sm:$0xf]
    %v2428 = vld [vmem:[%s2422 + $0x14] sm:$0xf]
    %v2429 = vld [vmem:[%s2422 + $0x18] sm:$0xf]
    %v2430 = vld [vmem:[%s2422 + $0x1c] sm:$0xf]
    %v2431 = vld [vmem:[%s2422 + $0x20] sm:$0xf]
    %v2432 = vld [vmem:[%s2422 + $0x24] sm:$0xf]
    %v2433 = vld [vmem:[%s2422 + $0x28] sm:$0xf]
    %v2434 = vld [vmem:[%s2422 + $0x2c] sm:$0xf]
    %v2435 = vld [vmem:[%s2422 + $0x30] sm:$0xf]
    %v2436 = vld [vmem:[%s2422 + $0x34] sm:$0xf]
    %v2437 = vld [vmem:[%s2422 + $0x38] sm:$0xf]
    %v2438 = vld [vmem:[%s2422 + $0x3c] sm:$0xf]
    %v2455 = vunpack.c.l.b16 %v2423
    %v2456 = vunpack.c.l.b16 %v2424
    %v2457 = vunpack.c.l.b16 %v2425
    %v2458 = vunpack.c.l.b16 %v2426
    %v2459 = vunpack.c.l.b16 %v2427
    %v2460 = vunpack.c.l.b16 %v2428
    %v2461 = vunpack.c.l.b16 %v2429
    %v2462 = vunpack.c.l.b16 %v2430
    %v2463 = vunpack.c.l.b16 %v2431
    %v2464 = vunpack.c.l.b16 %v2432
    %v2465 = vunpack.c.l.b16 %v2433
    %v2466 = vunpack.c.l.b16 %v2434
    %v2467 = vunpack.c.l.b16 %v2435
    %v2468 = vunpack.c.l.b16 %v2436
    %v2469 = vunpack.c.l.b16 %v2437
    %v2470 = vunpack.c.l.b16 %v2438
    %v2471 = vpack.c.b16 %v2456, %v2455
    %v2472 = vpack.c.b16 %v2458, %v2457
    %v2473 = vpack.c.b16 %v2460, %v2459
    %v2474 = vpack.c.b16 %v2462, %v2461
    %v2475 = vpack.c.b16 %v2464, %v2463
    %v2476 = vpack.c.b16 %v2466, %v2465
    %v2477 = vpack.c.b16 %v2468, %v2467
    %v2478 = vpack.c.b16 %v2470, %v2469
    %2487 = vmatprep.subr.bf16.mxu0 0
    %2488 = vmatpush1.bf16.msra.mxu0 %v2471
    %2489 = vmatprep.subr.bf16.mxu0 0
    %2490 = vmatpush1.bf16.msra.mxu0 %v2472
    %2491 = vmatprep.subr.bf16.mxu0 0
    %2492 = vmatpush1.bf16.msra.mxu0 %v2473
    %2493 = vmatprep.subr.bf16.mxu0 0
    %2494 = vmatpush1.bf16.msra.mxu0 %v2474
    %2495 = vmatprep.subr.bf16.mxu0 0
    %2496 = vmatpush1.bf16.msra.mxu0 %v2475
    %2497 = vmatprep.subr.bf16.mxu0 0
    %2498 = vmatpush1.bf16.msra.mxu0 %v2476
    %2499 = vmatprep.subr.bf16.mxu0 0
    %2500 = vmatpush1.bf16.msra.mxu0 %v2477
    %2501 = vmatprep.subr.bf16.mxu0 0
    %2502 = vmatpush1.bf16.msra.mxu0 %v2478
    %2503 = vmatprep.subr.bf16.mxu0 0
    %2504 = vmatpush1.bf16.msra.mxu0 0
    %2505 = vmatprep.subr.bf16.mxu0 0
    %2506 = vmatpush1.bf16.msra.mxu0 0
    %2507 = vmatprep.subr.bf16.mxu0 0
    %2508 = vmatpush1.bf16.msra.mxu0 0
    %2509 = vmatprep.subr.bf16.mxu0 0
    %2510 = vmatpush1.bf16.msra.mxu0 0
    %2511 = vmatprep.subr.bf16.mxu0 0
    %2512 = vmatpush1.bf16.msra.mxu0 0
    %2513 = vmatprep.subr.bf16.mxu0 0
    %2514 = vmatpush1.bf16.msra.mxu0 0
    %2515 = vmatprep.subr.bf16.mxu0 0
    %2516 = vmatpush1.bf16.msra.mxu0 0
    %2517 = vmatprep.subr.bf16.mxu0 0
    %2518 = vmatpush1.bf16.msra.mxu0 0
    %2519 = vmatprep.mubr.bf16.mxu0 0
    %2520 = vmatmul.mubr.bf16.gmra.mrb[0].mxu0 %v2421
    %v2521 = vpop.f32.mrb[0].mxu0
    %v2522 = vadd.f32 0.0, %v2521
    %v2523 = vpop.f32.mrb[0].mxu0
    %v2524 = vpop.f32.mrb[0].mxu0
    %v2525 = vpop.f32.mrb[0].mxu0
    %2526 = vdwg.mxu0
    %2527 = vst [vmem:[#allocation7] sm:$0xff] %v2522
    %v2528 = vld [vmem:[#allocation7] sm:$0xff]
    %v2529 = vpack.c.bf16 %v2528, %v2528
    %s2530 = scalar_lea.vmem [#allocation5], 1472
    %v2531 = vld [vmem:[%s2530] sm:$0xf]
    %v2532 = vld [vmem:[%s2530 + $0x4] sm:$0xf]
    %v2533 = vld [vmem:[%s2530 + $0x8] sm:$0xf]
    %v2534 = vld [vmem:[%s2530 + $0xc] sm:$0xf]
    %v2535 = vld [vmem:[%s2530 + $0x10] sm:$0xf]
    %v2536 = vld [vmem:[%s2530 + $0x14] sm:$0xf]
    %v2537 = vld [vmem:[%s2530 + $0x18] sm:$0xf]
    %v2538 = vld [vmem:[%s2530 + $0x1c] sm:$0xf]
    %v2539 = vld [vmem:[%s2530 + $0x20] sm:$0xf]
    %v2540 = vld [vmem:[%s2530 + $0x24] sm:$0xf]
    %v2541 = vld [vmem:[%s2530 + $0x28] sm:$0xf]
    %v2542 = vld [vmem:[%s2530 + $0x2c] sm:$0xf]
    %v2543 = vld [vmem:[%s2530 + $0x30] sm:$0xf]
    %v2544 = vld [vmem:[%s2530 + $0x34] sm:$0xf]
    %v2545 = vld [vmem:[%s2530 + $0x38] sm:$0xf]
    %v2546 = vld [vmem:[%s2530 + $0x3c] sm:$0xf]
    %v2563 = vunpack.c.l.b16 %v2531
    %v2564 = vunpack.c.l.b16 %v2532
    %v2565 = vunpack.c.l.b16 %v2533
    %v2566 = vunpack.c.l.b16 %v2534
    %v2567 = vunpack.c.l.b16 %v2535
    %v2568 = vunpack.c.l.b16 %v2536
    %v2569 = vunpack.c.l.b16 %v2537
    %v2570 = vunpack.c.l.b16 %v2538
    %v2571 = vunpack.c.l.b16 %v2539
    %v2572 = vunpack.c.l.b16 %v2540
    %v2573 = vunpack.c.l.b16 %v2541
    %v2574 = vunpack.c.l.b16 %v2542
    %v2575 = vunpack.c.l.b16 %v2543
    %v2576 = vunpack.c.l.b16 %v2544
    %v2577 = vunpack.c.l.b16 %v2545
    %v2578 = vunpack.c.l.b16 %v2546
    %v2579 = vpack.c.b16 %v2564, %v2563
    %v2580 = vpack.c.b16 %v2566, %v2565
    %v2581 = vpack.c.b16 %v2568, %v2567
    %v2582 = vpack.c.b16 %v2570, %v2569
    %v2583 = vpack.c.b16 %v2572, %v2571
    %v2584 = vpack.c.b16 %v2574, %v2573
    %v2585 = vpack.c.b16 %v2576, %v2575
    %v2586 = vpack.c.b16 %v2578, %v2577
    %2595 = vmatprep.subr.bf16.mxu0 0
    %2596 = vmatpush1.bf16.msra.mxu0 %v2579
    %2597 = vmatprep.subr.bf16.mxu0 0
    %2598 = vmatpush1.bf16.msra.mxu0 %v2580
    %2599 = vmatprep.subr.bf16.mxu0 0
    %2600 = vmatpush1.bf16.msra.mxu0 %v2581
    %2601 = vmatprep.subr.bf16.mxu0 0
    %2602 = vmatpush1.bf16.msra.mxu0 %v2582
    %2603 = vmatprep.subr.bf16.mxu0 0
    %2604 = vmatpush1.bf16.msra.mxu0 %v2583
    %2605 = vmatprep.subr.bf16.mxu0 0
    %2606 = vmatpush1.bf16.msra.mxu0 %v2584
    %2607 = vmatprep.subr.bf16.mxu0 0
    %2608 = vmatpush1.bf16.msra.mxu0 %v2585
    %2609 = vmatprep.subr.bf16.mxu0 0
    %2610 = vmatpush1.bf16.msra.mxu0 %v2586
    %2611 = vmatprep.subr.bf16.mxu0 0
    %2612 = vmatpush1.bf16.msra.mxu0 0
    %2613 = vmatprep.subr.bf16.mxu0 0
    %2614 = vmatpush1.bf16.msra.mxu0 0
    %2615 = vmatprep.subr.bf16.mxu0 0
    %2616 = vmatpush1.bf16.msra.mxu0 0
    %2617 = vmatprep.subr.bf16.mxu0 0
    %2618 = vmatpush1.bf16.msra.mxu0 0
    %2619 = vmatprep.subr.bf16.mxu0 0
    %2620 = vmatpush1.bf16.msra.mxu0 0
    %2621 = vmatprep.subr.bf16.mxu0 0
    %2622 = vmatpush1.bf16.msra.mxu0 0
    %2623 = vmatprep.subr.bf16.mxu0 0
    %2624 = vmatpush1.bf16.msra.mxu0 0
    %2625 = vmatprep.subr.bf16.mxu0 0
    %2626 = vmatpush1.bf16.msra.mxu0 0
    %2627 = vmatprep.mubr.bf16.mxu0 0
    %2628 = vmatmul.mubr.bf16.gmra.mrb[0].mxu0 %v2529
    %v2629 = vpop.f32.mrb[0].mxu0
    %v2630 = vadd.f32 0.0, %v2629
    %v2631 = vpop.f32.mrb[0].mxu0
    %v2632 = vpop.f32.mrb[0].mxu0
    %v2633 = vpop.f32.mrb[0].mxu0
    %2634 = vdwg.mxu0
    %2635 = vst [vmem:[#allocation7] sm:$0xff] %v2630
    %v2636 = vld [vmem:[#allocation7] sm:$0xff]
    %v2637 = vpack.c.bf16 %v2636, %v2636
    %s2638 = scalar_lea.vmem [#allocation5], 1536
    %v2639 = vld [vmem:[%s2638] sm:$0xf]
    %v2640 = vld [vmem:[%s2638 + $0x4] sm:$0xf]
    %v2641 = vld [vmem:[%s2638 + $0x8] sm:$0xf]
    %v2642 = vld [vmem:[%s2638 + $0xc] sm:$0xf]
    %v2643 = vld [vmem:[%s2638 + $0x10] sm:$0xf]
    %v2644 = vld [vmem:[%s2638 + $0x14] sm:$0xf]
    %v2645 = vld [vmem:[%s2638 + $0x18] sm:$0xf]
    %v2646 = vld [vmem:[%s2638 + $0x1c] sm:$0xf]
    %v2647 = vld [vmem:[%s2638 + $0x20] sm:$0xf]
    %v2648 = vld [vmem:[%s2638 + $0x24] sm:$0xf]
    %v2649 = vld [vmem:[%s2638 + $0x28] sm:$0xf]
    %v2650 = vld [vmem:[%s2638 + $0x2c] sm:$0xf]
    %v2651 = vld [vmem:[%s2638 + $0x30] sm:$0xf]
    %v2652 = vld [vmem:[%s2638 + $0x34] sm:$0xf]
    %v2653 = vld [vmem:[%s2638 + $0x38] sm:$0xf]
    %v2654 = vld [vmem:[%s2638 + $0x3c] sm:$0xf]
    %v2671 = vunpack.c.l.b16 %v2639
    %v2672 = vunpack.c.l.b16 %v2640
    %v2673 = vunpack.c.l.b16 %v2641
    %v2674 = vunpack.c.l.b16 %v2642
    %v2675 = vunpack.c.l.b16 %v2643
    %v2676 = vunpack.c.l.b16 %v2644
    %v2677 = vunpack.c.l.b16 %v2645
    %v2678 = vunpack.c.l.b16 %v2646
    %v2679 = vunpack.c.l.b16 %v2647
    %v2680 = vunpack.c.l.b16 %v2648
    %v2681 = vunpack.c.l.b16 %v2649
    %v2682 = vunpack.c.l.b16 %v2650
    %v2683 = vunpack.c.l.b16 %v2651
    %v2684 = vunpack.c.l.b16 %v2652
    %v2685 = vunpack.c.l.b16 %v2653
    %v2686 = vunpack.c.l.b16 %v2654
    %v2687 = vpack.c.b16 %v2672, %v2671
    %v2688 = vpack.c.b16 %v2674, %v2673
    %v2689 = vpack.c.b16 %v2676, %v2675
    %v2690 = vpack.c.b16 %v2678, %v2677
    %v2691 = vpack.c.b16 %v2680, %v2679
    %v2692 = vpack.c.b16 %v2682, %v2681
    %v2693 = vpack.c.b16 %v2684, %v2683
    %v2694 = vpack.c.b16 %v2686, %v2685
    %2703 = vmatprep.subr.bf16.mxu0 0
    %2704 = vmatpush1.bf16.msra.mxu0 %v2687
    %2705 = vmatprep.subr.bf16.mxu0 0
    %2706 = vmatpush1.bf16.msra.mxu0 %v2688
    %2707 = vmatprep.subr.bf16.mxu0 0
    %2708 = vmatpush1.bf16.msra.mxu0 %v2689
    %2709 = vmatprep.subr.bf16.mxu0 0
    %2710 = vmatpush1.bf16.msra.mxu0 %v2690
    %2711 = vmatprep.subr.bf16.mxu0 0
    %2712 = vmatpush1.bf16.msra.mxu0 %v2691
    %2713 = vmatprep.subr.bf16.mxu0 0
    %2714 = vmatpush1.bf16.msra.mxu0 %v2692
    %2715 = vmatprep.subr.bf16.mxu0 0
    %2716 = vmatpush1.bf16.msra.mxu0 %v2693
    %2717 = vmatprep.subr.bf16.mxu0 0
    %2718 = vmatpush1.bf16.msra.mxu0 %v2694
    %2719 = vmatprep.subr.bf16.mxu0 0
    %2720 = vmatpush1.bf16.msra.mxu0 0
    %2721 = vmatprep.subr.bf16.mxu0 0
    %2722 = vmatpush1.bf16.msra.mxu0 0
    %2723 = vmatprep.subr.bf16.mxu0 0
    %2724 = vmatpush1.bf16.msra.mxu0 0
    %2725 = vmatprep.subr.bf16.mxu0 0
    %2726 = vmatpush1.bf16.msra.mxu0 0
    %2727 = vmatprep.subr.bf16.mxu0 0
    %2728 = vmatpush1.bf16.msra.mxu0 0
    %2729 = vmatprep.subr.bf16.mxu0 0
    %2730 = vmatpush1.bf16.msra.mxu0 0
    %2731 = vmatprep.subr.bf16.mxu0 0
    %2732 = vmatpush1.bf16.msra.mxu0 0
    %2733 = vmatprep.subr.bf16.mxu0 0
    %2734 = vmatpush1.bf16.msra.mxu0 0
    %2735 = vmatprep.mubr.bf16.mxu0 0
    %2736 = vmatmul.mubr.bf16.gmra.mrb[0].mxu0 %v2637
    %v2737 = vpop.f32.mrb[0].mxu0
    %v2738 = vadd.f32 0.0, %v2737
    %v2739 = vpop.f32.mrb[0].mxu0
    %v2740 = vpop.f32.mrb[0].mxu0
    %v2741 = vpop.f32.mrb[0].mxu0
    %2742 = vdwg.mxu0
    %2743 = vst [vmem:[#allocation7] sm:$0xff] %v2738
    %v2744 = vld [vmem:[#allocation7] sm:$0xff]
    %v2745 = vpack.c.bf16 %v2744, %v2744
    %s2746 = scalar_lea.vmem [#allocation5], 1600
    %v2747 = vld [vmem:[%s2746] sm:$0xf]
    %v2748 = vld [vmem:[%s2746 + $0x4] sm:$0xf]
    %v2749 = vld [vmem:[%s2746 + $0x8] sm:$0xf]
    %v2750 = vld [vmem:[%s2746 + $0xc] sm:$0xf]
    %v2751 = vld [vmem:[%s2746 + $0x10] sm:$0xf]
    %v2752 = vld [vmem:[%s2746 + $0x14] sm:$0xf]
    %v2753 = vld [vmem:[%s2746 + $0x18] sm:$0xf]
    %v2754 = vld [vmem:[%s2746 + $0x1c] sm:$0xf]
    %v2755 = vld [vmem:[%s2746 + $0x20] sm:$0xf]
    %v2756 = vld [vmem:[%s2746 + $0x24] sm:$0xf]
    %v2757 = vld [vmem:[%s2746 + $0x28] sm:$0xf]
    %v2758 = vld [vmem:[%s2746 + $0x2c] sm:$0xf]
    %v2759 = vld [vmem:[%s2746 + $0x30] sm:$0xf]
    %v2760 = vld [vmem:[%s2746 + $0x34] sm:$0xf]
    %v2761 = vld [vmem:[%s2746 + $0x38] sm:$0xf]
    %v2762 = vld [vmem:[%s2746 + $0x3c] sm:$0xf]
    %v2779 = vunpack.c.l.b16 %v2747
    %v2780 = vunpack.c.l.b16 %v2748
    %v2781 = vunpack.c.l.b16 %v2749
    %v2782 = vunpack.c.l.b16 %v2750
    %v2783 = vunpack.c.l.b16 %v2751
    %v2784 = vunpack.c.l.b16 %v2752
    %v2785 = vunpack.c.l.b16 %v2753
    %v2786 = vunpack.c.l.b16 %v2754
    %v2787 = vunpack.c.l.b16 %v2755
    %v2788 = vunpack.c.l.b16 %v2756
    %v2789 = vunpack.c.l.b16 %v2757
    %v2790 = vunpack.c.l.b16 %v2758
    %v2791 = vunpack.c.l.b16 %v2759
    %v2792 = vunpack.c.l.b16 %v2760
    %v2793 = vunpack.c.l.b16 %v2761
    %v2794 = vunpack.c.l.b16 %v2762
    %v2795 = vpack.c.b16 %v2780, %v2779
    %v2796 = vpack.c.b16 %v2782, %v2781
    %v2797 = vpack.c.b16 %v2784, %v2783
    %v2798 = vpack.c.b16 %v2786, %v2785
    %v2799 = vpack.c.b16 %v2788, %v2787
    %v2800 = vpack.c.b16 %v2790, %v2789
    %v2801 = vpack.c.b16 %v2792, %v2791
    %v2802 = vpack.c.b16 %v2794, %v2793
    %2811 = vmatprep.subr.bf16.mxu0 0
    %2812 = vmatpush1.bf16.msra.mxu0 %v2795
    %2813 = vmatprep.subr.bf16.mxu0 0
    %2814 = vmatpush1.bf16.msra.mxu0 %v2796
    %2815 = vmatprep.subr.bf16.mxu0 0
    %2816 = vmatpush1.bf16.msra.mxu0 %v2797
    %2817 = vmatprep.subr.bf16.mxu0 0
    %2818 = vmatpush1.bf16.msra.mxu0 %v2798
    %2819 = vmatprep.subr.bf16.mxu0 0
    %2820 = vmatpush1.bf16.msra.mxu0 %v2799
    %2821 = vmatprep.subr.bf16.mxu0 0
    %2822 = vmatpush1.bf16.msra.mxu0 %v2800
    %2823 = vmatprep.subr.bf16.mxu0 0
    %2824 = vmatpush1.bf16.msra.mxu0 %v2801
    %2825 = vmatprep.subr.bf16.mxu0 0
    %2826 = vmatpush1.bf16.msra.mxu0 %v2802
    %2827 = vmatprep.subr.bf16.mxu0 0
    %2828 = vmatpush1.bf16.msra.mxu0 0
    %2829 = vmatprep.subr.bf16.mxu0 0
    %2830 = vmatpush1.bf16.msra.mxu0 0
    %2831 = vmatprep.subr.bf16.mxu0 0
    %2832 = vmatpush1.bf16.msra.mxu0 0
    %2833 = vmatprep.subr.bf16.mxu0 0
    %2834 = vmatpush1.bf16.msra.mxu0 0
    %2835 = vmatprep.subr.bf16.mxu0 0
    %2836 = vmatpush1.bf16.msra.mxu0 0
    %2837 = vmatprep.subr.bf16.mxu0 0
    %2838 = vmatpush1.bf16.msra.mxu0 0
    %2839 = vmatprep.subr.bf16.mxu0 0
    %2840 = vmatpush1.bf16.msra.mxu0 0
    %2841 = vmatprep.subr.bf16.mxu0 0
    %2842 = vmatpush1.bf16.msra.mxu0 0
    %2843 = vmatprep.mubr.bf16.mxu0 0
    %2844 = vmatmul.mubr.bf16.gmra.mrb[0].mxu0 %v2745
    %v2845 = vpop.f32.mrb[0].mxu0
    %v2846 = vadd.f32 0.0, %v2845
    %v2847 = vpop.f32.mrb[0].mxu0
    %v2848 = vpop.f32.mrb[0].mxu0
    %v2849 = vpop.f32.mrb[0].mxu0
    %2850 = vdwg.mxu0
    %2851 = vst [vmem:[#allocation7] sm:$0xff] %v2846
    %v2852 = vld [vmem:[#allocation7] sm:$0xff]
    %v2853 = vpack.c.bf16 %v2852, %v2852
    %s2854 = scalar_lea.vmem [#allocation5], 1664
    %v2855 = vld [vmem:[%s2854] sm:$0xf]
    %v2856 = vld [vmem:[%s2854 + $0x4] sm:$0xf]
    %v2857 = vld [vmem:[%s2854 + $0x8] sm:$0xf]
    %v2858 = vld [vmem:[%s2854 + $0xc] sm:$0xf]
    %v2859 = vld [vmem:[%s2854 + $0x10] sm:$0xf]
    %v2860 = vld [vmem:[%s2854 + $0x14] sm:$0xf]
    %v2861 = vld [vmem:[%s2854 + $0x18] sm:$0xf]
    %v2862 = vld [vmem:[%s2854 + $0x1c] sm:$0xf]
    %v2863 = vld [vmem:[%s2854 + $0x20] sm:$0xf]
    %v2864 = vld [vmem:[%s2854 + $0x24] sm:$0xf]
    %v2865 = vld [vmem:[%s2854 + $0x28] sm:$0xf]
    %v2866 = vld [vmem:[%s2854 + $0x2c] sm:$0xf]
    %v2867 = vld [vmem:[%s2854 + $0x30] sm:$0xf]
    %v2868 = vld [vmem:[%s2854 + $0x34] sm:$0xf]
    %v2869 = vld [vmem:[%s2854 + $0x38] sm:$0xf]
    %v2870 = vld [vmem:[%s2854 + $0x3c] sm:$0xf]
    %v2887 = vunpack.c.l.b16 %v2855
    %v2888 = vunpack.c.l.b16 %v2856
    %v2889 = vunpack.c.l.b16 %v2857
    %v2890 = vunpack.c.l.b16 %v2858
    %v2891 = vunpack.c.l.b16 %v2859
    %v2892 = vunpack.c.l.b16 %v2860
    %v2893 = vunpack.c.l.b16 %v2861
    %v2894 = vunpack.c.l.b16 %v2862
    %v2895 = vunpack.c.l.b16 %v2863
    %v2896 = vunpack.c.l.b16 %v2864
    %v2897 = vunpack.c.l.b16 %v2865
    %v2898 = vunpack.c.l.b16 %v2866
    %v2899 = vunpack.c.l.b16 %v2867
    %v2900 = vunpack.c.l.b16 %v2868
    %v2901 = vunpack.c.l.b16 %v2869
    %v2902 = vunpack.c.l.b16 %v2870
    %v2903 = vpack.c.b16 %v2888, %v2887
    %v2904 = vpack.c.b16 %v2890, %v2889
    %v2905 = vpack.c.b16 %v2892, %v2891
    %v2906 = vpack.c.b16 %v2894, %v2893
    %v2907 = vpack.c.b16 %v2896, %v2895
    %v2908 = vpack.c.b16 %v2898, %v2897
    %v2909 = vpack.c.b16 %v2900, %v2899
    %v2910 = vpack.c.b16 %v2902, %v2901
    %2919 = vmatprep.subr.bf16.mxu0 0
    %2920 = vmatpush1.bf16.msra.mxu0 %v2903
    %2921 = vmatprep.subr.bf16.mxu0 0
    %2922 = vmatpush1.bf16.msra.mxu0 %v2904
    %2923 = vmatprep.subr.bf16.mxu0 0
    %2924 = vmatpush1.bf16.msra.mxu0 %v2905
    %2925 = vmatprep.subr.bf16.mxu0 0
    %2926 = vmatpush1.bf16.msra.mxu0 %v2906
    %2927 = vmatprep.subr.bf16.mxu0 0
    %2928 = vmatpush1.bf16.msra.mxu0 %v2907
    %2929 = vmatprep.subr.bf16.mxu0 0
    %2930 = vmatpush1.bf16.msra.mxu0 %v2908
    %2931 = vmatprep.subr.bf16.mxu0 0
    %2932 = vmatpush1.bf16.msra.mxu0 %v2909
    %2933 = vmatprep.subr.bf16.mxu0 0
    %2934 = vmatpush1.bf16.msra.mxu0 %v2910
    %2935 = vmatprep.subr.bf16.mxu0 0
    %2936 = vmatpush1.bf16.msra.mxu0 0
    %2937 = vmatprep.subr.bf16.mxu0 0
    %2938 = vmatpush1.bf16.msra.mxu0 0
    %2939 = vmatprep.subr.bf16.mxu0 0
    %2940 = vmatpush1.bf16.msra.mxu0 0
    %2941 = vmatprep.subr.bf16.mxu0 0
    %2942 = vmatpush1.bf16.msra.mxu0 0
    %2943 = vmatprep.subr.bf16.mxu0 0
    %2944 = vmatpush1.bf16.msra.mxu0 0
    %2945 = vmatprep.subr.bf16.mxu0 0
    %2946 = vmatpush1.bf16.msra.mxu0 0
    %2947 = vmatprep.subr.bf16.mxu0 0
    %2948 = vmatpush1.bf16.msra.mxu0 0
    %2949 = vmatprep.subr.bf16.mxu0 0
    %2950 = vmatpush1.bf16.msra.mxu0 0
    %2951 = vmatprep.mubr.bf16.mxu0 0
    %2952 = vmatmul.mubr.bf16.gmra.mrb[0].mxu0 %v2853
    %v2953 = vpop.f32.mrb[0].mxu0
    %v2954 = vadd.f32 0.0, %v2953
    %v2955 = vpop.f32.mrb[0].mxu0
    %v2956 = vpop.f32.mrb[0].mxu0
    %v2957 = vpop.f32.mrb[0].mxu0
    %2958 = vdwg.mxu0
    %2959 = vst [vmem:[#allocation7] sm:$0xff] %v2954
    %v2960 = vld [vmem:[#allocation7] sm:$0xff]
    %v2961 = vpack.c.bf16 %v2960, %v2960
    %s2962 = scalar_lea.vmem [#allocation5], 1728
    %v2963 = vld [vmem:[%s2962] sm:$0xf]
    %v2964 = vld [vmem:[%s2962 + $0x4] sm:$0xf]
    %v2965 = vld [vmem:[%s2962 + $0x8] sm:$0xf]
    %v2966 = vld [vmem:[%s2962 + $0xc] sm:$0xf]
    %v2967 = vld [vmem:[%s2962 + $0x10] sm:$0xf]
    %v2968 = vld [vmem:[%s2962 + $0x14] sm:$0xf]
    %v2969 = vld [vmem:[%s2962 + $0x18] sm:$0xf]
    %v2970 = vld [vmem:[%s2962 + $0x1c] sm:$0xf]
    %v2971 = vld [vmem:[%s2962 + $0x20] sm:$0xf]
    %v2972 = vld [vmem:[%s2962 + $0x24] sm:$0xf]
    %v2973 = vld [vmem:[%s2962 + $0x28] sm:$0xf]
    %v2974 = vld [vmem:[%s2962 + $0x2c] sm:$0xf]
    %v2975 = vld [vmem:[%s2962 + $0x30] sm:$0xf]
    %v2976 = vld [vmem:[%s2962 + $0x34] sm:$0xf]
    %v2977 = vld [vmem:[%s2962 + $0x38] sm:$0xf]
    %v2978 = vld [vmem:[%s2962 + $0x3c] sm:$0xf]
    %v2995 = vunpack.c.l.b16 %v2963
    %v2996 = vunpack.c.l.b16 %v2964
    %v2997 = vunpack.c.l.b16 %v2965
    %v2998 = vunpack.c.l.b16 %v2966
    %v2999 = vunpack.c.l.b16 %v2967
    %v3000 = vunpack.c.l.b16 %v2968
    %v3001 = vunpack.c.l.b16 %v2969
    %v3002 = vunpack.c.l.b16 %v2970
    %v3003 = vunpack.c.l.b16 %v2971
    %v3004 = vunpack.c.l.b16 %v2972
    %v3005 = vunpack.c.l.b16 %v2973
    %v3006 = vunpack.c.l.b16 %v2974
    %v3007 = vunpack.c.l.b16 %v2975
    %v3008 = vunpack.c.l.b16 %v2976
    %v3009 = vunpack.c.l.b16 %v2977
    %v3010 = vunpack.c.l.b16 %v2978
    %v3011 = vpack.c.b16 %v2996, %v2995
    %v3012 = vpack.c.b16 %v2998, %v2997
    %v3013 = vpack.c.b16 %v3000, %v2999
    %v3014 = vpack.c.b16 %v3002, %v3001
    %v3015 = vpack.c.b16 %v3004, %v3003
    %v3016 = vpack.c.b16 %v3006, %v3005
    %v3017 = vpack.c.b16 %v3008, %v3007
    %v3018 = vpack.c.b16 %v3010, %v3009
    %3027 = vmatprep.subr.bf16.mxu0 0
    %3028 = vmatpush1.bf16.msra.mxu0 %v3011
    %3029 = vmatprep.subr.bf16.mxu0 0
    %3030 = vmatpush1.bf16.msra.mxu0 %v3012
    %3031 = vmatprep.subr.bf16.mxu0 0
    %3032 = vmatpush1.bf16.msra.mxu0 %v3013
    %3033 = vmatprep.subr.bf16.mxu0 0
    %3034 = vmatpush1.bf16.msra.mxu0 %v3014
    %3035 = vmatprep.subr.bf16.mxu0 0
    %3036 = vmatpush1.bf16.msra.mxu0 %v3015
    %3037 = vmatprep.subr.bf16.mxu0 0
    %3038 = vmatpush1.bf16.msra.mxu0 %v3016
    %3039 = vmatprep.subr.bf16.mxu0 0
    %3040 = vmatpush1.bf16.msra.mxu0 %v3017
    %3041 = vmatprep.subr.bf16.mxu0 0
    %3042 = vmatpush1.bf16.msra.mxu0 %v3018
    %3043 = vmatprep.subr.bf16.mxu0 0
    %3044 = vmatpush1.bf16.msra.mxu0 0
    %3045 = vmatprep.subr.bf16.mxu0 0
    %3046 = vmatpush1.bf16.msra.mxu0 0
    %3047 = vmatprep.subr.bf16.mxu0 0
    %3048 = vmatpush1.bf16.msra.mxu0 0
    %3049 = vmatprep.subr.bf16.mxu0 0
    %3050 = vmatpush1.bf16.msra.mxu0 0
    %3051 = vmatprep.subr.bf16.mxu0 0
    %3052 = vmatpush1.bf16.msra.mxu0 0
    %3053 = vmatprep.subr.bf16.mxu0 0
    %3054 = vmatpush1.bf16.msra.mxu0 0
    %3055 = vmatprep.subr.bf16.mxu0 0
    %3056 = vmatpush1.bf16.msra.mxu0 0
    %3057 = vmatprep.subr.bf16.mxu0 0
    %3058 = vmatpush1.bf16.msra.mxu0 0
    %3059 = vmatprep.mubr.bf16.mxu0 0
    %3060 = vmatmul.mubr.bf16.gmra.mrb[0].mxu0 %v2961
    %v3061 = vpop.f32.mrb[0].mxu0
    %v3062 = vadd.f32 0.0, %v3061
    %v3063 = vpop.f32.mrb[0].mxu0
    %v3064 = vpop.f32.mrb[0].mxu0
    %v3065 = vpop.f32.mrb[0].mxu0
    %3066 = vdwg.mxu0
    %3067 = vst [vmem:[#allocation7] sm:$0xff] %v3062
    %v3068 = vld [vmem:[#allocation7] sm:$0xff]
    %v3069 = vpack.c.bf16 %v3068, %v3068
    %s3070 = scalar_lea.vmem [#allocation5], 1792
    %v3071 = vld [vmem:[%s3070] sm:$0xf]
    %v3072 = vld [vmem:[%s3070 + $0x4] sm:$0xf]
    %v3073 = vld [vmem:[%s3070 + $0x8] sm:$0xf]
    %v3074 = vld [vmem:[%s3070 + $0xc] sm:$0xf]
    %v3075 = vld [vmem:[%s3070 + $0x10] sm:$0xf]
    %v3076 = vld [vmem:[%s3070 + $0x14] sm:$0xf]
    %v3077 = vld [vmem:[%s3070 + $0x18] sm:$0xf]
    %v3078 = vld [vmem:[%s3070 + $0x1c] sm:$0xf]
    %v3079 = vld [vmem:[%s3070 + $0x20] sm:$0xf]
    %v3080 = vld [vmem:[%s3070 + $0x24] sm:$0xf]
    %v3081 = vld [vmem:[%s3070 + $0x28] sm:$0xf]
    %v3082 = vld [vmem:[%s3070 + $0x2c] sm:$0xf]
    %v3083 = vld [vmem:[%s3070 + $0x30] sm:$0xf]
    %v3084 = vld [vmem:[%s3070 + $0x34] sm:$0xf]
    %v3085 = vld [vmem:[%s3070 + $0x38] sm:$0xf]
    %v3086 = vld [vmem:[%s3070 + $0x3c] sm:$0xf]
    %v3103 = vunpack.c.l.b16 %v3071
    %v3104 = vunpack.c.l.b16 %v3072
    %v3105 = vunpack.c.l.b16 %v3073
    %v3106 = vunpack.c.l.b16 %v3074
    %v3107 = vunpack.c.l.b16 %v3075
    %v3108 = vunpack.c.l.b16 %v3076
    %v3109 = vunpack.c.l.b16 %v3077
    %v3110 = vunpack.c.l.b16 %v3078
    %v3111 = vunpack.c.l.b16 %v3079
    %v3112 = vunpack.c.l.b16 %v3080
    %v3113 = vunpack.c.l.b16 %v3081
    %v3114 = vunpack.c.l.b16 %v3082
    %v3115 = vunpack.c.l.b16 %v3083
    %v3116 = vunpack.c.l.b16 %v3084
    %v3117 = vunpack.c.l.b16 %v3085
    %v3118 = vunpack.c.l.b16 %v3086
    %v3119 = vpack.c.b16 %v3104, %v3103
    %v3120 = vpack.c.b16 %v3106, %v3105
    %v3121 = vpack.c.b16 %v3108, %v3107
    %v3122 = vpack.c.b16 %v3110, %v3109
    %v3123 = vpack.c.b16 %v3112, %v3111
    %v3124 = vpack.c.b16 %v3114, %v3113
    %v3125 = vpack.c.b16 %v3116, %v3115
    %v3126 = vpack.c.b16 %v3118, %v3117
    %3135 = vmatprep.subr.bf16.mxu0 0
    %3136 = vmatpush1.bf16.msra.mxu0 %v3119
    %3137 = vmatprep.subr.bf16.mxu0 0
    %3138 = vmatpush1.bf16.msra.mxu0 %v3120
    %3139 = vmatprep.subr.bf16.mxu0 0
    %3140 = vmatpush1.bf16.msra.mxu0 %v3121
    %3141 = vmatprep.subr.bf16.mxu0 0
    %3142 = vmatpush1.bf16.msra.mxu0 %v3122
    %3143 = vmatprep.subr.bf16.mxu0 0
    %3144 = vmatpush1.bf16.msra.mxu0 %v3123
    %3145 = vmatprep.subr.bf16.mxu0 0
    %3146 = vmatpush1.bf16.msra.mxu0 %v3124
    %3147 = vmatprep.subr.bf16.mxu0 0
    %3148 = vmatpush1.bf16.msra.mxu0 %v3125
    %3149 = vmatprep.subr.bf16.mxu0 0
    %3150 = vmatpush1.bf16.msra.mxu0 %v3126
    %3151 = vmatprep.subr.bf16.mxu0 0
    %3152 = vmatpush1.bf16.msra.mxu0 0
    %3153 = vmatprep.subr.bf16.mxu0 0
    %3154 = vmatpush1.bf16.msra.mxu0 0
    %3155 = vmatprep.subr.bf16.mxu0 0
    %3156 = vmatpush1.bf16.msra.mxu0 0
    %3157 = vmatprep.subr.bf16.mxu0 0
    %3158 = vmatpush1.bf16.msra.mxu0 0
    %3159 = vmatprep.subr.bf16.mxu0 0
    %3160 = vmatpush1.bf16.msra.mxu0 0
    %3161 = vmatprep.subr.bf16.mxu0 0
    %3162 = vmatpush1.bf16.msra.mxu0 0
    %3163 = vmatprep.subr.bf16.mxu0 0
    %3164 = vmatpush1.bf16.msra.mxu0 0
    %3165 = vmatprep.subr.bf16.mxu0 0
    %3166 = vmatpush1.bf16.msra.mxu0 0
    %3167 = vmatprep.mubr.bf16.mxu0 0
    %3168 = vmatmul.mubr.bf16.gmra.mrb[0].mxu0 %v3069
    %v3169 = vpop.f32.mrb[0].mxu0
    %v3170 = vadd.f32 0.0, %v3169
    %v3171 = vpop.f32.mrb[0].mxu0
    %v3172 = vpop.f32.mrb[0].mxu0
    %v3173 = vpop.f32.mrb[0].mxu0
    %3174 = vdwg.mxu0
    %3175 = vst [vmem:[#allocation7] sm:$0xff] %v3170
    %v3176 = vld [vmem:[#allocation7] sm:$0xff]
    %v3177 = vpack.c.bf16 %v3176, %v3176
    %s3178 = scalar_lea.vmem [#allocation5], 1856
    %v3179 = vld [vmem:[%s3178] sm:$0xf]
    %v3180 = vld [vmem:[%s3178 + $0x4] sm:$0xf]
    %v3181 = vld [vmem:[%s3178 + $0x8] sm:$0xf]
    %v3182 = vld [vmem:[%s3178 + $0xc] sm:$0xf]
    %v3183 = vld [vmem:[%s3178 + $0x10] sm:$0xf]
    %v3184 = vld [vmem:[%s3178 + $0x14] sm:$0xf]
    %v3185 = vld [vmem:[%s3178 + $0x18] sm:$0xf]
    %v3186 = vld [vmem:[%s3178 + $0x1c] sm:$0xf]
    %v3187 = vld [vmem:[%s3178 + $0x20] sm:$0xf]
    %v3188 = vld [vmem:[%s3178 + $0x24] sm:$0xf]
    %v3189 = vld [vmem:[%s3178 + $0x28] sm:$0xf]
    %v3190 = vld [vmem:[%s3178 + $0x2c] sm:$0xf]
    %v3191 = vld [vmem:[%s3178 + $0x30] sm:$0xf]
    %v3192 = vld [vmem:[%s3178 + $0x34] sm:$0xf]
    %v3193 = vld [vmem:[%s3178 + $0x38] sm:$0xf]
    %v3194 = vld [vmem:[%s3178 + $0x3c] sm:$0xf]
    %v3211 = vunpack.c.l.b16 %v3179
    %v3212 = vunpack.c.l.b16 %v3180
    %v3213 = vunpack.c.l.b16 %v3181
    %v3214 = vunpack.c.l.b16 %v3182
    %v3215 = vunpack.c.l.b16 %v3183
    %v3216 = vunpack.c.l.b16 %v3184
    %v3217 = vunpack.c.l.b16 %v3185
    %v3218 = vunpack.c.l.b16 %v3186
    %v3219 = vunpack.c.l.b16 %v3187
    %v3220 = vunpack.c.l.b16 %v3188
    %v3221 = vunpack.c.l.b16 %v3189
    %v3222 = vunpack.c.l.b16 %v3190
    %v3223 = vunpack.c.l.b16 %v3191
    %v3224 = vunpack.c.l.b16 %v3192
    %v3225 = vunpack.c.l.b16 %v3193
    %v3226 = vunpack.c.l.b16 %v3194
    %v3227 = vpack.c.b16 %v3212, %v3211
    %v3228 = vpack.c.b16 %v3214, %v3213
    %v3229 = vpack.c.b16 %v3216, %v3215
    %v3230 = vpack.c.b16 %v3218, %v3217
    %v3231 = vpack.c.b16 %v3220, %v3219
    %v3232 = vpack.c.b16 %v3222, %v3221
    %v3233 = vpack.c.b16 %v3224, %v3223
    %v3234 = vpack.c.b16 %v3226, %v3225
    %3243 = vmatprep.subr.bf16.mxu0 0
    %3244 = vmatpush1.bf16.msra.mxu0 %v3227
    %3245 = vmatprep.subr.bf16.mxu0 0
    %3246 = vmatpush1.bf16.msra.mxu0 %v3228
    %3247 = vmatprep.subr.bf16.mxu0 0
    %3248 = vmatpush1.bf16.msra.mxu0 %v3229
    %3249 = vmatprep.subr.bf16.mxu0 0
    %3250 = vmatpush1.bf16.msra.mxu0 %v3230
    %3251 = vmatprep.subr.bf16.mxu0 0
    %3252 = vmatpush1.bf16.msra.mxu0 %v3231
    %3253 = vmatprep.subr.bf16.mxu0 0
    %3254 = vmatpush1.bf16.msra.mxu0 %v3232
    %3255 = vmatprep.subr.bf16.mxu0 0
    %3256 = vmatpush1.bf16.msra.mxu0 %v3233
    %3257 = vmatprep.subr.bf16.mxu0 0
    %3258 = vmatpush1.bf16.msra.mxu0 %v3234
    %3259 = vmatprep.subr.bf16.mxu0 0
    %3260 = vmatpush1.bf16.msra.mxu0 0
    %3261 = vmatprep.subr.bf16.mxu0 0
    %3262 = vmatpush1.bf16.msra.mxu0 0
    %3263 = vmatprep.subr.bf16.mxu0 0
    %3264 = vmatpush1.bf16.msra.mxu0 0
    %3265 = vmatprep.subr.bf16.mxu0 0
    %3266 = vmatpush1.bf16.msra.mxu0 0
    %3267 = vmatprep.subr.bf16.mxu0 0
    %3268 = vmatpush1.bf16.msra.mxu0 0
    %3269 = vmatprep.subr.bf16.mxu0 0
    %3270 = vmatpush1.bf16.msra.mxu0 0
    %3271 = vmatprep.subr.bf16.mxu0 0
    %3272 = vmatpush1.bf16.msra.mxu0 0
    %3273 = vmatprep.subr.bf16.mxu0 0
    %3274 = vmatpush1.bf16.msra.mxu0 0
    %3275 = vmatprep.mubr.bf16.mxu0 0
    %3276 = vmatmul.mubr.bf16.gmra.mrb[0].mxu0 %v3177
    %v3277 = vpop.f32.mrb[0].mxu0
    %v3278 = vadd.f32 0.0, %v3277
    %v3279 = vpop.f32.mrb[0].mxu0
    %v3280 = vpop.f32.mrb[0].mxu0
    %v3281 = vpop.f32.mrb[0].mxu0
    %3282 = vdwg.mxu0
    %3283 = vst [vmem:[#allocation7] sm:$0xff] %v3278
    %v3284 = vld [vmem:[#allocation7] sm:$0xff]
    %v3285 = vpack.c.bf16 %v3284, %v3284
    %s3286 = scalar_lea.vmem [#allocation5], 1920
    %v3287 = vld [vmem:[%s3286] sm:$0xf]
    %v3288 = vld [vmem:[%s3286 + $0x4] sm:$0xf]
    %v3289 = vld [vmem:[%s3286 + $0x8] sm:$0xf]
    %v3290 = vld [vmem:[%s3286 + $0xc] sm:$0xf]
    %v3291 = vld [vmem:[%s3286 + $0x10] sm:$0xf]
    %v3292 = vld [vmem:[%s3286 + $0x14] sm:$0xf]
    %v3293 = vld [vmem:[%s3286 + $0x18] sm:$0xf]
    %v3294 = vld [vmem:[%s3286 + $0x1c] sm:$0xf]
    %v3295 = vld [vmem:[%s3286 + $0x20] sm:$0xf]
    %v3296 = vld [vmem:[%s3286 + $0x24] sm:$0xf]
    %v3297 = vld [vmem:[%s3286 + $0x28] sm:$0xf]
    %v3298 = vld [vmem:[%s3286 + $0x2c] sm:$0xf]
    %v3299 = vld [vmem:[%s3286 + $0x30] sm:$0xf]
    %v3300 = vld [vmem:[%s3286 + $0x34] sm:$0xf]
    %v3301 = vld [vmem:[%s3286 + $0x38] sm:$0xf]
    %v3302 = vld [vmem:[%s3286 + $0x3c] sm:$0xf]
    %v3319 = vunpack.c.l.b16 %v3287
    %v3320 = vunpack.c.l.b16 %v3288
    %v3321 = vunpack.c.l.b16 %v3289
    %v3322 = vunpack.c.l.b16 %v3290
    %v3323 = vunpack.c.l.b16 %v3291
    %v3324 = vunpack.c.l.b16 %v3292
    %v3325 = vunpack.c.l.b16 %v3293
    %v3326 = vunpack.c.l.b16 %v3294
    %v3327 = vunpack.c.l.b16 %v3295
    %v3328 = vunpack.c.l.b16 %v3296
    %v3329 = vunpack.c.l.b16 %v3297
    %v3330 = vunpack.c.l.b16 %v3298
    %v3331 = vunpack.c.l.b16 %v3299
    %v3332 = vunpack.c.l.b16 %v3300
    %v3333 = vunpack.c.l.b16 %v3301
    %v3334 = vunpack.c.l.b16 %v3302
    %v3335 = vpack.c.b16 %v3320, %v3319
    %v3336 = vpack.c.b16 %v3322, %v3321
    %v3337 = vpack.c.b16 %v3324, %v3323
    %v3338 = vpack.c.b16 %v3326, %v3325
    %v3339 = vpack.c.b16 %v3328, %v3327
    %v3340 = vpack.c.b16 %v3330, %v3329
    %v3341 = vpack.c.b16 %v3332, %v3331
    %v3342 = vpack.c.b16 %v3334, %v3333
    %3351 = vmatprep.subr.bf16.mxu0 0
    %3352 = vmatpush1.bf16.msra.mxu0 %v3335
    %3353 = vmatprep.subr.bf16.mxu0 0
    %3354 = vmatpush1.bf16.msra.mxu0 %v3336
    %3355 = vmatprep.subr.bf16.mxu0 0
    %3356 = vmatpush1.bf16.msra.mxu0 %v3337
    %3357 = vmatprep.subr.bf16.mxu0 0
    %3358 = vmatpush1.bf16.msra.mxu0 %v3338
    %3359 = vmatprep.subr.bf16.mxu0 0
    %3360 = vmatpush1.bf16.msra.mxu0 %v3339
    %3361 = vmatprep.subr.bf16.mxu0 0
    %3362 = vmatpush1.bf16.msra.mxu0 %v3340
    %3363 = vmatprep.subr.bf16.mxu0 0
    %3364 = vmatpush1.bf16.msra.mxu0 %v3341
    %3365 = vmatprep.subr.bf16.mxu0 0
    %3366 = vmatpush1.bf16.msra.mxu0 %v3342
    %3367 = vmatprep.subr.bf16.mxu0 0
    %3368 = vmatpush1.bf16.msra.mxu0 0
    %3369 = vmatprep.subr.bf16.mxu0 0
    %3370 = vmatpush1.bf16.msra.mxu0 0
    %3371 = vmatprep.subr.bf16.mxu0 0
    %3372 = vmatpush1.bf16.msra.mxu0 0
    %3373 = vmatprep.subr.bf16.mxu0 0
    %3374 = vmatpush1.bf16.msra.mxu0 0
    %3375 = vmatprep.subr.bf16.mxu0 0
    %3376 = vmatpush1.bf16.msra.mxu0 0
    %3377 = vmatprep.subr.bf16.mxu0 0
    %3378 = vmatpush1.bf16.msra.mxu0 0
    %3379 = vmatprep.subr.bf16.mxu0 0
    %3380 = vmatpush1.bf16.msra.mxu0 0
    %3381 = vmatprep.subr.bf16.mxu0 0
    %3382 = vmatpush1.bf16.msra.mxu0 0
    %3383 = vmatprep.mubr.bf16.mxu0 0
    %3384 = vmatmul.mubr.bf16.gmra.mrb[0].mxu0 %v3285
    %v3385 = vpop.f32.mrb[0].mxu0
    %v3386 = vadd.f32 0.0, %v3385
    %v3387 = vpop.f32.mrb[0].mxu0
    %v3388 = vpop.f32.mrb[0].mxu0
    %v3389 = vpop.f32.mrb[0].mxu0
    %3390 = vdwg.mxu0
    %3391 = vst [vmem:[#allocation7] sm:$0xff] %v3386
    %v3392 = vld [vmem:[#allocation7] sm:$0xff]
    %v3393 = vpack.c.bf16 %v3392, %v3392
    %s3394 = scalar_lea.vmem [#allocation5], 1984
    %v3395 = vld [vmem:[%s3394] sm:$0xf]
    %v3396 = vld [vmem:[%s3394 + $0x4] sm:$0xf]
    %v3397 = vld [vmem:[%s3394 + $0x8] sm:$0xf]
    %v3398 = vld [vmem:[%s3394 + $0xc] sm:$0xf]
    %v3399 = vld [vmem:[%s3394 + $0x10] sm:$0xf]
    %v3400 = vld [vmem:[%s3394 + $0x14] sm:$0xf]
    %v3401 = vld [vmem:[%s3394 + $0x18] sm:$0xf]
    %v3402 = vld [vmem:[%s3394 + $0x1c] sm:$0xf]
    %v3403 = vld [vmem:[%s3394 + $0x20] sm:$0xf]
    %v3404 = vld [vmem:[%s3394 + $0x24] sm:$0xf]
    %v3405 = vld [vmem:[%s3394 + $0x28] sm:$0xf]
    %v3406 = vld [vmem:[%s3394 + $0x2c] sm:$0xf]
    %v3407 = vld [vmem:[%s3394 + $0x30] sm:$0xf]
    %v3408 = vld [vmem:[%s3394 + $0x34] sm:$0xf]
    %v3409 = vld [vmem:[%s3394 + $0x38] sm:$0xf]
    %v3410 = vld [vmem:[%s3394 + $0x3c] sm:$0xf]
    %v3427 = vunpack.c.l.b16 %v3395
    %v3428 = vunpack.c.l.b16 %v3396
    %v3429 = vunpack.c.l.b16 %v3397
    %v3430 = vunpack.c.l.b16 %v3398
    %v3431 = vunpack.c.l.b16 %v3399
    %v3432 = vunpack.c.l.b16 %v3400
    %v3433 = vunpack.c.l.b16 %v3401
    %v3434 = vunpack.c.l.b16 %v3402
    %v3435 = vunpack.c.l.b16 %v3403
    %v3436 = vunpack.c.l.b16 %v3404
    %v3437 = vunpack.c.l.b16 %v3405
    %v3438 = vunpack.c.l.b16 %v3406
    %v3439 = vunpack.c.l.b16 %v3407
    %v3440 = vunpack.c.l.b16 %v3408
    %v3441 = vunpack.c.l.b16 %v3409
    %v3442 = vunpack.c.l.b16 %v3410
    %v3443 = vpack.c.b16 %v3428, %v3427
    %v3444 = vpack.c.b16 %v3430, %v3429
    %v3445 = vpack.c.b16 %v3432, %v3431
    %v3446 = vpack.c.b16 %v3434, %v3433
    %v3447 = vpack.c.b16 %v3436, %v3435
    %v3448 = vpack.c.b16 %v3438, %v3437
    %v3449 = vpack.c.b16 %v3440, %v3439
    %v3450 = vpack.c.b16 %v3442, %v3441
    %3459 = vmatprep.subr.bf16.mxu0 0
    %3460 = vmatpush1.bf16.msra.mxu0 %v3443
    %3461 = vmatprep.subr.bf16.mxu0 0
    %3462 = vmatpush1.bf16.msra.mxu0 %v3444
    %3463 = vmatprep.subr.bf16.mxu0 0
    %3464 = vmatpush1.bf16.msra.mxu0 %v3445
    %3465 = vmatprep.subr.bf16.mxu0 0
    %3466 = vmatpush1.bf16.msra.mxu0 %v3446
    %3467 = vmatprep.subr.bf16.mxu0 0
    %3468 = vmatpush1.bf16.msra.mxu0 %v3447
    %3469 = vmatprep.subr.bf16.mxu0 0
    %3470 = vmatpush1.bf16.msra.mxu0 %v3448
    %3471 = vmatprep.subr.bf16.mxu0 0
    %3472 = vmatpush1.bf16.msra.mxu0 %v3449
    %3473 = vmatprep.subr.bf16.mxu0 0
    %3474 = vmatpush1.bf16.msra.mxu0 %v3450
    %3475 = vmatprep.subr.bf16.mxu0 0
    %3476 = vmatpush1.bf16.msra.mxu0 0
    %3477 = vmatprep.subr.bf16.mxu0 0
    %3478 = vmatpush1.bf16.msra.mxu0 0
    %3479 = vmatprep.subr.bf16.mxu0 0
    %3480 = vmatpush1.bf16.msra.mxu0 0
    %3481 = vmatprep.subr.bf16.mxu0 0
    %3482 = vmatpush1.bf16.msra.mxu0 0
    %3483 = vmatprep.subr.bf16.mxu0 0
    %3484 = vmatpush1.bf16.msra.mxu0 0
    %3485 = vmatprep.subr.bf16.mxu0 0
    %3486 = vmatpush1.bf16.msra.mxu0 0
    %3487 = vmatprep.subr.bf16.mxu0 0
    %3488 = vmatpush1.bf16.msra.mxu0 0
    %3489 = vmatprep.subr.bf16.mxu0 0
    %3490 = vmatpush1.bf16.msra.mxu0 0
    %3491 = vmatprep.mubr.bf16.mxu0 0
    %3492 = vmatmul.mubr.bf16.gmra.mrb[0].mxu0 %v3393
    %v3493 = vpop.f32.mrb[0].mxu0
    %v3494 = vadd.f32 0.0, %v3493
    %v3495 = vpop.f32.mrb[0].mxu0
    %v3496 = vpop.f32.mrb[0].mxu0
    %v3497 = vpop.f32.mrb[0].mxu0
    %3498 = vdwg.mxu0
    %3499 = vst [vmem:[#allocation7] sm:$0xff] %v3494
    // Predicated region
    $region22: #{tpu_custom_call.1} parent=1 // pred_check
      _
    $region23: #{tpu_custom_call.1} parent=1 // pred_check_branch
      %3501 = sbr.rel (0) target = $region25
    $region24: #{tpu_custom_call.1} parent=1 // pred_region
      %s3503 = ssub.s32 128, 128
      %3504 = vsyncadd [#allocation4], %s3503
      %s3506 = sshll.u32 [#allocation7], 4
      %s3507 = int_to_ptr.vmem [resolvable:$true] %s3506
      %3509 = dma.vmem_to_hbm [thread:$0]  %s3507, 128, %s2, [#allocation4]
    $region25: #{tpu_custom_call.1} parent=1 // pred_fallthru
      _
    // Predicated region
    $region26: #{tpu_custom_call.1} parent=1 // pred_check
      _
    $region27: #{tpu_custom_call.1} parent=1 // pred_check_branch
      %3511 = sbr.rel (0) target = $region29
    $region28: #{tpu_custom_call.1} parent=1 // pred_region
      %3512 = dma.done [#allocation4], 128
    $region29: #{tpu_custom_call.1} parent=1 // pred_fallthru
      _
    %3513 = vsyncpa [#allocation3], 1
    %3514 = vsyncpa [#allocation6], 1
    %3515 = vsyncpa [#allocation4], 1

</llo_original>
